<compile_context>
chip_gen: v5e
topology: v5e:2x2
jax: 0.10.0
libtpu: 0.0.40
codegen_flags: <defaults>
</compile_context>

<pallas_src>
import functools

import jax
import jax.numpy as jnp
import numpy as np
from jax.experimental import pallas as pl
from jax.experimental.pallas import tpu as pltpu


def _round_up(x, m):
    return ((x + m - 1) // m) * m


# ----------------------------------------------------------------------------
# Fused dense head kernel
#   x tile (tile_n, C_in) -> box_features (bf16), [cls|bbox] (lane padded, f32),
#                            grounding_features (bf16), grounding_scores (f32)
# ----------------------------------------------------------------------------
def _glip_head_kernel(cb_pad,
                      x_ref,
                      w6_ref, b6_ref, w7_ref, b7_ref,
                      wcbg_ref, bcbg_ref,
                      wg2_ref, bg2_ref,
                      txt_ref,
                      boxf_ref, clsbbox_ref, gf_ref, score_ref):
    f32 = jnp.float32
    bf16 = jnp.bfloat16

    # Cast to bf16 per tile (no standalone HBM convert pass in the wrapper).
    x = x_ref[...].astype(bf16)                                  # (tile_n, c_in)

    # TwoMLPHead: fc6 -> relu -> fc7 -> relu (bf16 MXU, f32 accumulate/bias/relu)
    h6 = jnp.dot(x, w6_ref[...], preferred_element_type=f32) + b6_ref[...]
    h6 = jnp.maximum(h6, 0.0).astype(bf16)
    h7 = jnp.dot(h6, w7_ref[...], preferred_element_type=f32) + b7_ref[...]
    h7 = jnp.maximum(h7, 0.0)
    boxf_ref[...] = h7.astype(boxf_ref.dtype)
    h7b = h7.astype(bf16)

    # One fused matmul for [cls_score | bbox_pred | grounding_head[0]].
    # The split column cb_pad is a multiple of 128, so both slices are
    # lane-tile aligned (no VMEM copy).
    fused = (jnp.dot(h7b, wcbg_ref[...], preferred_element_type=f32)
             + bcbg_ref[...])
    clsbbox_ref[...] = fused[:, :cb_pad]
    g1 = jnp.maximum(fused[:, cb_pad:], 0.0).astype(bf16)

    # grounding_head[2]
    g2 = jnp.dot(g1, wg2_ref[...], preferred_element_type=f32) + bg2_ref[...]
    gf_ref[...] = g2.astype(gf_ref.dtype)

    # grounding scores fused in: g2 @ text^T  (text pre-transposed to (H, B*L_pad))
    score_ref[...] = jnp.dot(g2.astype(bf16), txt_ref[...],
                             preferred_element_type=f32)


# ----------------------------------------------------------------------------
# One-time parameter / text preparation (hoisted out of the per-call path)
# ----------------------------------------------------------------------------
def prepare_glip_params(params):
    """Call ONCE at model load.  Casts matmul weights to bf16, keeps biases f32,
    and fuses [cls_score | bbox_pred | grounding_head[0]] into a single
    lane-padded resident weight so the per-ROI-tile forward does no prep work."""
    f32, bf16 = jnp.float32, jnp.bfloat16
    hidden = params["w7"].shape[1]
    num_classes = params["wc"].shape[1]
    nc5 = 5 * num_classes
    cb_pad = _round_up(nc5, 128)   # lane-dense [cls|bbox] block

    wcb = jnp.pad(jnp.concatenate([params["wc"], params["wb"]], axis=1),
                  ((0, 0), (0, cb_pad - nc5)))
    bcb = jnp.pad(jnp.concatenate([params["bc"], params["bb"]], axis=1),
                  ((0, 0), (0, cb_pad - nc5)))
    wcbg = jnp.concatenate([wcb, params["wg1"]], axis=1).astype(bf16)
    bcbg = jnp.concatenate([bcb, params["bg1"]], axis=1).astype(f32)

    return {
        "w6": params["w6"].astype(bf16), "b6": params["b6"].astype(f32),
        "w7": params["w7"].astype(bf16), "b7": params["b7"].astype(f32),
        "wcbg": wcbg, "bcbg": bcbg,
        "wg2": params["wg2"].astype(bf16), "bg2": params["bg2"].astype(f32),
        "hidden": hidden, "num_classes": num_classes, "cb_pad": cb_pad,
    }


def prepare_text_features(text_feats, hidden):
    """Call ONCE per text encode: (B, L, H) -> (H, B*L_pad) bf16, lane padded.
    Layout plumbing done here avoids an in-kernel XLU transpose."""
    b, l, h = text_feats.shape
    assert h == hidden
    bl = b * l
    bl_pad = _round_up(bl, 128)
    txt_t = jnp.pad(text_feats.reshape(bl, hidden).T,
                    ((0, 0), (0, bl_pad - bl))).astype(jnp.bfloat16)
    return txt_t, (b, l)


# ----------------------------------------------------------------------------
# Forward (eval-branch dense hot path)
# ----------------------------------------------------------------------------
def glip_head_forward(roi_feats, text_prep, prep, *, tile_n=None,
                      single_buffer_residents=True,
                      vmem_limit_bytes=48 * 1024 * 1024):
    """roi_feats: (N_rois, C, 7, 7) ROI-pooled features (MultiScaleRoIAlign output;
    the pooling itself is not translated).  May be f32 or bf16 — the bf16 cast
    for the MXU happens inside the kernel, so there is no extra HBM pass.

    Returns (box_features, cls_scores, bbox_deltas, grounding_features,
             grounding_scores) with grounding_scores shaped (B, N_rois, L).
    """
    txt_t, (b, l) = text_prep
    hidden = prep["hidden"]
    num_classes = prep["num_classes"]
    cb_pad = prep["cb_pad"]
    nc5 = 5 * num_classes
    bl = b * l
    bl_pad = txt_t.shape[1]

    n = roi_feats.shape[0]
    c_in = int(np.prod(roi_feats.shape[1:]))
    # x.flatten(start_dim=1) — row-major, same element order as torch.
    x_flat = roi_feats.reshape(n, c_in)

    if tile_n is None:
        # 256 rows fills the 2x256^2 MXU on v6e/v7x; drop to 128 for small
        # post-NMS counts so the grid has >=2 steps (both v7x TCs busy).
        # 128 also matches v5e's 4x128^2 MXU.
        tile_n = 256 if n > 256 else 128

    n_pad = _round_up(max(n, 1), tile_n)
    if n_pad != n:
        # Small pad copy only when the (data-dependent) ROI count isn't a tile
        # multiple; no dtype conversion here.
        x_flat = jnp.pad(x_flat, ((0, n_pad - n), (0, 0)))

    f32 = jnp.float32
    bf16 = jnp.bfloat16
    grid = (n_pad // tile_n,)

    w6, b6 = prep["w6"], prep["b6"]
    w7, b7 = prep["w7"], prep["b7"]
    wcbg, bcbg = prep["wcbg"], prep["bcbg"]
    wg2, bg2 = prep["wg2"], prep["bg2"]
    args = (x_flat, w6, b6, w7, b7, wcbg, bcbg, wg2, bg2, txt_t)

    out_shapes = [
        jax.ShapeDtypeStruct((n_pad, hidden), bf16),   # box features
        jax.ShapeDtypeStruct((n_pad, cb_pad), f32),    # [cls|bbox] (lane padded)
        jax.ShapeDtypeStruct((n_pad, hidden), bf16),   # grounding features
        jax.ShapeDtypeStruct((n_pad, bl_pad), f32),    # grounding scores (flat)
    ]

    # Advisory cost estimate so XLA schedules surrounding ops around the call.
    flops = 2 * n_pad * (c_in * hidden + hidden * hidden
                         + hidden * (cb_pad + hidden)
                         + hidden * hidden + hidden * bl_pad)
    bytes_in = sum(int(a.size) * a.dtype.itemsize for a in args)
    bytes_out = sum(int(np.prod(s.shape)) * jnp.dtype(s.dtype).itemsize
                    for s in out_shapes)
    cost = pl.CostEstimate(flops=flops, transcendentals=0,
                           bytes_accessed=bytes_in + bytes_out)

    kernel = functools.partial(_glip_head_kernel, cb_pad)

    def call(residents_single):
        # Grid-invariant blocks (weights / biases / text): constant index_map;
        # single-buffered when supported (no point double-buffering blocks whose
        # index never changes — worth ~6.4 MB of VMEM for w6 at real shapes).
        mode = pl.Buffered(1) if residents_single else None

        def resident(rows, cols):
            return pl.BlockSpec((rows, cols), lambda i: (0, 0),
                                pipeline_mode=mode)

        def row_tiled(cols):
            return pl.BlockSpec((tile_n, cols), lambda i: (i, 0))

        in_specs = [
            row_tiled(c_in),                                         # x tile
            resident(c_in, hidden), resident(1, hidden),             # fc6
            resident(hidden, hidden), resident(1, hidden),           # fc7
            resident(hidden, cb_pad + hidden),                       # [cls|bbox|g1]
            resident(1, cb_pad + hidden),
            resident(hidden, hidden), resident(1, hidden),           # grounding[2]
            resident(hidden, bl_pad),                                # text^T
        ]
        out_specs = [
            row_tiled(hidden),       # box features
            row_tiled(cb_pad),       # [cls|bbox]
            row_tiled(hidden),       # grounding features
            row_tiled(bl_pad),       # grounding scores
        ]
        return pl.pallas_call(
            kernel,
            out_shape=out_shapes,
            grid_spec=pltpu.PrefetchScalarGridSpec(
                num_scalar_prefetch=0,
                grid=grid,
                in_specs=in_specs,
                out_specs=out_specs,
            ),
            compiler_params=pltpu.CompilerParams(
                dimension_semantics=("parallel",),
                # Fits tile_n=256 + f32 x (~26 MB double-buffered) + residents
                # (~7 MB bf16) + outputs with headroom under v7x's 64 MiB/TC;
                # also overrides v5e's small 16 MiB default scoped limit.
                vmem_limit_bytes=vmem_limit_bytes,
            ),
            cost_estimate=cost,
        )(*args)

    if single_buffer_residents:
        try:
            boxf, clsbbox, gf, scores_flat = call(True)
        except Exception:
            # Explicit fallback: some jax versions reject pipeline_mode on the
            # implicit pipeline.  Double-buffered residents add ~6.4 MB (w6 at
            # production shapes), which still fits the 48 MiB scoped limit.
            boxf, clsbbox, gf, scores_flat = call(False)
    else:
        boxf, clsbbox, gf, scores_flat = call(False)

    box_features = boxf[:n]
    cls_scores = clsbbox[:n, :num_classes]
    bbox_deltas = clsbbox[:n, num_classes:nc5]
    grounding_features = gf[:n]
    # (N, B*L) -> (B, N, L): matches torch.matmul((N,H), (B,H,L)) broadcasting.
    grounding_scores = scores_flat[:n, :bl].reshape(n, b, l).transpose(1, 0, 2)
    return (box_features, cls_scores, bbox_deltas, grounding_features,
            grounding_scores)


# ----------------------------------------------------------------------------
# Parameter init (deterministic, synthetic) + pure-JAX f32 reference
# ----------------------------------------------------------------------------
def init_params(key, hidden_dim, num_classes, pooled_hw=7):
    c_in = hidden_dim * pooled_hw * pooled_hw
    ks = jax.random.split(key, 12)

    def lin(kw, kb, fan_in, fan_out):
        w = jax.random.normal(kw, (fan_in, fan_out), jnp.float32) / np.sqrt(fan_in)
        b = 0.01 * jax.random.normal(kb, (1, fan_out), jnp.float32)
        return w, b

    p = {}
    p["w6"], p["b6"] = lin(ks[0], ks[1], c_in, hidden_dim)
    p["w7"], p["b7"] = lin(ks[2], ks[3], hidden_dim, hidden_dim)
    p["wc"], p["bc"] = lin(ks[4], ks[5], hidden_dim, num_classes)
    p["wb"], p["bb"] = lin(ks[6], ks[7], hidden_dim, 4 * num_classes)
    p["wg1"], p["bg1"] = lin(ks[8], ks[9], hidden_dim, hidden_dim)
    p["wg2"], p["bg2"] = lin(ks[10], ks[11], hidden_dim, hidden_dim)
    return p


def _reference(x_flat, text, p):
    relu = lambda z: jnp.maximum(z, 0.0)
    h = relu(x_flat @ p["w6"] + p["b6"])
    h = relu(h @ p["w7"] + p["b7"])
    cls = h @ p["wc"] + p["bc"]
    bbox = h @ p["wb"] + p["bb"]
    g = relu(h @ p["wg1"] + p["bg1"])
    g = g @ p["wg2"] + p["bg2"]
    scores = jnp.einsum("nh,blh->bnl", g, text)
    return h, cls, bbox, g, scores


if __name__ == "__main__":
    # Small synthetic shapes consistent with the module structure.
    batch = 2            # images
    hidden_dim = 32      # (256 in the real module)
    num_classes = 8      # (80 in the real module)
    pooled = 7           # MultiScaleRoIAlign output_size
    n_rois = 150         # post-NMS detections (deliberately not a tile multiple)
    seq_len = 8          # language tokens

    key = jax.random.PRNGKey(0)
    kx, kt, kp = jax.random.split(key, 3)

    # Inputs: ROI-pooled features (as produced by MultiScaleRoIAlign, NCHW) and
    # language hidden states.  The proposal/pooling machinery is not translated
    # (see TODOs above), so its output is the kernel's input.
    roi_feats = jax.random.normal(kx, (n_rois, hidden_dim, pooled, pooled),
                                  jnp.float32)
    text_feats = jax.random.normal(kt, (batch, seq_len, hidden_dim), jnp.float32)
    params = init_params(kp, hidden_dim, num_classes, pooled)

    # One-time prep (model load / text encode), NOT on the per-forward hot path.
    prep = prepare_glip_params(params)
    text_prep = prepare_text_features(text_feats, hidden_dim)

    outs = glip_head_forward(roi_feats, text_prep, prep)
    jax.block_until_ready(outs)
    box_feats, cls_scores, bbox_deltas, ground_feats, scores = outs

    # Verify against a pure-JAX f32 reference (kernel uses bf16 MXU operands
    # with f32 accumulation and stores feature outputs in bf16, so tolerances
    # are loosened accordingly).
    x_flat = roi_feats.reshape(n_rois, hidden_dim * pooled * pooled)
    rb, rc, rbb, rg, rs = _reference(x_flat, text_feats, params)
    tol = dict(rtol=5e-2, atol=5e-2)
    np.testing.assert_allclose(np.asarray(box_feats.astype(jnp.float32)),
                               np.asarray(rb), **tol)
    np.testing.assert_allclose(np.asarray(cls_scores), np.asarray(rc), **tol)
    np.testing.assert_allclose(np.asarray(bbox_deltas), np.asarray(rbb), **tol)
    np.testing.assert_allclose(np.asarray(ground_feats.astype(jnp.float32)),
                               np.asarray(rg), **tol)
    np.testing.assert_allclose(np.asarray(scores), np.asarray(rs), **tol)

    print("KERNEL_OK")
</pallas_src>

<mosaic_0001>
module attributes {stable_mosaic.version = 11 : i64} {
  func.func @_glip_head_kernel(%arg0: i32, %arg1: memref<128x1568xf32, #tpu.memory_space<vmem>>, %arg2: memref<1568x32xbf16, #tpu.memory_space<vmem>>, %arg3: memref<1x32xf32, #tpu.memory_space<vmem>>, %arg4: memref<32x32xbf16, #tpu.memory_space<vmem>>, %arg5: memref<1x32xf32, #tpu.memory_space<vmem>>, %arg6: memref<32x160xbf16, #tpu.memory_space<vmem>>, %arg7: memref<1x160xf32, #tpu.memory_space<vmem>>, %arg8: memref<32x32xbf16, #tpu.memory_space<vmem>>, %arg9: memref<1x32xf32, #tpu.memory_space<vmem>>, %arg10: memref<32x128xbf16, #tpu.memory_space<vmem>>, %arg11: memref<128x32xbf16, #tpu.memory_space<vmem>>, %arg12: memref<128x128xf32, #tpu.memory_space<vmem>>, %arg13: memref<128x32xbf16, #tpu.memory_space<vmem>>, %arg14: memref<128x128xf32, #tpu.memory_space<vmem>>) attributes {dimension_semantics = [#tpu.dimension_semantics<parallel>], iteration_bounds = array<i64: 2>, scalar_prefetch = 0 : i64, scratch_operands = 0 : i64, tpu.core_type = #tpu.core_type<tc>, window_params = [{transform_indices = @transform_0, window_bounds = array<i64: 128, 1568>}, {pipeline_mode = #tpu.pipeline_mode<synchronous>, transform_indices = @transform_1, window_bounds = array<i64: 1568, 32>}, {pipeline_mode = #tpu.pipeline_mode<synchronous>, transform_indices = @transform_2, window_bounds = array<i64: 1, 32>}, {pipeline_mode = #tpu.pipeline_mode<synchronous>, transform_indices = @transform_3, window_bounds = array<i64: 32, 32>}, {pipeline_mode = #tpu.pipeline_mode<synchronous>, transform_indices = @transform_4, window_bounds = array<i64: 1, 32>}, {pipeline_mode = #tpu.pipeline_mode<synchronous>, transform_indices = @transform_5, window_bounds = array<i64: 32, 160>}, {pipeline_mode = #tpu.pipeline_mode<synchronous>, transform_indices = @transform_6, window_bounds = array<i64: 1, 160>}, {pipeline_mode = #tpu.pipeline_mode<synchronous>, transform_indices = @transform_7, window_bounds = array<i64: 32, 32>}, {pipeline_mode = #tpu.pipeline_mode<synchronous>, transform_indices = @transform_8, window_bounds = array<i64: 1, 32>}, {pipeline_mode = #tpu.pipeline_mode<synchronous>, transform_indices = @transform_9, window_bounds = array<i64: 32, 128>}, {transform_indices = @transform_10, window_bounds = array<i64: 128, 32>}, {transform_indices = @transform_11, window_bounds = array<i64: 128, 128>}, {transform_indices = @transform_12, window_bounds = array<i64: 128, 32>}, {transform_indices = @transform_13, window_bounds = array<i64: 128, 128>}]} {
    %c0 = arith.constant 0 : index
    %c0_0 = arith.constant 0 : index
    %0 = vector.load %arg1[%c0, %c0_0] : memref<128x1568xf32, #tpu.memory_space<vmem>>, vector<128x1568xf32>
    %1 = arith.truncf %0 : vector<128x1568xf32> to vector<128x1568xbf16>
    %c0_1 = arith.constant 0 : index
    %c0_2 = arith.constant 0 : index
    %2 = vector.load %arg2[%c0_1, %c0_2] : memref<1568x32xbf16, #tpu.memory_space<vmem>>, vector<1568x32xbf16>
    %cst = arith.constant dense<0.000000e+00> : vector<128x32xf32>
    %3 = tpu.matmul %1, %2, %cst {dimension_numbers = #tpu.dot_dimension_numbers<[1], [0], [0], [1], [0, 0, 1, 1], [], []>} : vector<128x1568xbf16>, vector<1568x32xbf16>, vector<128x32xf32> -> vector<128x32xf32>
    %c0_3 = arith.constant 0 : index
    %c0_4 = arith.constant 0 : index
    %4 = vector.load %arg3[%c0_3, %c0_4] : memref<1x32xf32, #tpu.memory_space<vmem>>, vector<1x32xf32>
    %5 = vector.broadcast %4 : vector<1x32xf32> to vector<128x32xf32>
    %6 = arith.addf %3, %5 : vector<128x32xf32>
    %cst_5 = arith.constant 0.000000e+00 : f32
    %7 = vector.broadcast %cst_5 : f32 to vector<128x32xf32>
    %8 = arith.maximumf %6, %7 : vector<128x32xf32>
    %9 = arith.truncf %8 : vector<128x32xf32> to vector<128x32xbf16>
    %c0_6 = arith.constant 0 : index
    %c0_7 = arith.constant 0 : index
    %10 = vector.load %arg4[%c0_6, %c0_7] : memref<32x32xbf16, #tpu.memory_space<vmem>>, vector<32x32xbf16>
    %cst_8 = arith.constant dense<0.000000e+00> : vector<128x32xf32>
    %11 = tpu.matmul %9, %10, %cst_8 {dimension_numbers = #tpu.dot_dimension_numbers<[1], [0], [0], [1], [0, 0, 1, 1], [], []>} : vector<128x32xbf16>, vector<32x32xbf16>, vector<128x32xf32> -> vector<128x32xf32>
    %c0_9 = arith.constant 0 : index
    %c0_10 = arith.constant 0 : index
    %12 = vector.load %arg5[%c0_9, %c0_10] : memref<1x32xf32, #tpu.memory_space<vmem>>, vector<1x32xf32>
    %13 = vector.broadcast %12 : vector<1x32xf32> to vector<128x32xf32>
    %14 = arith.addf %11, %13 : vector<128x32xf32>
    %cst_11 = arith.constant 0.000000e+00 : f32
    %15 = vector.broadcast %cst_11 : f32 to vector<128x32xf32>
    %16 = arith.maximumf %14, %15 : vector<128x32xf32>
    %17 = arith.truncf %16 : vector<128x32xf32> to vector<128x32xbf16>
    %c0_12 = arith.constant 0 : index
    %c0_13 = arith.constant 0 : index
    %18 = vector.load %arg11[%c0_12, %c0_13] : memref<128x32xbf16, #tpu.memory_space<vmem>>, vector<128x32xbf16>
    tpu.vector_store %arg11[%c0_12, %c0_13], %17 {strides = array<i32>} : memref<128x32xbf16, #tpu.memory_space<vmem>>, vector<128x32xbf16>,
    %19 = arith.truncf %16 : vector<128x32xf32> to vector<128x32xbf16>
    %c0_14 = arith.constant 0 : index
    %c0_15 = arith.constant 0 : index
    %20 = vector.load %arg6[%c0_14, %c0_15] : memref<32x160xbf16, #tpu.memory_space<vmem>>, vector<32x160xbf16>
    %cst_16 = arith.constant dense<0.000000e+00> : vector<128x160xf32>
    %21 = tpu.matmul %19, %20, %cst_16 {dimension_numbers = #tpu.dot_dimension_numbers<[1], [0], [0], [1], [0, 0, 1, 1], [], []>} : vector<128x32xbf16>, vector<32x160xbf16>, vector<128x160xf32> -> vector<128x160xf32>
    %c0_17 = arith.constant 0 : index
    %c0_18 = arith.constant 0 : index
    %22 = vector.load %arg7[%c0_17, %c0_18] : memref<1x160xf32, #tpu.memory_space<vmem>>, vector<1x160xf32>
    %23 = vector.broadcast %22 : vector<1x160xf32> to vector<128x160xf32>
    %24 = arith.addf %21, %23 : vector<128x160xf32>
    %25 = vector.extract_strided_slice %24 {offsets = [0, 0], sizes = [128, 128], strides = [1, 1]} : vector<128x160xf32> to vector<128x128xf32>
    %c0_19 = arith.constant 0 : index
    %c0_20 = arith.constant 0 : index
    %26 = vector.load %arg12[%c0_19, %c0_20] : memref<128x128xf32, #tpu.memory_space<vmem>>, vector<128x128xf32>
    tpu.vector_store %arg12[%c0_19, %c0_20], %25 {strides = array<i32>} : memref<128x128xf32, #tpu.memory_space<vmem>>, vector<128x128xf32>,
    %27 = vector.extract_strided_slice %24 {offsets = [0, 128], sizes = [128, 32], strides = [1, 1]} : vector<128x160xf32> to vector<128x32xf32>
    %cst_21 = arith.constant 0.000000e+00 : f32
    %28 = vector.broadcast %cst_21 : f32 to vector<128x32xf32>
    %29 = arith.maximumf %27, %28 : vector<128x32xf32>
    %30 = arith.truncf %29 : vector<128x32xf32> to vector<128x32xbf16>
    %c0_22 = arith.constant 0 : index
    %c0_23 = arith.constant 0 : index
    %31 = vector.load %arg8[%c0_22, %c0_23] : memref<32x32xbf16, #tpu.memory_space<vmem>>, vector<32x32xbf16>
    %cst_24 = arith.constant dense<0.000000e+00> : vector<128x32xf32>
    %32 = tpu.matmul %30, %31, %cst_24 {dimension_numbers = #tpu.dot_dimension_numbers<[1], [0], [0], [1], [0, 0, 1, 1], [], []>} : vector<128x32xbf16>, vector<32x32xbf16>, vector<128x32xf32> -> vector<128x32xf32>
    %c0_25 = arith.constant 0 : index
    %c0_26 = arith.constant 0 : index
    %33 = vector.load %arg9[%c0_25, %c0_26] : memref<1x32xf32, #tpu.memory_space<vmem>>, vector<1x32xf32>
    %34 = vector.broadcast %33 : vector<1x32xf32> to vector<128x32xf32>
    %35 = arith.addf %32, %34 : vector<128x32xf32>
    %36 = arith.truncf %35 : vector<128x32xf32> to vector<128x32xbf16>
    %c0_27 = arith.constant 0 : index
    %c0_28 = arith.constant 0 : index
    %37 = vector.load %arg13[%c0_27, %c0_28] : memref<128x32xbf16, #tpu.memory_space<vmem>>, vector<128x32xbf16>
    tpu.vector_store %arg13[%c0_27, %c0_28], %36 {strides = array<i32>} : memref<128x32xbf16, #tpu.memory_space<vmem>>, vector<128x32xbf16>,
    %38 = arith.truncf %35 : vector<128x32xf32> to vector<128x32xbf16>
    %c0_29 = arith.constant 0 : index
    %c0_30 = arith.constant 0 : index
    %39 = vector.load %arg10[%c0_29, %c0_30] : memref<32x128xbf16, #tpu.memory_space<vmem>>, vector<32x128xbf16>
    %cst_31 = arith.constant dense<0.000000e+00> : vector<128x128xf32>
    %40 = tpu.matmul %38, %39, %cst_31 {dimension_numbers = #tpu.dot_dimension_numbers<[1], [0], [0], [1], [0, 0, 1, 1], [], []>} : vector<128x32xbf16>, vector<32x128xbf16>, vector<128x128xf32> -> vector<128x128xf32>
    %c0_32 = arith.constant 0 : index
    %c0_33 = arith.constant 0 : index
    %41 = vector.load %arg14[%c0_32, %c0_33] : memref<128x128xf32, #tpu.memory_space<vmem>>, vector<128x128xf32>
    tpu.vector_store %arg14[%c0_32, %c0_33], %40 {strides = array<i32>} : memref<128x128xf32, #tpu.memory_space<vmem>>, vector<128x128xf32>,
    return
  }
  func.func @transform_0(%arg0: i32) -> (i32, i32) {
    %c0_i32 = arith.constant 0 : i32
    %c0_i32_0 = arith.constant 0 : i32
    return %arg0, %c0_i32 : i32, i32
  }
  func.func @transform_1(%arg0: i32) -> (i32, i32) {
    %c0_i32 = arith.constant 0 : i32
    %c0_i32_0 = arith.constant 0 : i32
    %c0_i32_1 = arith.constant 0 : i32
    return %c0_i32, %c0_i32_0 : i32, i32
  }
  func.func @transform_2(%arg0: i32) -> (i32, i32) {
    %c0_i32 = arith.constant 0 : i32
    %c0_i32_0 = arith.constant 0 : i32
    %c0_i32_1 = arith.constant 0 : i32
    return %c0_i32, %c0_i32_0 : i32, i32
  }
  func.func @transform_3(%arg0: i32) -> (i32, i32) {
    %c0_i32 = arith.constant 0 : i32
    %c0_i32_0 = arith.constant 0 : i32
    %c0_i32_1 = arith.constant 0 : i32
    return %c0_i32, %c0_i32_0 : i32, i32
  }
  func.func @transform_4(%arg0: i32) -> (i32, i32) {
    %c0_i32 = arith.constant 0 : i32
    %c0_i32_0 = arith.constant 0 : i32
    %c0_i32_1 = arith.constant 0 : i32
    return %c0_i32, %c0_i32_0 : i32, i32
  }
  func.func @transform_5(%arg0: i32) -> (i32, i32) {
    %c0_i32 = arith.constant 0 : i32
    %c0_i32_0 = arith.constant 0 : i32
    %c0_i32_1 = arith.constant 0 : i32
    return %c0_i32, %c0_i32_0 : i32, i32
  }
  func.func @transform_6(%arg0: i32) -> (i32, i32) {
    %c0_i32 = arith.constant 0 : i32
    %c0_i32_0 = arith.constant 0 : i32
    %c0_i32_1 = arith.constant 0 : i32
    return %c0_i32, %c0_i32_0 : i32, i32
  }
  func.func @transform_7(%arg0: i32) -> (i32, i32) {
    %c0_i32 = arith.constant 0 : i32
    %c0_i32_0 = arith.constant 0 : i32
    %c0_i32_1 = arith.constant 0 : i32
    return %c0_i32, %c0_i32_0 : i32, i32
  }
  func.func @transform_8(%arg0: i32) -> (i32, i32) {
    %c0_i32 = arith.constant 0 : i32
    %c0_i32_0 = arith.constant 0 : i32
    %c0_i32_1 = arith.constant 0 : i32
    return %c0_i32, %c0_i32_0 : i32, i32
  }
  func.func @transform_9(%arg0: i32) -> (i32, i32) {
    %c0_i32 = arith.constant 0 : i32
    %c0_i32_0 = arith.constant 0 : i32
    %c0_i32_1 = arith.constant 0 : i32
    return %c0_i32, %c0_i32_0 : i32, i32
  }
  func.func @transform_10(%arg0: i32) -> (i32, i32) {
    %c0_i32 = arith.constant 0 : i32
    %c0_i32_0 = arith.constant 0 : i32
    return %arg0, %c0_i32 : i32, i32
  }
  func.func @transform_11(%arg0: i32) -> (i32, i32) {
    %c0_i32 = arith.constant 0 : i32
    %c0_i32_0 = arith.constant 0 : i32
    return %arg0, %c0_i32 : i32, i32
  }
  func.func @transform_12(%arg0: i32) -> (i32, i32) {
    %c0_i32 = arith.constant 0 : i32
    %c0_i32_0 = arith.constant 0 : i32
    return %arg0, %c0_i32 : i32, i32
  }
  func.func @transform_13(%arg0: i32) -> (i32, i32) {
    %c0_i32 = arith.constant 0 : i32
    %c0_i32_0 = arith.constant 0 : i32
    return %arg0, %c0_i32 : i32, i32
  }
}

module attributes {stable_mosaic.version = 11 : i64} {
  func.func @_glip_head_kernel(%arg0: i32, %arg1: memref<128x1568xf32, #tpu.memory_space<vmem>>, %arg2: memref<1568x32xbf16, #tpu.memory_space<vmem>>, %arg3: memref<1x32xf32, #tpu.memory_space<vmem>>, %arg4: memref<32x32xbf16, #tpu.memory_space<vmem>>, %arg5: memref<1x32xf32, #tpu.memory_space<vmem>>, %arg6: memref<32x160xbf16, #tpu.memory_space<vmem>>, %arg7: memref<1x160xf32, #tpu.memory_space<vmem>>, %arg8: memref<32x32xbf16, #tpu.memory_space<vmem>>, %arg9: memref<1x32xf32, #tpu.memory_space<vmem>>, %arg10: memref<32x128xbf16, #tpu.memory_space<vmem>>, %arg11: memref<128x32xbf16, #tpu.memory_space<vmem>>, %arg12: memref<128x128xf32, #tpu.memory_space<vmem>>, %arg13: memref<128x32xbf16, #tpu.memory_space<vmem>>, %arg14: memref<128x128xf32, #tpu.memory_space<vmem>>) attributes {dimension_semantics = [#tpu.dimension_semantics<parallel>], iteration_bounds = array<i64: 2>, scalar_prefetch = 0 : i64, scratch_operands = 0 : i64, tpu.core_type = #tpu.core_type<tc>, window_params = [{transform_indices = @transform_0, window_bounds = array<i64: 128, 1568>}, {pipeline_mode = #tpu.pipeline_mode<synchronous>, transform_indices = @transform_1, window_bounds = array<i64: 1568, 32>}, {pipeline_mode = #tpu.pipeline_mode<synchronous>, transform_indices = @transform_2, window_bounds = array<i64: 1, 32>}, {pipeline_mode = #tpu.pipeline_mode<synchronous>, transform_indices = @transform_3, window_bounds = array<i64: 32, 32>}, {pipeline_mode = #tpu.pipeline_mode<synchronous>, transform_indices = @transform_4, window_bounds = array<i64: 1, 32>}, {pipeline_mode = #tpu.pipeline_mode<synchronous>, transform_indices = @transform_5, window_bounds = array<i64: 32, 160>}, {pipeline_mode = #tpu.pipeline_mode<synchronous>, transform_indices = @transform_6, window_bounds = array<i64: 1, 160>}, {pipeline_mode = #tpu.pipeline_mode<synchronous>, transform_indices = @transform_7, window_bounds = array<i64: 32, 32>}, {pipeline_mode = #tpu.pipeline_mode<synchronous>, transform_indices = @transform_8, window_bounds = array<i64: 1, 32>}, {pipeline_mode = #tpu.pipeline_mode<synchronous>, transform_indices = @transform_9, window_bounds = array<i64: 32, 128>}, {transform_indices = @transform_10, window_bounds = array<i64: 128, 32>}, {transform_indices = @transform_11, window_bounds = array<i64: 128, 128>}, {transform_indices = @transform_12, window_bounds = array<i64: 128, 32>}, {transform_indices = @transform_13, window_bounds = array<i64: 128, 128>}]} {
    %c0 = arith.constant 0 : index
    %c0_0 = arith.constant 0 : index
    %0 = vector.load %arg1[%c0, %c0_0] : memref<128x1568xf32, #tpu.memory_space<vmem>>, vector<128x1568xf32>
    %1 = arith.truncf %0 : vector<128x1568xf32> to vector<128x1568xbf16>
    %c0_1 = arith.constant 0 : index
    %c0_2 = arith.constant 0 : index
    %2 = vector.load %arg2[%c0_1, %c0_2] : memref<1568x32xbf16, #tpu.memory_space<vmem>>, vector<1568x32xbf16>
    %cst = arith.constant dense<0.000000e+00> : vector<128x32xf32>
    %3 = tpu.matmul %1, %2, %cst {dimension_numbers = #tpu.dot_dimension_numbers<[1], [0], [0], [1], [0, 0, 1, 1], [], []>} : vector<128x1568xbf16>, vector<1568x32xbf16>, vector<128x32xf32> -> vector<128x32xf32>
    %c0_3 = arith.constant 0 : index
    %c0_4 = arith.constant 0 : index
    %4 = vector.load %arg3[%c0_3, %c0_4] : memref<1x32xf32, #tpu.memory_space<vmem>>, vector<1x32xf32>
    %5 = vector.broadcast %4 : vector<1x32xf32> to vector<128x32xf32>
    %6 = arith.addf %3, %5 : vector<128x32xf32>
    %cst_5 = arith.constant 0.000000e+00 : f32
    %7 = vector.broadcast %cst_5 : f32 to vector<128x32xf32>
    %8 = arith.maximumf %6, %7 : vector<128x32xf32>
    %9 = arith.truncf %8 : vector<128x32xf32> to vector<128x32xbf16>
    %c0_6 = arith.constant 0 : index
    %c0_7 = arith.constant 0 : index
    %10 = vector.load %arg4[%c0_6, %c0_7] : memref<32x32xbf16, #tpu.memory_space<vmem>>, vector<32x32xbf16>
    %cst_8 = arith.constant dense<0.000000e+00> : vector<128x32xf32>
    %11 = tpu.matmul %9, %10, %cst_8 {dimension_numbers = #tpu.dot_dimension_numbers<[1], [0], [0], [1], [0, 0, 1, 1], [], []>} : vector<128x32xbf16>, vector<32x32xbf16>, vector<128x32xf32> -> vector<128x32xf32>
    %c0_9 = arith.constant 0 : index
    %c0_10 = arith.constant 0 : index
    %12 = vector.load %arg5[%c0_9, %c0_10] : memref<1x32xf32, #tpu.memory_space<vmem>>, vector<1x32xf32>
    %13 = vector.broadcast %12 : vector<1x32xf32> to vector<128x32xf32>
    %14 = arith.addf %11, %13 : vector<128x32xf32>
    %cst_11 = arith.constant 0.000000e+00 : f32
    %15 = vector.broadcast %cst_11 : f32 to vector<128x32xf32>
    %16 = arith.maximumf %14, %15 : vector<128x32xf32>
    %17 = arith.truncf %16 : vector<128x32xf32> to vector<128x32xbf16>
    %c0_12 = arith.constant 0 : index
    %c0_13 = arith.constant 0 : index
    %18 = vector.load %arg11[%c0_12, %c0_13] : memref<128x32xbf16, #tpu.memory_space<vmem>>, vector<128x32xbf16>
    tpu.vector_store %arg11[%c0_12, %c0_13], %17 {strides = array<i32>} : memref<128x32xbf16, #tpu.memory_space<vmem>>, vector<128x32xbf16>,
    %19 = arith.truncf %16 : vector<128x32xf32> to vector<128x32xbf16>
    %c0_14 = arith.constant 0 : index
    %c0_15 = arith.constant 0 : index
    %20 = vector.load %arg6[%c0_14, %c0_15] : memref<32x160xbf16, #tpu.memory_space<vmem>>, vector<32x160xbf16>
    %cst_16 = arith.constant dense<0.000000e+00> : vector<128x160xf32>
    %21 = tpu.matmul %19, %20, %cst_16 {dimension_numbers = #tpu.dot_dimension_numbers<[1], [0], [0], [1], [0, 0, 1, 1], [], []>} : vector<128x32xbf16>, vector<32x160xbf16>, vector<128x160xf32> -> vector<128x160xf32>
    %c0_17 = arith.constant 0 : index
    %c0_18 = arith.constant 0 : index
    %22 = vector.load %arg7[%c0_17, %c0_18] : memref<1x160xf32, #tpu.memory_space<vmem>>, vector<1x160xf32>
    %23 = vector.broadcast %22 : vector<1x160xf32> to vector<128x160xf32>
    %24 = arith.addf %21, %23 : vector<128x160xf32>
    %25 = vector.extract_strided_slice %24 {offsets = [0, 0], sizes = [128, 128], strides = [1, 1]} : vector<128x160xf32> to vector<128x128xf32>
    %c0_19 = arith.constant 0 : index
    %c0_20 = arith.constant 0 : index
    %26 = vector.load %arg12[%c0_19, %c0_20] : memref<128x128xf32, #tpu.memory_space<vmem>>, vector<128x128xf32>
    tpu.vector_store %arg12[%c0_19, %c0_20], %25 {strides = array<i32>} : memref<128x128xf32, #tpu.memory_space<vmem>>, vector<128x128xf32>,
    %27 = vector.extract_strided_slice %24 {offsets = [0, 128], sizes = [128, 32], strides = [1, 1]} : vector<128x160xf32> to vector<128x32xf32>
    %cst_21 = arith.constant 0.000000e+00 : f32
    %28 = vector.broadcast %cst_21 : f32 to vector<128x32xf32>
    %29 = arith.maximumf %27, %28 : vector<128x32xf32>
    %30 = arith.truncf %29 : vector<128x32xf32> to vector<128x32xbf16>
    %c0_22 = arith.constant 0 : index
    %c0_23 = arith.constant 0 : index
    %31 = vector.load %arg8[%c0_22, %c0_23] : memref<32x32xbf16, #tpu.memory_space<vmem>>, vector<32x32xbf16>
    %cst_24 = arith.constant dense<0.000000e+00> : vector<128x32xf32>
    %32 = tpu.matmul %30, %31, %cst_24 {dimension_numbers = #tpu.dot_dimension_numbers<[1], [0], [0], [1], [0, 0, 1, 1], [], []>} : vector<128x32xbf16>, vector<32x32xbf16>, vector<128x32xf32> -> vector<128x32xf32>
    %c0_25 = arith.constant 0 : index
    %c0_26 = arith.constant 0 : index
    %33 = vector.load %arg9[%c0_25, %c0_26] : memref<1x32xf32, #tpu.memory_space<vmem>>, vector<1x32xf32>
    %34 = vector.broadcast %33 : vector<1x32xf32> to vector<128x32xf32>
    %35 = arith.addf %32, %34 : vector<128x32xf32>
    %36 = arith.truncf %35 : vector<128x32xf32> to vector<128x32xbf16>
    %c0_27 = arith.constant 0 : index
    %c0_28 = arith.constant 0 : index
    %37 = vector.load %arg13[%c0_27, %c0_28] : memref<128x32xbf16, #tpu.memory_space<vmem>>, vector<128x32xbf16>
    tpu.vector_store %arg13[%c0_27, %c0_28], %36 {strides = array<i32>} : memref<128x32xbf16, #tpu.memory_space<vmem>>, vector<128x32xbf16>,
    %38 = arith.truncf %35 : vector<128x32xf32> to vector<128x32xbf16>
    %c0_29 = arith.constant 0 : index
    %c0_30 = arith.constant 0 : index
    %39 = vector.load %arg10[%c0_29, %c0_30] : memref<32x128xbf16, #tpu.memory_space<vmem>>, vector<32x128xbf16>
    %cst_31 = arith.constant dense<0.000000e+00> : vector<128x128xf32>
    %40 = tpu.matmul %38, %39, %cst_31 {dimension_numbers = #tpu.dot_dimension_numbers<[1], [0], [0], [1], [0, 0, 1, 1], [], []>} : vector<128x32xbf16>, vector<32x128xbf16>, vector<128x128xf32> -> vector<128x128xf32>
    %c0_32 = arith.constant 0 : index
    %c0_33 = arith.constant 0 : index
    %41 = vector.load %arg14[%c0_32, %c0_33] : memref<128x128xf32, #tpu.memory_space<vmem>>, vector<128x128xf32>
    tpu.vector_store %arg14[%c0_32, %c0_33], %40 {strides = array<i32>} : memref<128x128xf32, #tpu.memory_space<vmem>>, vector<128x128xf32>,
    return
  }
  func.func @transform_0(%arg0: i32) -> (i32, i32) {
    %c0_i32 = arith.constant 0 : i32
    %c0_i32_0 = arith.constant 0 : i32
    return %arg0, %c0_i32 : i32, i32
  }
  func.func @transform_1(%arg0: i32) -> (i32, i32) {
    %c0_i32 = arith.constant 0 : i32
    %c0_i32_0 = arith.constant 0 : i32
    %c0_i32_1 = arith.constant 0 : i32
    return %c0_i32, %c0_i32_0 : i32, i32
  }
  func.func @transform_2(%arg0: i32) -> (i32, i32) {
    %c0_i32 = arith.constant 0 : i32
    %c0_i32_0 = arith.constant 0 : i32
    %c0_i32_1 = arith.constant 0 : i32
    return %c0_i32, %c0_i32_0 : i32, i32
  }
  func.func @transform_3(%arg0: i32) -> (i32, i32) {
    %c0_i32 = arith.constant 0 : i32
    %c0_i32_0 = arith.constant 0 : i32
    %c0_i32_1 = arith.constant 0 : i32
    return %c0_i32, %c0_i32_0 : i32, i32
  }
  func.func @transform_4(%arg0: i32) -> (i32, i32) {
    %c0_i32 = arith.constant 0 : i32
    %c0_i32_0 = arith.constant 0 : i32
    %c0_i32_1 = arith.constant 0 : i32
    return %c0_i32, %c0_i32_0 : i32, i32
  }
  func.func @transform_5(%arg0: i32) -> (i32, i32) {
    %c0_i32 = arith.constant 0 : i32
    %c0_i32_0 = arith.constant 0 : i32
    %c0_i32_1 = arith.constant 0 : i32
    return %c0_i32, %c0_i32_0 : i32, i32
  }
  func.func @transform_6(%arg0: i32) -> (i32, i32) {
    %c0_i32 = arith.constant 0 : i32
    %c0_i32_0 = arith.constant 0 : i32
    %c0_i32_1 = arith.constant 0 : i32
    return %c0_i32, %c0_i32_0 : i32, i32
  }
  func.func @transform_7(%arg0: i32) -> (i32, i32) {
    %c0_i32 = arith.constant 0 : i32
    %c0_i32_0 = arith.constant 0 : i32
    %c0_i32_1 = arith.constant 0 : i32
    return %c0_i32, %c0_i32_0 : i32, i32
  }
  func.func @transform_8(%arg0: i32) -> (i32, i32) {
    %c0_i32 = arith.constant 0 : i32
    %c0_i32_0 = arith.constant 0 : i32
    %c0_i32_1 = arith.constant 0 : i32
    return %c0_i32, %c0_i32_0 : i32, i32
  }
  func.func @transform_9(%arg0: i32) -> (i32, i32) {
    %c0_i32 = arith.constant 0 : i32
    %c0_i32_0 = arith.constant 0 : i32
    %c0_i32_1 = arith.constant 0 : i32
    return %c0_i32, %c0_i32_0 : i32, i32
  }
  func.func @transform_10(%arg0: i32) -> (i32, i32) {
    %c0_i32 = arith.constant 0 : i32
    %c0_i32_0 = arith.constant 0 : i32
    return %arg0, %c0_i32 : i32, i32
  }
  func.func @transform_11(%arg0: i32) -> (i32, i32) {
    %c0_i32 = arith.constant 0 : i32
    %c0_i32_0 = arith.constant 0 : i32
    return %arg0, %c0_i32 : i32, i32
  }
  func.func @transform_12(%arg0: i32) -> (i32, i32) {
    %c0_i32 = arith.constant 0 : i32
    %c0_i32_0 = arith.constant 0 : i32
    return %arg0, %c0_i32 : i32, i32
  }
  func.func @transform_13(%arg0: i32) -> (i32, i32) {
    %c0_i32 = arith.constant 0 : i32
    %c0_i32_0 = arith.constant 0 : i32
    return %arg0, %c0_i32 : i32, i32
  }
}

</mosaic_0001>

<llo_original>
// kernel: tpu_custom_call.1
$region0: #{tpu_custom_call.1}
  #allocation0 [shape = 'u32[]', space=smem, size = 0x4, offset = 0x4, fixed_abs, tag = 'smem constant byte address 0x4 - core index']
  #allocation1 [shape = 'u32[72,128]{1,0:T(1,128)}', space=vmem, size = 0x9000, scoped, tag = 'internal scratch']
  %s0 = inlined_call_operand.vmem [shape: f32[256,1568], index: 0, kind: input, shape index: {}]
  %s1 = inlined_call_operand.vmem [shape: bf16[1568,32], index: 1, kind: input, shape index: {}]
  %s2 = inlined_call_operand.vmem [shape: f32[1,32], index: 2, kind: input, shape index: {}]
  %s3 = inlined_call_operand.vmem [shape: bf16[32,32], index: 3, kind: input, shape index: {}]
  %s4 = inlined_call_operand.vmem [shape: f32[1,32], index: 4, kind: input, shape index: {}]
  %s5 = inlined_call_operand.vmem [shape: bf16[32,160], index: 5, kind: input, shape index: {}]
  %s6 = inlined_call_operand.vmem [shape: f32[1,160], index: 6, kind: input, shape index: {}]
  %s7 = inlined_call_operand.vmem [shape: bf16[32,32], index: 7, kind: input, shape index: {}]
  %s8 = inlined_call_operand.vmem [shape: f32[1,32], index: 8, kind: input, shape index: {}]
  %s9 = inlined_call_operand.vmem [shape: bf16[32,128], index: 9, kind: input, shape index: {}]
  %s10 = inlined_call_operand.vmem [shape: bf16[256,32], index: 10, kind: output, shape index: {0}]
  %s11 = inlined_call_operand.hbm [shape: f32[256,128], index: 11, kind: output, shape index: {1}]
  %s12 = inlined_call_operand.vmem [shape: bf16[256,32], index: 12, kind: output, shape index: {2}]
  %s13 = inlined_call_operand.hbm [shape: f32[256,128], index: 13, kind: output, shape index: {3}]
  %14 = xla_tuple %s10, %s11, %s12, %s13
  %s15 = sld [smem:[#allocation0]]
  $region97: #{tpu_custom_call.1} parent=0
    _
  %s17 = ssub.s32 1, %s15
  %s18 = scalar_select 0, %s17, %s15
  $region1: #{tpu_custom_call.1} parent=0
    #allocation2 [shape = 'u8[131072]{0}', space=vmem, size = 0x20000, scoped, tag = 'output window, operand 1']
    #allocation3 [shape = 's32[2]{0}', space=sflag, size = 0x8, scoped, tag = 'scoped memory for tpu_custom_call.1']
    #allocation4 [shape = 'u8[131072]{0}', space=vmem, size = 0x20000, scoped, tag = 'output window, operand 3']
    #allocation5 [shape = 's32[2]{0}', space=sflag, size = 0x8, scoped, tag = 'scoped memory for tpu_custom_call.1']
    %19 = vsyncpa [#allocation3], 0
    %s20 = scalar_lea.sflag [#allocation3], 1
    %21 = vsyncpa %s20, 0
    %22 = vsyncpa [#allocation5], 0
    %s23 = scalar_lea.sflag [#allocation5], 1
    %24 = vsyncpa %s23, 0
    loop: start=0, step=1, limit=4
    $region2: #{tpu_custom_call.1} parent=1 // loop_pre_header
      _
    $region3: #{tpu_custom_call.1} parent=1 // loop_header
      %s26 = sphi 0, %s30
      %p27 = scmp.ge.s32.totalorder %s26, 4
      %s36 = sphi 0, %s38
      %s39 = sphi 0, %s36
      %s40 = sphi 0, %s39
      %s56 = sphi 0, %s40
      %s60 = sphi 0, %s60
      %s62 = sphi 0, %s60
      %s63 = sphi 0, %s62
      %s77 = sphi 0, %s63
      %s81 = sphi 0, %s81
      %s83 = sphi 0, %s81
      %s84 = sphi 0, %s83
      %s98 = sphi 0, %s84
      %s102 = sphi 0, %s102
      %s104 = sphi 0, %s102
      %s105 = sphi 0, %s104
      %s119 = sphi 0, %s105
      %s123 = sphi 0, %s123
      %s125 = sphi 0, %s123
      %s126 = sphi 0, %s125
      %s140 = sphi 0, %s126
      %s144 = sphi 0, %s144
      %s146 = sphi 0, %s144
      %s147 = sphi 0, %s146
      %s161 = sphi 0, %s147
      %s165 = sphi 0, %s165
      %s167 = sphi 0, %s165
      %s168 = sphi 0, %s167
      %s182 = sphi 0, %s168
      %s186 = sphi 0, %s186
      %s188 = sphi 0, %s186
      %s189 = sphi 0, %s188
      %s203 = sphi 0, %s189
      %s207 = sphi 0, %s207
      %s209 = sphi 0, %s207
      %s210 = sphi 0, %s209
      %s224 = sphi 0, %s210
      %s228 = sphi 0, %s228
      %s230 = sphi 0, %s228
      %s231 = sphi 0, %s230
      %s245 = sphi 0, %s231
      %s251 = sphi 0, %s253
      %s254 = sphi 0, %s251
      %s255 = sphi 0, %s254
      %s271 = sphi 0, %s255
      %s277 = sphi 0, %s279
      %s280 = sphi 0, %s277
      %s281 = sphi 0, %s280
      %s297 = sphi 0, %s281
      %s303 = sphi 0, %s305
      %s306 = sphi 0, %s303
      %s307 = sphi 0, %s306
      %s323 = sphi 0, %s307
      %s329 = sphi 0, %s331
      %s332 = sphi 0, %s329
      %s333 = sphi 0, %s332
      %s349 = sphi 0, %s333
    $region4: #{tpu_custom_call.1} parent=1 // loop_header_branch
      %29 = sbr.rel (%p27) target = $region8
    $region5: #{tpu_custom_call.1} parent=1 // loop_body
      %s31 = ssub.s32 %s26, 1
      %s32 = ssub.s32 %s26, 2
      %s33 = sadd.s32 %s26, 1
      %s34 = ssub.s32 %s26, %s33
      %p35 = scmp.eq.s32.totalorder %s34, 0
      %s37 = sadd.s32 %s36, 1
      %s38 = scalar_select %p35, %s36, %s37
      %p41 = pneg %p35
      %p42 = scmp.eq.s32.totalorder %s26, 1
      %p43 = por %p41, %p42
      %p44 = scmp.ne.s32.totalorder %s36, %s39
      %p45 = scmp.eq.s32.totalorder %s26, 0
      %p46 = por %p44, %p45
      %p47 = scmp.ne.s32.totalorder %s36, %s39
      %p48 = scmp.eq.s32.totalorder %s31, 1
      %p49 = por %p47, %p48
      %p50 = scmp.ne.s32.totalorder %s39, %s40
      %p51 = scmp.eq.s32.totalorder %s31, 0
      %p52 = por %p50, %p51
      %p53 = scmp.ne.s32.totalorder %s39, %s40
      %p54 = scmp.eq.s32.totalorder %s32, 1
      %p55 = por %p53, %p54
      %p57 = scmp.ne.s32.totalorder %s40, %s56
      %p58 = scmp.eq.s32.totalorder %s32, 0
      %p59 = por %p57, %p58
      %s61 = sadd.s32 %s60, 1
      %p64 = scmp.eq.s32.totalorder %s26, 1
      %p65 = scmp.ne.s32.totalorder %s60, %s62
      %p66 = scmp.eq.s32.totalorder %s26, 0
      %p67 = por %p65, %p66
      %p68 = scmp.ne.s32.totalorder %s60, %s62
      %p69 = scmp.eq.s32.totalorder %s31, 1
      %p70 = por %p68, %p69
      %p71 = scmp.ne.s32.totalorder %s62, %s63
      %p72 = scmp.eq.s32.totalorder %s31, 0
      %p73 = por %p71, %p72
      %p74 = scmp.ne.s32.totalorder %s62, %s63
      %p75 = scmp.eq.s32.totalorder %s32, 1
      %p76 = por %p74, %p75
      %p78 = scmp.ne.s32.totalorder %s63, %s77
      %p79 = scmp.eq.s32.totalorder %s32, 0
      %p80 = por %p78, %p79
      %s82 = sadd.s32 %s81, 1
      %p85 = scmp.eq.s32.totalorder %s26, 1
      %p86 = scmp.ne.s32.totalorder %s81, %s83
      %p87 = scmp.eq.s32.totalorder %s26, 0
      %p88 = por %p86, %p87
      %p89 = scmp.ne.s32.totalorder %s81, %s83
      %p90 = scmp.eq.s32.totalorder %s31, 1
      %p91 = por %p89, %p90
      %p92 = scmp.ne.s32.totalorder %s83, %s84
      %p93 = scmp.eq.s32.totalorder %s31, 0
      %p94 = por %p92, %p93
      %p95 = scmp.ne.s32.totalorder %s83, %s84
      %p96 = scmp.eq.s32.totalorder %s32, 1
      %p97 = por %p95, %p96
      %p99 = scmp.ne.s32.totalorder %s84, %s98
      %p100 = scmp.eq.s32.totalorder %s32, 0
      %p101 = por %p99, %p100
      %s103 = sadd.s32 %s102, 1
      %p106 = scmp.eq.s32.totalorder %s26, 1
      %p107 = scmp.ne.s32.totalorder %s102, %s104
      %p108 = scmp.eq.s32.totalorder %s26, 0
      %p109 = por %p107, %p108
      %p110 = scmp.ne.s32.totalorder %s102, %s104
      %p111 = scmp.eq.s32.totalorder %s31, 1
      %p112 = por %p110, %p111
      %p113 = scmp.ne.s32.totalorder %s104, %s105
      %p114 = scmp.eq.s32.totalorder %s31, 0
      %p115 = por %p113, %p114
      %p116 = scmp.ne.s32.totalorder %s104, %s105
      %p117 = scmp.eq.s32.totalorder %s32, 1
      %p118 = por %p116, %p117
      %p120 = scmp.ne.s32.totalorder %s105, %s119
      %p121 = scmp.eq.s32.totalorder %s32, 0
      %p122 = por %p120, %p121
      %s124 = sadd.s32 %s123, 1
      %p127 = scmp.eq.s32.totalorder %s26, 1
      %p128 = scmp.ne.s32.totalorder %s123, %s125
      %p129 = scmp.eq.s32.totalorder %s26, 0
      %p130 = por %p128, %p129
      %p131 = scmp.ne.s32.totalorder %s123, %s125
      %p132 = scmp.eq.s32.totalorder %s31, 1
      %p133 = por %p131, %p132
      %p134 = scmp.ne.s32.totalorder %s125, %s126
      %p135 = scmp.eq.s32.totalorder %s31, 0
      %p136 = por %p134, %p135
      %p137 = scmp.ne.s32.totalorder %s125, %s126
      %p138 = scmp.eq.s32.totalorder %s32, 1
      %p139 = por %p137, %p138
      %p141 = scmp.ne.s32.totalorder %s126, %s140
      %p142 = scmp.eq.s32.totalorder %s32, 0
      %p143 = por %p141, %p142
      %s145 = sadd.s32 %s144, 1
      %p148 = scmp.eq.s32.totalorder %s26, 1
      %p149 = scmp.ne.s32.totalorder %s144, %s146
      %p150 = scmp.eq.s32.totalorder %s26, 0
      %p151 = por %p149, %p150
      %p152 = scmp.ne.s32.totalorder %s144, %s146
      %p153 = scmp.eq.s32.totalorder %s31, 1
      %p154 = por %p152, %p153
      %p155 = scmp.ne.s32.totalorder %s146, %s147
      %p156 = scmp.eq.s32.totalorder %s31, 0
      %p157 = por %p155, %p156
      %p158 = scmp.ne.s32.totalorder %s146, %s147
      %p159 = scmp.eq.s32.totalorder %s32, 1
      %p160 = por %p158, %p159
      %p162 = scmp.ne.s32.totalorder %s147, %s161
      %p163 = scmp.eq.s32.totalorder %s32, 0
      %p164 = por %p162, %p163
      %s166 = sadd.s32 %s165, 1
      %p169 = scmp.eq.s32.totalorder %s26, 1
      %p170 = scmp.ne.s32.totalorder %s165, %s167
      %p171 = scmp.eq.s32.totalorder %s26, 0
      %p172 = por %p170, %p171
      %p173 = scmp.ne.s32.totalorder %s165, %s167
      %p174 = scmp.eq.s32.totalorder %s31, 1
      %p175 = por %p173, %p174
      %p176 = scmp.ne.s32.totalorder %s167, %s168
      %p177 = scmp.eq.s32.totalorder %s31, 0
      %p178 = por %p176, %p177
      %p179 = scmp.ne.s32.totalorder %s167, %s168
      %p180 = scmp.eq.s32.totalorder %s32, 1
      %p181 = por %p179, %p180
      %p183 = scmp.ne.s32.totalorder %s168, %s182
      %p184 = scmp.eq.s32.totalorder %s32, 0
      %p185 = por %p183, %p184
      %s187 = sadd.s32 %s186, 1
      %p190 = scmp.eq.s32.totalorder %s26, 1
      %p191 = scmp.ne.s32.totalorder %s186, %s188
      %p192 = scmp.eq.s32.totalorder %s26, 0
      %p193 = por %p191, %p192
      %p194 = scmp.ne.s32.totalorder %s186, %s188
      %p195 = scmp.eq.s32.totalorder %s31, 1
      %p196 = por %p194, %p195
      %p197 = scmp.ne.s32.totalorder %s188, %s189
      %p198 = scmp.eq.s32.totalorder %s31, 0
      %p199 = por %p197, %p198
      %p200 = scmp.ne.s32.totalorder %s188, %s189
      %p201 = scmp.eq.s32.totalorder %s32, 1
      %p202 = por %p200, %p201
      %p204 = scmp.ne.s32.totalorder %s189, %s203
      %p205 = scmp.eq.s32.totalorder %s32, 0
      %p206 = por %p204, %p205
      %s208 = sadd.s32 %s207, 1
      %p211 = scmp.eq.s32.totalorder %s26, 1
      %p212 = scmp.ne.s32.totalorder %s207, %s209
      %p213 = scmp.eq.s32.totalorder %s26, 0
      %p214 = por %p212, %p213
      %p215 = scmp.ne.s32.totalorder %s207, %s209
      %p216 = scmp.eq.s32.totalorder %s31, 1
      %p217 = por %p215, %p216
      %p218 = scmp.ne.s32.totalorder %s209, %s210
      %p219 = scmp.eq.s32.totalorder %s31, 0
      %p220 = por %p218, %p219
      %p221 = scmp.ne.s32.totalorder %s209, %s210
      %p222 = scmp.eq.s32.totalorder %s32, 1
      %p223 = por %p221, %p222
      %p225 = scmp.ne.s32.totalorder %s210, %s224
      %p226 = scmp.eq.s32.totalorder %s32, 0
      %p227 = por %p225, %p226
      %s229 = sadd.s32 %s228, 1
      %p232 = scmp.eq.s32.totalorder %s26, 1
      %p233 = scmp.ne.s32.totalorder %s228, %s230
      %p234 = scmp.eq.s32.totalorder %s26, 0
      %p235 = por %p233, %p234
      %p236 = scmp.ne.s32.totalorder %s228, %s230
      %p237 = scmp.eq.s32.totalorder %s31, 1
      %p238 = por %p236, %p237
      %p239 = scmp.ne.s32.totalorder %s230, %s231
      %p240 = scmp.eq.s32.totalorder %s31, 0
      %p241 = por %p239, %p240
      %p242 = scmp.ne.s32.totalorder %s230, %s231
      %p243 = scmp.eq.s32.totalorder %s32, 1
      %p244 = por %p242, %p243
      %p246 = scmp.ne.s32.totalorder %s231, %s245
      %p247 = scmp.eq.s32.totalorder %s32, 0
      %p248 = por %p246, %p247
      %s249 = ssub.s32 %s26, %s33
      %p250 = scmp.eq.s32.totalorder %s249, 0
      %s252 = sadd.s32 %s251, 1
      %s253 = scalar_select %p250, %s251, %s252
      %p256 = pneg %p250
      %p257 = scmp.eq.s32.totalorder %s26, 1
      %p258 = por %p256, %p257
      %p259 = scmp.ne.s32.totalorder %s251, %s254
      %p260 = scmp.eq.s32.totalorder %s26, 0
      %p261 = por %p259, %p260
      %p262 = scmp.ne.s32.totalorder %s251, %s254
      %p263 = scmp.eq.s32.totalorder %s31, 1
      %p264 = por %p262, %p263
      %p265 = scmp.ne.s32.totalorder %s254, %s255
      %p266 = scmp.eq.s32.totalorder %s31, 0
      %p267 = por %p265, %p266
      %p268 = scmp.ne.s32.totalorder %s254, %s255
      %p269 = scmp.eq.s32.totalorder %s32, 1
      %p270 = por %p268, %p269
      %p272 = scmp.ne.s32.totalorder %s255, %s271
      %p273 = scmp.eq.s32.totalorder %s32, 0
      %p274 = por %p272, %p273
      %s275 = ssub.s32 %s26, %s33
      %p276 = scmp.eq.s32.totalorder %s275, 0
      %s278 = sadd.s32 %s277, 1
      %s279 = scalar_select %p276, %s277, %s278
      %p282 = pneg %p276
      %p283 = scmp.eq.s32.totalorder %s26, 1
      %p284 = por %p282, %p283
      %p285 = scmp.ne.s32.totalorder %s277, %s280
      %p286 = scmp.eq.s32.totalorder %s26, 0
      %p287 = por %p285, %p286
      %p288 = scmp.ne.s32.totalorder %s277, %s280
      %p289 = scmp.eq.s32.totalorder %s31, 1
      %p290 = por %p288, %p289
      %p291 = scmp.ne.s32.totalorder %s280, %s281
      %p292 = scmp.eq.s32.totalorder %s31, 0
      %p293 = por %p291, %p292
      %p294 = scmp.ne.s32.totalorder %s280, %s281
      %p295 = scmp.eq.s32.totalorder %s32, 1
      %p296 = por %p294, %p295
      %p298 = scmp.ne.s32.totalorder %s281, %s297
      %p299 = scmp.eq.s32.totalorder %s32, 0
      %p300 = por %p298, %p299
      %s301 = ssub.s32 %s26, %s33
      %p302 = scmp.eq.s32.totalorder %s301, 0
      %s304 = sadd.s32 %s303, 1
      %s305 = scalar_select %p302, %s303, %s304
      %p308 = pneg %p302
      %p309 = scmp.eq.s32.totalorder %s26, 1
      %p310 = por %p308, %p309
      %p311 = scmp.ne.s32.totalorder %s303, %s306
      %p312 = scmp.eq.s32.totalorder %s26, 0
      %p313 = por %p311, %p312
      %p314 = scmp.ne.s32.totalorder %s303, %s306
      %p315 = scmp.eq.s32.totalorder %s31, 1
      %p316 = por %p314, %p315
      %p317 = scmp.ne.s32.totalorder %s306, %s307
      %p318 = scmp.eq.s32.totalorder %s31, 0
      %p319 = por %p317, %p318
      %p320 = scmp.ne.s32.totalorder %s306, %s307
      %p321 = scmp.eq.s32.totalorder %s32, 1
      %p322 = por %p320, %p321
      %p324 = scmp.ne.s32.totalorder %s307, %s323
      %p325 = scmp.eq.s32.totalorder %s32, 0
      %p326 = por %p324, %p325
      %s327 = ssub.s32 %s26, %s33
      %p328 = scmp.eq.s32.totalorder %s327, 0
      %s330 = sadd.s32 %s329, 1
      %s331 = scalar_select %p328, %s329, %s330
      %p334 = pneg %p328
      %p335 = scmp.eq.s32.totalorder %s26, 1
      %p336 = por %p334, %p335
      %p337 = scmp.ne.s32.totalorder %s329, %s332
      %p338 = scmp.eq.s32.totalorder %s26, 0
      %p339 = por %p337, %p338
      %p340 = scmp.ne.s32.totalorder %s329, %s332
      %p341 = scmp.eq.s32.totalorder %s31, 1
      %p342 = por %p340, %p341
      %p343 = scmp.ne.s32.totalorder %s332, %s333
      %p344 = scmp.eq.s32.totalorder %s31, 0
      %p345 = por %p343, %p344
      %p346 = scmp.ne.s32.totalorder %s332, %s333
      %p347 = scmp.eq.s32.totalorder %s32, 1
      %p348 = por %p346, %p347
      %p350 = scmp.ne.s32.totalorder %s333, %s349
      %p351 = scmp.eq.s32.totalorder %s32, 0
      %p352 = por %p350, %p351
      %p353 = scmp.le.s32.totalorder 1, %s26
      %p354 = scmp.lt.s32.totalorder %s26, 3
      %p355 = pnand %p353, %p354
      %p356 = pneg %p355
      // Predicated region
      $region9: #{tpu_custom_call.1} parent=5 // pred_check
        _
      $region10: #{tpu_custom_call.1} parent=5 // pred_check_branch
        %358 = sbr.rel (%p355) target = $region12
      $region11: #{tpu_custom_call.1} parent=5 // pred_region
        %s359 = ssub.s32 %s26, 1
        // Predicated region
        $region13: #{tpu_custom_call.1} parent=11 // pred_check
          %p360 = pneg %p73
        $region14: #{tpu_custom_call.1} parent=11 // pred_check_branch
          %362 = sbr.rel (%p360) target = $region16
        $region15: #{tpu_custom_call.1} parent=11 // pred_region
          _
        $region16: #{tpu_custom_call.1} parent=11 // pred_fallthru
          _
        // Predicated region
        $region17: #{tpu_custom_call.1} parent=11 // pred_check
          %p363 = pneg %p94
        $region18: #{tpu_custom_call.1} parent=11 // pred_check_branch
          %365 = sbr.rel (%p363) target = $region20
        $region19: #{tpu_custom_call.1} parent=11 // pred_region
          _
        $region20: #{tpu_custom_call.1} parent=11 // pred_fallthru
          _
        // Predicated region
        $region21: #{tpu_custom_call.1} parent=11 // pred_check
          %p366 = pneg %p115
        $region22: #{tpu_custom_call.1} parent=11 // pred_check_branch
          %368 = sbr.rel (%p366) target = $region24
        $region23: #{tpu_custom_call.1} parent=11 // pred_region
          _
        $region24: #{tpu_custom_call.1} parent=11 // pred_fallthru
          _
        // Predicated region
        $region25: #{tpu_custom_call.1} parent=11 // pred_check
          %p369 = pneg %p136
        $region26: #{tpu_custom_call.1} parent=11 // pred_check_branch
          %371 = sbr.rel (%p369) target = $region28
        $region27: #{tpu_custom_call.1} parent=11 // pred_region
          _
        $region28: #{tpu_custom_call.1} parent=11 // pred_fallthru
          _
        // Predicated region
        $region29: #{tpu_custom_call.1} parent=11 // pred_check
          %p372 = pneg %p157
        $region30: #{tpu_custom_call.1} parent=11 // pred_check_branch
          %374 = sbr.rel (%p372) target = $region32
        $region31: #{tpu_custom_call.1} parent=11 // pred_region
          _
        $region32: #{tpu_custom_call.1} parent=11 // pred_fallthru
          _
        // Predicated region
        $region33: #{tpu_custom_call.1} parent=11 // pred_check
          %p375 = pneg %p178
        $region34: #{tpu_custom_call.1} parent=11 // pred_check_branch
          %377 = sbr.rel (%p375) target = $region36
        $region35: #{tpu_custom_call.1} parent=11 // pred_region
          _
        $region36: #{tpu_custom_call.1} parent=11 // pred_fallthru
          _
        // Predicated region
        $region37: #{tpu_custom_call.1} parent=11 // pred_check
          %p378 = pneg %p199
        $region38: #{tpu_custom_call.1} parent=11 // pred_check_branch
          %380 = sbr.rel (%p378) target = $region40
        $region39: #{tpu_custom_call.1} parent=11 // pred_region
          _
        $region40: #{tpu_custom_call.1} parent=11 // pred_fallthru
          _
        // Predicated region
        $region41: #{tpu_custom_call.1} parent=11 // pred_check
          %p381 = pneg %p220
        $region42: #{tpu_custom_call.1} parent=11 // pred_check_branch
          %383 = sbr.rel (%p381) target = $region44
        $region43: #{tpu_custom_call.1} parent=11 // pred_region
          _
        $region44: #{tpu_custom_call.1} parent=11 // pred_fallthru
          _
        // Predicated region
        $region45: #{tpu_custom_call.1} parent=11 // pred_check
          %p384 = pneg %p241
        $region46: #{tpu_custom_call.1} parent=11 // pred_check_branch
          %386 = sbr.rel (%p384) target = $region48
        $region47: #{tpu_custom_call.1} parent=11 // pred_region
          _
        $region48: #{tpu_custom_call.1} parent=11 // pred_fallthru
          _
      $region12: #{tpu_custom_call.1} parent=5 // pred_fallthru
        _
      %p387 = scmp.lt.s32.totalorder %s26, 2
      // Predicated region
      $region49: #{tpu_custom_call.1} parent=5 // pred_check
        %p388 = pneg %p387
      $region50: #{tpu_custom_call.1} parent=5 // pred_check_branch
        %390 = sbr.rel (%p388) target = $region52
      $region51: #{tpu_custom_call.1} parent=5 // pred_region
        // Predicated region
        $region53: #{tpu_custom_call.1} parent=51 // pred_check
          %p391 = pneg %p46
        $region54: #{tpu_custom_call.1} parent=51 // pred_check_branch
          %393 = sbr.rel (%p391) target = $region56
        $region55: #{tpu_custom_call.1} parent=51 // pred_region
          %s394 = smul.u32 16, %s26
          %p395 = scmp.lt.s32.totalorder %s394, 31
          %s396 = scalar_select %p395, %s394, 31
          %s397 = smul.addr %s396, 13
          %s398 = smul.addr %s397, 8
          %s399 = scalar_lea.vmem %s0, %s398
          %s400 = smul.u32 16, %s26
        $region56: #{tpu_custom_call.1} parent=51 // pred_fallthru
          _
      $region52: #{tpu_custom_call.1} parent=5 // pred_fallthru
        _
      %p401 = scmp.le.s32.totalorder 1, %s26
      %p402 = scmp.lt.s32.totalorder %s26, 3
      %p403 = pnand %p401, %p402
      %p404 = pneg %p403
      // Predicated region
      $region57: #{tpu_custom_call.1} parent=5 // pred_check
        _
      $region58: #{tpu_custom_call.1} parent=5 // pred_check_branch
        %406 = sbr.rel (%p403) target = $region60
      $region59: #{tpu_custom_call.1} parent=5 // pred_region
        %s407 = ssub.s32 %s26, 1
        %s408 = smul.u32 16, %s31
        %p409 = scmp.lt.s32.totalorder %s408, 31
        %s410 = scalar_select %p409, %s408, 31
        %s411 = smul.addr %s410, 13
        %s412 = smul.addr %s411, 8
        %s413 = scalar_lea.vmem %s0, %s412
        %p414 = pneg %p52
        %p415 = pneg %p49
        %p416 = pneg %p73
        %p417 = pneg %p70
        %p418 = pneg %p94
        %p419 = pneg %p91
        %p420 = pneg %p115
        %p421 = pneg %p112
        %p422 = pneg %p136
        %p423 = pneg %p133
        %p424 = pneg %p157
        %p425 = pneg %p154
        %p426 = pneg %p178
        %p427 = pneg %p175
        %p428 = pneg %p199
        %p429 = pneg %p196
        %p430 = pneg %p220
        %p431 = pneg %p217
        %p432 = pneg %p241
        %p433 = pneg %p238
        %p434 = pneg %p267
        %p435 = pneg %p264
        %s436 = smul.u32 16, %s31
        %p437 = scmp.lt.s32.totalorder %s436, 31
        %s438 = scalar_select %p437, %s436, 31
        %s439 = smul.addr %s438, 4
        %s440 = scalar_lea.vmem %s10, %s439
        %p441 = pneg %p293
        %p442 = pneg %p290
        %s443 = sand.u32 %s280, 1
        %s444 = scalar_lea.sflag [#allocation3], %s443
        %s445 = sand.u32 %s280, 1
        %s446 = smul.addr %s445, 128
        %s447 = scalar_lea.vmem [#allocation2], %s446
        %p448 = pneg %p319
        %p449 = pneg %p316
        %s450 = smul.u32 16, %s31
        %p451 = scmp.lt.s32.totalorder %s450, 31
        %s452 = scalar_select %p451, %s450, 31
        %s453 = smul.addr %s452, 4
        %s454 = scalar_lea.vmem %s12, %s453
        %p455 = pneg %p345
        %p456 = pneg %p342
        %s457 = sand.u32 %s332, 1
        %s458 = scalar_lea.sflag [#allocation5], %s457
        %s459 = sand.u32 %s332, 1
        %s460 = smul.addr %s459, 128
        %s461 = scalar_lea.vmem [#allocation4], %s460
        %s462 = smul.u32 16, %s31
        %p463 = scmp.lt.s32.totalorder %s462, 31
        %s464 = scalar_select %p463, %s462, 31
        %s465 = smul.addr %s464, 13
        %s466 = smul.addr %s465, 8
        %s467 = scalar_lea.vmem %s0, %s466
        %s468 = smul.u32 16, %s31
        %s469 = smul.u32 16, %s31
        %p470 = scmp.lt.s32.totalorder %s469, 31
        %s471 = scalar_select %p470, %s469, 31
        %s472 = smul.addr %s471, 4
        %s473 = scalar_lea.vmem %s10, %s472
        %s474 = smul.u32 16, %s31
        %s475 = smul.u32 16, %s31
        %s476 = smul.u32 16, %s31
        %p477 = scmp.lt.s32.totalorder %s476, 31
        %s478 = scalar_select %p477, %s476, 31
        %s479 = smul.addr %s478, 4
        %s480 = scalar_lea.vmem %s12, %s479
        %s481 = smul.u32 16, %s31
        %s482 = smul.u32 16, %s31
        %v484 = vld [vmem:[%s467] sm:$0xff]
        %v485 = vld [vmem:[%s467 + $0x8] sm:$0xff]
        %v486 = vld [vmem:[%s467 + $0x10] sm:$0xff]
        %v487 = vld [vmem:[%s467 + $0x18] sm:$0xff]
        %v488 = vld [vmem:[%s467 + $0x20] sm:$0xff]
        %v489 = vld [vmem:[%s467 + $0x28] sm:$0xff]
        %v490 = vld [vmem:[%s467 + $0x30] sm:$0xff]
        %v491 = vld [vmem:[%s467 + $0x38] sm:$0xff]
        %v492 = vld [vmem:[%s467 + $0x40] sm:$0xff]
        %v493 = vld [vmem:[%s467 + $0x48] sm:$0xff]
        %v494 = vld [vmem:[%s467 + $0x50] sm:$0xff]
        %v495 = vld [vmem:[%s467 + $0x58] sm:$0xff]
        %v496 = vld [vmem:[%s467 + $0x60] sm:$0xff]
        %v497 = vld [vmem:[%s467 + $0x68] sm:$0xff]
        %v498 = vld [vmem:[%s467 + $0x70] sm:$0xff]
        %v499 = vld [vmem:[%s467 + $0x78] sm:$0xff]
        %v500 = vld [vmem:[%s467 + $0x80] sm:$0xff]
        %v501 = vld [vmem:[%s467 + $0x88] sm:$0xff]
        %v502 = vld [vmem:[%s467 + $0x90] sm:$0xff]
        %v503 = vld [vmem:[%s467 + $0x98] sm:$0xff]
        %v504 = vld [vmem:[%s467 + $0xa0] sm:$0xff]
        %v505 = vld [vmem:[%s467 + $0xa8] sm:$0xff]
        %v506 = vld [vmem:[%s467 + $0xb0] sm:$0xff]
        %v507 = vld [vmem:[%s467 + $0xb8] sm:$0xff]
        %v508 = vld [vmem:[%s467 + $0xc0] sm:$0xff]
        %v509 = vld [vmem:[%s467 + $0xc8] sm:$0xff]
        %v510 = vld [vmem:[%s467 + $0xd0] sm:$0xff]
        %v511 = vld [vmem:[%s467 + $0xd8] sm:$0xff]
        %v512 = vld [vmem:[%s467 + $0xe0] sm:$0xff]
        %v513 = vld [vmem:[%s467 + $0xe8] sm:$0xff]
        %v514 = vld [vmem:[%s467 + $0xf0] sm:$0xff]
        %v515 = vld [vmem:[%s467 + $0xf8] sm:$0xff]
        %v516 = vld [vmem:[%s467 + $0x100] sm:$0xff]
        %v517 = vld [vmem:[%s467 + $0x108] sm:$0xff]
        %v518 = vld [vmem:[%s467 + $0x110] sm:$0xff]
        %v519 = vld [vmem:[%s467 + $0x118] sm:$0xff]
        %v520 = vld [vmem:[%s467 + $0x120] sm:$0xff]
        %v521 = vld [vmem:[%s467 + $0x128] sm:$0xff]
        %v522 = vld [vmem:[%s467 + $0x130] sm:$0xff]
        %v523 = vld [vmem:[%s467 + $0x138] sm:$0xff]
        %v524 = vld [vmem:[%s467 + $0x140] sm:$0xff]
        %v525 = vld [vmem:[%s467 + $0x148] sm:$0xff]
        %v526 = vld [vmem:[%s467 + $0x150] sm:$0xff]
        %v527 = vld [vmem:[%s467 + $0x158] sm:$0xff]
        %v528 = vld [vmem:[%s467 + $0x160] sm:$0xff]
        %v529 = vld [vmem:[%s467 + $0x168] sm:$0xff]
        %v530 = vld [vmem:[%s467 + $0x170] sm:$0xff]
        %v531 = vld [vmem:[%s467 + $0x178] sm:$0xff]
        %v532 = vld [vmem:[%s467 + $0x180] sm:$0xff]
        %v533 = vld [vmem:[%s467 + $0x188] sm:$0xff]
        %v534 = vld [vmem:[%s467 + $0x190] sm:$0xff]
        %v535 = vld [vmem:[%s467 + $0x198] sm:$0xff]
        %v536 = vld [vmem:[%s467 + $0x1a0] sm:$0xff]
        %v537 = vld [vmem:[%s467 + $0x1a8] sm:$0xff]
        %v538 = vld [vmem:[%s467 + $0x1b0] sm:$0xff]
        %v539 = vld [vmem:[%s467 + $0x1b8] sm:$0xff]
        %v540 = vld [vmem:[%s467 + $0x1c0] sm:$0xff]
        %v541 = vld [vmem:[%s467 + $0x1c8] sm:$0xff]
        %v542 = vld [vmem:[%s467 + $0x1d0] sm:$0xff]
        %v543 = vld [vmem:[%s467 + $0x1d8] sm:$0xff]
        %v544 = vld [vmem:[%s467 + $0x1e0] sm:$0xff]
        %v545 = vld [vmem:[%s467 + $0x1e8] sm:$0xff]
        %v546 = vld [vmem:[%s467 + $0x1f0] sm:$0xff]
        %v547 = vld [vmem:[%s467 + $0x1f8] sm:$0xff]
        %v548 = vld [vmem:[%s467 + $0x200] sm:$0xff]
        %v549 = vld [vmem:[%s467 + $0x208] sm:$0xff]
        %v550 = vld [vmem:[%s467 + $0x210] sm:$0xff]
        %v551 = vld [vmem:[%s467 + $0x218] sm:$0xff]
        %v552 = vld [vmem:[%s467 + $0x220] sm:$0xff]
        %v553 = vld [vmem:[%s467 + $0x228] sm:$0xff]
        %v554 = vld [vmem:[%s467 + $0x230] sm:$0xff]
        %v555 = vld [vmem:[%s467 + $0x238] sm:$0xff]
        %v556 = vld [vmem:[%s467 + $0x240] sm:$0xff]
        %v557 = vld [vmem:[%s467 + $0x248] sm:$0xff]
        %v558 = vld [vmem:[%s467 + $0x250] sm:$0xff]
        %v559 = vld [vmem:[%s467 + $0x258] sm:$0xff]
        %v560 = vld [vmem:[%s467 + $0x260] sm:$0xff]
        %v561 = vld [vmem:[%s467 + $0x268] sm:$0xff]
        %v562 = vld [vmem:[%s467 + $0x270] sm:$0xff]
        %v563 = vld [vmem:[%s467 + $0x278] sm:$0xff]
        %v564 = vld [vmem:[%s467 + $0x280] sm:$0xff]
        %v565 = vld [vmem:[%s467 + $0x288] sm:$0xff]
        %v566 = vld [vmem:[%s467 + $0x290] sm:$0xff]
        %v567 = vld [vmem:[%s467 + $0x298] sm:$0xff]
        %v568 = vld [vmem:[%s467 + $0x2a0] sm:$0xff]
        %v569 = vld [vmem:[%s467 + $0x2a8] sm:$0xff]
        %v570 = vld [vmem:[%s467 + $0x2b0] sm:$0xff]
        %v571 = vld [vmem:[%s467 + $0x2b8] sm:$0xff]
        %v572 = vld [vmem:[%s467 + $0x2c0] sm:$0xff]
        %v573 = vld [vmem:[%s467 + $0x2c8] sm:$0xff]
        %v574 = vld [vmem:[%s467 + $0x2d0] sm:$0xff]
        %v575 = vld [vmem:[%s467 + $0x2d8] sm:$0xff]
        %v576 = vld [vmem:[%s467 + $0x2e0] sm:$0xff]
        %v577 = vld [vmem:[%s467 + $0x2e8] sm:$0xff]
        %v578 = vld [vmem:[%s467 + $0x2f0] sm:$0xff]
        %v579 = vld [vmem:[%s467 + $0x2f8] sm:$0xff]
        %v580 = vld [vmem:[%s467 + $0x300] sm:$0xff]
        %v581 = vld [vmem:[%s467 + $0x308] sm:$0xff]
        %v582 = vld [vmem:[%s467 + $0x310] sm:$0xff]
        %v583 = vld [vmem:[%s467 + $0x318] sm:$0xff]
        %v584 = vld [vmem:[%s467 + $0x320] sm:$0xff]
        %v585 = vld [vmem:[%s467 + $0x328] sm:$0xff]
        %v586 = vld [vmem:[%s467 + $0x330] sm:$0xff]
        %v587 = vld [vmem:[%s467 + $0x338] sm:$0xff]
        %v588 = vld [vmem:[%s467 + $0x340] sm:$0xff]
        %v589 = vld [vmem:[%s467 + $0x348] sm:$0xff]
        %v590 = vld [vmem:[%s467 + $0x350] sm:$0xff]
        %v591 = vld [vmem:[%s467 + $0x358] sm:$0xff]
        %v592 = vld [vmem:[%s467 + $0x360] sm:$0xff]
        %v593 = vld [vmem:[%s467 + $0x368] sm:$0xff]
        %v594 = vld [vmem:[%s467 + $0x370] sm:$0xff]
        %v595 = vld [vmem:[%s467 + $0x378] sm:$0xff]
        %v596 = vld [vmem:[%s467 + $0x380] sm:$0xff]
        %v597 = vld [vmem:[%s467 + $0x388] sm:$0xff]
        %v598 = vld [vmem:[%s467 + $0x390] sm:$0xff]
        %v599 = vld [vmem:[%s467 + $0x398] sm:$0xff]
        %v600 = vld [vmem:[%s467 + $0x3a0] sm:$0xff]
        %v601 = vld [vmem:[%s467 + $0x3a8] sm:$0xff]
        %v602 = vld [vmem:[%s467 + $0x3b0] sm:$0xff]
        %v603 = vld [vmem:[%s467 + $0x3b8] sm:$0xff]
        %v604 = vld [vmem:[%s467 + $0x3c0] sm:$0xff]
        %v605 = vld [vmem:[%s467 + $0x3c8] sm:$0xff]
        %v606 = vld [vmem:[%s467 + $0x3d0] sm:$0xff]
        %v607 = vld [vmem:[%s467 + $0x3d8] sm:$0xff]
        %v608 = vld [vmem:[%s467 + $0x3e0] sm:$0xff]
        %v609 = vld [vmem:[%s467 + $0x3e8] sm:$0xff]
        %v610 = vld [vmem:[%s467 + $0x3f0] sm:$0xff]
        %v611 = vld [vmem:[%s467 + $0x3f8] sm:$0xff]
        %v612 = vld [vmem:[%s467 + $0x400] sm:$0xff]
        %v613 = vld [vmem:[%s467 + $0x408] sm:$0xff]
        %v614 = vld [vmem:[%s467 + $0x410] sm:$0xff]
        %v615 = vld [vmem:[%s467 + $0x418] sm:$0xff]
        %v616 = vld [vmem:[%s467 + $0x420] sm:$0xff]
        %v617 = vld [vmem:[%s467 + $0x428] sm:$0xff]
        %v618 = vld [vmem:[%s467 + $0x430] sm:$0xff]
        %v619 = vld [vmem:[%s467 + $0x438] sm:$0xff]
        %v620 = vld [vmem:[%s467 + $0x440] sm:$0xff]
        %v621 = vld [vmem:[%s467 + $0x448] sm:$0xff]
        %v622 = vld [vmem:[%s467 + $0x450] sm:$0xff]
        %v623 = vld [vmem:[%s467 + $0x458] sm:$0xff]
        %v624 = vld [vmem:[%s467 + $0x460] sm:$0xff]
        %v625 = vld [vmem:[%s467 + $0x468] sm:$0xff]
        %v626 = vld [vmem:[%s467 + $0x470] sm:$0xff]
        %v627 = vld [vmem:[%s467 + $0x478] sm:$0xff]
        %v628 = vld [vmem:[%s467 + $0x480] sm:$0xff]
        %v629 = vld [vmem:[%s467 + $0x488] sm:$0xff]
        %v630 = vld [vmem:[%s467 + $0x490] sm:$0xff]
        %v631 = vld [vmem:[%s467 + $0x498] sm:$0xff]
        %v632 = vld [vmem:[%s467 + $0x4a0] sm:$0xff]
        %v633 = vld [vmem:[%s467 + $0x4a8] sm:$0xff]
        %v634 = vld [vmem:[%s467 + $0x4b0] sm:$0xff]
        %v635 = vld [vmem:[%s467 + $0x4b8] sm:$0xff]
        %v636 = vld [vmem:[%s467 + $0x4c0] sm:$0xff]
        %v637 = vld [vmem:[%s467 + $0x4c8] sm:$0xff]
        %v638 = vld [vmem:[%s467 + $0x4d0] sm:$0xff]
        %v639 = vld [vmem:[%s467 + $0x4d8] sm:$0xff]
        %v640 = vld [vmem:[%s467 + $0x4e0] sm:$0xff]
        %v641 = vld [vmem:[%s467 + $0x4e8] sm:$0xff]
        %v642 = vld [vmem:[%s467 + $0x4f0] sm:$0xff]
        %v643 = vld [vmem:[%s467 + $0x4f8] sm:$0xff]
        %v644 = vld [vmem:[%s467 + $0x500] sm:$0xff]
        %v645 = vld [vmem:[%s467 + $0x508] sm:$0xff]
        %v646 = vld [vmem:[%s467 + $0x510] sm:$0xff]
        %v647 = vld [vmem:[%s467 + $0x518] sm:$0xff]
        %v648 = vld [vmem:[%s467 + $0x520] sm:$0xff]
        %v649 = vld [vmem:[%s467 + $0x528] sm:$0xff]
        %v650 = vld [vmem:[%s467 + $0x530] sm:$0xff]
        %v651 = vld [vmem:[%s467 + $0x538] sm:$0xff]
        %v652 = vld [vmem:[%s467 + $0x540] sm:$0xff]
        %v653 = vld [vmem:[%s467 + $0x548] sm:$0xff]
        %v654 = vld [vmem:[%s467 + $0x550] sm:$0xff]
        %v655 = vld [vmem:[%s467 + $0x558] sm:$0xff]
        %v656 = vld [vmem:[%s467 + $0x560] sm:$0xff]
        %v657 = vld [vmem:[%s467 + $0x568] sm:$0xff]
        %v658 = vld [vmem:[%s467 + $0x570] sm:$0xff]
        %v659 = vld [vmem:[%s467 + $0x578] sm:$0xff]
        %v660 = vld [vmem:[%s467 + $0x580] sm:$0xff]
        %v661 = vld [vmem:[%s467 + $0x588] sm:$0xff]
        %v662 = vld [vmem:[%s467 + $0x590] sm:$0xff]
        %v663 = vld [vmem:[%s467 + $0x598] sm:$0xff]
        %v664 = vld [vmem:[%s467 + $0x5a0] sm:$0xff]
        %v665 = vld [vmem:[%s467 + $0x5a8] sm:$0xff]
        %v666 = vld [vmem:[%s467 + $0x5b0] sm:$0xff]
        %v667 = vld [vmem:[%s467 + $0x5b8] sm:$0xff]
        %v668 = vld [vmem:[%s467 + $0x5c0] sm:$0xff]
        %v669 = vld [vmem:[%s467 + $0x5c8] sm:$0xff]
        %v670 = vld [vmem:[%s467 + $0x5d0] sm:$0xff]
        %v671 = vld [vmem:[%s467 + $0x5d8] sm:$0xff]
        %v672 = vld [vmem:[%s467 + $0x5e0] sm:$0xff]
        %v673 = vld [vmem:[%s467 + $0x5e8] sm:$0xff]
        %v674 = vld [vmem:[%s467 + $0x5f0] sm:$0xff]
        %v675 = vld [vmem:[%s467 + $0x5f8] sm:$0xff]
        %v676 = vld [vmem:[%s467 + $0x600] sm:$0xff]
        %v677 = vld [vmem:[%s467 + $0x608] sm:$0xff]
        %v678 = vld [vmem:[%s467 + $0x610] sm:$0xff]
        %v679 = vld [vmem:[%s467 + $0x618] sm:$0xff]
        %v680 = vld [vmem:[%s467 + $0x620] sm:$0xff]
        %v681 = vld [vmem:[%s467 + $0x628] sm:$0xff]
        %v682 = vld [vmem:[%s467 + $0x630] sm:$0xff]
        %v683 = vld [vmem:[%s467 + $0x638] sm:$0xff]
        %v684 = vld [vmem:[%s467 + $0x640] sm:$0xff]
        %v685 = vld [vmem:[%s467 + $0x648] sm:$0xff]
        %v686 = vld [vmem:[%s467 + $0x650] sm:$0xff]
        %v687 = vld [vmem:[%s467 + $0x658] sm:$0xff]
        %v688 = vld [vmem:[%s467 + $0x660] sm:$0xff]
        %v689 = vld [vmem:[%s467 + $0x668] sm:$0xff]
        %v690 = vld [vmem:[%s467 + $0x670] sm:$0xff]
        %v691 = vld [vmem:[%s467 + $0x678] sm:$0xff]
        %v692 = vpack.c.bf16 %v497, %v484
        %v693 = vpack.c.bf16 %v498, %v485
        %v694 = vpack.c.bf16 %v499, %v486
        %v695 = vpack.c.bf16 %v500, %v487
        %v696 = vpack.c.bf16 %v501, %v488
        %v697 = vpack.c.bf16 %v502, %v489
        %v698 = vpack.c.bf16 %v503, %v490
        %v699 = vpack.c.bf16 %v504, %v491
        %v700 = vpack.c.bf16 %v505, %v492
        %v701 = vpack.c.bf16 %v506, %v493
        %v702 = vpack.c.bf16 %v507, %v494
        %v703 = vpack.c.bf16 %v508, %v495
        %v704 = vpack.c.bf16 %v509, %v496
        %v705 = vpack.c.bf16 %v523, %v510
        %v706 = vpack.c.bf16 %v524, %v511
        %v707 = vpack.c.bf16 %v525, %v512
        %v708 = vpack.c.bf16 %v526, %v513
        %v709 = vpack.c.bf16 %v527, %v514
        %v710 = vpack.c.bf16 %v528, %v515
        %v711 = vpack.c.bf16 %v529, %v516
        %v712 = vpack.c.bf16 %v530, %v517
        %v713 = vpack.c.bf16 %v531, %v518
        %v714 = vpack.c.bf16 %v532, %v519
        %v715 = vpack.c.bf16 %v533, %v520
        %v716 = vpack.c.bf16 %v534, %v521
        %v717 = vpack.c.bf16 %v535, %v522
        %v718 = vpack.c.bf16 %v549, %v536
        %v719 = vpack.c.bf16 %v550, %v537
        %v720 = vpack.c.bf16 %v551, %v538
        %v721 = vpack.c.bf16 %v552, %v539
        %v722 = vpack.c.bf16 %v553, %v540
        %v723 = vpack.c.bf16 %v554, %v541
        %v724 = vpack.c.bf16 %v555, %v542
        %v725 = vpack.c.bf16 %v556, %v543
        %v726 = vpack.c.bf16 %v557, %v544
        %v727 = vpack.c.bf16 %v558, %v545
        %v728 = vpack.c.bf16 %v559, %v546
        %v729 = vpack.c.bf16 %v560, %v547
        %v730 = vpack.c.bf16 %v561, %v548
        %v731 = vpack.c.bf16 %v575, %v562
        %v732 = vpack.c.bf16 %v576, %v563
        %v733 = vpack.c.bf16 %v577, %v564
        %v734 = vpack.c.bf16 %v578, %v565
        %v735 = vpack.c.bf16 %v579, %v566
        %v736 = vpack.c.bf16 %v580, %v567
        %v737 = vpack.c.bf16 %v581, %v568
        %v738 = vpack.c.bf16 %v582, %v569
        %v739 = vpack.c.bf16 %v583, %v570
        %v740 = vpack.c.bf16 %v584, %v571
        %v741 = vpack.c.bf16 %v585, %v572
        %v742 = vpack.c.bf16 %v586, %v573
        %v743 = vpack.c.bf16 %v587, %v574
        %v744 = vpack.c.bf16 %v601, %v588
        %v745 = vpack.c.bf16 %v602, %v589
        %v746 = vpack.c.bf16 %v603, %v590
        %v747 = vpack.c.bf16 %v604, %v591
        %v748 = vpack.c.bf16 %v605, %v592
        %v749 = vpack.c.bf16 %v606, %v593
        %v750 = vpack.c.bf16 %v607, %v594
        %v751 = vpack.c.bf16 %v608, %v595
        %v752 = vpack.c.bf16 %v609, %v596
        %v753 = vpack.c.bf16 %v610, %v597
        %v754 = vpack.c.bf16 %v611, %v598
        %v755 = vpack.c.bf16 %v612, %v599
        %v756 = vpack.c.bf16 %v613, %v600
        %v757 = vpack.c.bf16 %v627, %v614
        %v758 = vpack.c.bf16 %v628, %v615
        %v759 = vpack.c.bf16 %v629, %v616
        %v760 = vpack.c.bf16 %v630, %v617
        %v761 = vpack.c.bf16 %v631, %v618
        %v762 = vpack.c.bf16 %v632, %v619
        %v763 = vpack.c.bf16 %v633, %v620
        %v764 = vpack.c.bf16 %v634, %v621
        %v765 = vpack.c.bf16 %v635, %v622
        %v766 = vpack.c.bf16 %v636, %v623
        %v767 = vpack.c.bf16 %v637, %v624
        %v768 = vpack.c.bf16 %v638, %v625
        %v769 = vpack.c.bf16 %v639, %v626
        %v770 = vpack.c.bf16 %v653, %v640
        %v771 = vpack.c.bf16 %v654, %v641
        %v772 = vpack.c.bf16 %v655, %v642
        %v773 = vpack.c.bf16 %v656, %v643
        %v774 = vpack.c.bf16 %v657, %v644
        %v775 = vpack.c.bf16 %v658, %v645
        %v776 = vpack.c.bf16 %v659, %v646
        %v777 = vpack.c.bf16 %v660, %v647
        %v778 = vpack.c.bf16 %v661, %v648
        %v779 = vpack.c.bf16 %v662, %v649
        %v780 = vpack.c.bf16 %v663, %v650
        %v781 = vpack.c.bf16 %v664, %v651
        %v782 = vpack.c.bf16 %v665, %v652
        %v783 = vpack.c.bf16 %v679, %v666
        %v784 = vpack.c.bf16 %v680, %v667
        %v785 = vpack.c.bf16 %v681, %v668
        %v786 = vpack.c.bf16 %v682, %v669
        %v787 = vpack.c.bf16 %v683, %v670
        %v788 = vpack.c.bf16 %v684, %v671
        %v789 = vpack.c.bf16 %v685, %v672
        %v790 = vpack.c.bf16 %v686, %v673
        %v791 = vpack.c.bf16 %v687, %v674
        %v792 = vpack.c.bf16 %v688, %v675
        %v793 = vpack.c.bf16 %v689, %v676
        %v794 = vpack.c.bf16 %v690, %v677
        %v795 = vpack.c.bf16 %v691, %v678
        %v796 = vld [vmem:[%s1] sm:$0xf]
        %v797 = vld [vmem:[%s1 + $0x4] sm:$0xf]
        %v798 = vld [vmem:[%s1 + $0x8] sm:$0xf]
        %v799 = vld [vmem:[%s1 + $0xc] sm:$0xf]
        %v800 = vld [vmem:[%s1 + $0x10] sm:$0xf]
        %v801 = vld [vmem:[%s1 + $0x14] sm:$0xf]
        %v802 = vld [vmem:[%s1 + $0x18] sm:$0xf]
        %v803 = vld [vmem:[%s1 + $0x1c] sm:$0xf]
        %v804 = vld [vmem:[%s1 + $0x20] sm:$0xf]
        %v805 = vld [vmem:[%s1 + $0x24] sm:$0xf]
        %v806 = vld [vmem:[%s1 + $0x28] sm:$0xf]
        %v807 = vld [vmem:[%s1 + $0x2c] sm:$0xf]
        %v808 = vld [vmem:[%s1 + $0x30] sm:$0xf]
        %v809 = vld [vmem:[%s1 + $0x34] sm:$0xf]
        %v810 = vld [vmem:[%s1 + $0x38] sm:$0xf]
        %v811 = vld [vmem:[%s1 + $0x3c] sm:$0xf]
        %v812 = vld [vmem:[%s1 + $0x40] sm:$0xf]
        %v813 = vld [vmem:[%s1 + $0x44] sm:$0xf]
        %v814 = vld [vmem:[%s1 + $0x48] sm:$0xf]
        %v815 = vld [vmem:[%s1 + $0x4c] sm:$0xf]
        %v816 = vld [vmem:[%s1 + $0x50] sm:$0xf]
        %v817 = vld [vmem:[%s1 + $0x54] sm:$0xf]
        %v818 = vld [vmem:[%s1 + $0x58] sm:$0xf]
        %v819 = vld [vmem:[%s1 + $0x5c] sm:$0xf]
        %v820 = vld [vmem:[%s1 + $0x60] sm:$0xf]
        %v821 = vld [vmem:[%s1 + $0x64] sm:$0xf]
        %v822 = vld [vmem:[%s1 + $0x68] sm:$0xf]
        %v823 = vld [vmem:[%s1 + $0x6c] sm:$0xf]
        %v824 = vld [vmem:[%s1 + $0x70] sm:$0xf]
        %v825 = vld [vmem:[%s1 + $0x74] sm:$0xf]
        %v826 = vld [vmem:[%s1 + $0x78] sm:$0xf]
        %v827 = vld [vmem:[%s1 + $0x7c] sm:$0xf]
        %v828 = vld [vmem:[%s1 + $0x80] sm:$0xf]
        %v829 = vld [vmem:[%s1 + $0x84] sm:$0xf]
        %v830 = vld [vmem:[%s1 + $0x88] sm:$0xf]
        %v831 = vld [vmem:[%s1 + $0x8c] sm:$0xf]
        %v832 = vld [vmem:[%s1 + $0x90] sm:$0xf]
        %v833 = vld [vmem:[%s1 + $0x94] sm:$0xf]
        %v834 = vld [vmem:[%s1 + $0x98] sm:$0xf]
        %v835 = vld [vmem:[%s1 + $0x9c] sm:$0xf]
        %v836 = vld [vmem:[%s1 + $0xa0] sm:$0xf]
        %v837 = vld [vmem:[%s1 + $0xa4] sm:$0xf]
        %v838 = vld [vmem:[%s1 + $0xa8] sm:$0xf]
        %v839 = vld [vmem:[%s1 + $0xac] sm:$0xf]
        %v840 = vld [vmem:[%s1 + $0xb0] sm:$0xf]
        %v841 = vld [vmem:[%s1 + $0xb4] sm:$0xf]
        %v842 = vld [vmem:[%s1 + $0xb8] sm:$0xf]
        %v843 = vld [vmem:[%s1 + $0xbc] sm:$0xf]
        %v844 = vld [vmem:[%s1 + $0xc0] sm:$0xf]
        %v845 = vld [vmem:[%s1 + $0xc4] sm:$0xf]
        %v846 = vld [vmem:[%s1 + $0xc8] sm:$0xf]
        %v847 = vld [vmem:[%s1 + $0xcc] sm:$0xf]
        %v848 = vld [vmem:[%s1 + $0xd0] sm:$0xf]
        %v849 = vld [vmem:[%s1 + $0xd4] sm:$0xf]
        %v850 = vld [vmem:[%s1 + $0xd8] sm:$0xf]
        %v851 = vld [vmem:[%s1 + $0xdc] sm:$0xf]
        %v852 = vld [vmem:[%s1 + $0xe0] sm:$0xf]
        %v853 = vld [vmem:[%s1 + $0xe4] sm:$0xf]
        %v854 = vld [vmem:[%s1 + $0xe8] sm:$0xf]
        %v855 = vld [vmem:[%s1 + $0xec] sm:$0xf]
        %v856 = vld [vmem:[%s1 + $0xf0] sm:$0xf]
        %v857 = vld [vmem:[%s1 + $0xf4] sm:$0xf]
        %v858 = vld [vmem:[%s1 + $0xf8] sm:$0xf]
        %v859 = vld [vmem:[%s1 + $0xfc] sm:$0xf]
        %v860 = vld [vmem:[%s1 + $0x100] sm:$0xf]
        %v861 = vld [vmem:[%s1 + $0x104] sm:$0xf]
        %v862 = vld [vmem:[%s1 + $0x108] sm:$0xf]
        %v863 = vld [vmem:[%s1 + $0x10c] sm:$0xf]
        %v864 = vld [vmem:[%s1 + $0x110] sm:$0xf]
        %v865 = vld [vmem:[%s1 + $0x114] sm:$0xf]
        %v866 = vld [vmem:[%s1 + $0x118] sm:$0xf]
        %v867 = vld [vmem:[%s1 + $0x11c] sm:$0xf]
        %v868 = vld [vmem:[%s1 + $0x120] sm:$0xf]
        %v869 = vld [vmem:[%s1 + $0x124] sm:$0xf]
        %v870 = vld [vmem:[%s1 + $0x128] sm:$0xf]
        %v871 = vld [vmem:[%s1 + $0x12c] sm:$0xf]
        %v872 = vld [vmem:[%s1 + $0x130] sm:$0xf]
        %v873 = vld [vmem:[%s1 + $0x134] sm:$0xf]
        %v874 = vld [vmem:[%s1 + $0x138] sm:$0xf]
        %v875 = vld [vmem:[%s1 + $0x13c] sm:$0xf]
        %v876 = vld [vmem:[%s1 + $0x140] sm:$0xf]
        %v877 = vld [vmem:[%s1 + $0x144] sm:$0xf]
        %v878 = vld [vmem:[%s1 + $0x148] sm:$0xf]
        %v879 = vld [vmem:[%s1 + $0x14c] sm:$0xf]
        %v880 = vld [vmem:[%s1 + $0x150] sm:$0xf]
        %v881 = vld [vmem:[%s1 + $0x154] sm:$0xf]
        %v882 = vld [vmem:[%s1 + $0x158] sm:$0xf]
        %v883 = vld [vmem:[%s1 + $0x15c] sm:$0xf]
        %v884 = vld [vmem:[%s1 + $0x160] sm:$0xf]
        %v885 = vld [vmem:[%s1 + $0x164] sm:$0xf]
        %v886 = vld [vmem:[%s1 + $0x168] sm:$0xf]
        %v887 = vld [vmem:[%s1 + $0x16c] sm:$0xf]
        %v888 = vld [vmem:[%s1 + $0x170] sm:$0xf]
        %v889 = vld [vmem:[%s1 + $0x174] sm:$0xf]
        %v890 = vld [vmem:[%s1 + $0x178] sm:$0xf]
        %v891 = vld [vmem:[%s1 + $0x17c] sm:$0xf]
        %v892 = vld [vmem:[%s1 + $0x180] sm:$0xf]
        %v893 = vld [vmem:[%s1 + $0x184] sm:$0xf]
        %v894 = vld [vmem:[%s1 + $0x188] sm:$0xf]
        %v895 = vld [vmem:[%s1 + $0x18c] sm:$0xf]
        %v896 = vld [vmem:[%s1 + $0x190] sm:$0xf]
        %v897 = vld [vmem:[%s1 + $0x194] sm:$0xf]
        %v898 = vld [vmem:[%s1 + $0x198] sm:$0xf]
        %v899 = vld [vmem:[%s1 + $0x19c] sm:$0xf]
        %v900 = vld [vmem:[%s1 + $0x1a0] sm:$0xf]
        %v901 = vld [vmem:[%s1 + $0x1a4] sm:$0xf]
        %v902 = vld [vmem:[%s1 + $0x1a8] sm:$0xf]
        %v903 = vld [vmem:[%s1 + $0x1ac] sm:$0xf]
        %v904 = vld [vmem:[%s1 + $0x1b0] sm:$0xf]
        %v905 = vld [vmem:[%s1 + $0x1b4] sm:$0xf]
        %v906 = vld [vmem:[%s1 + $0x1b8] sm:$0xf]
        %v907 = vld [vmem:[%s1 + $0x1bc] sm:$0xf]
        %v908 = vld [vmem:[%s1 + $0x1c0] sm:$0xf]
        %v909 = vld [vmem:[%s1 + $0x1c4] sm:$0xf]
        %v910 = vld [vmem:[%s1 + $0x1c8] sm:$0xf]
        %v911 = vld [vmem:[%s1 + $0x1cc] sm:$0xf]
        %v912 = vld [vmem:[%s1 + $0x1d0] sm:$0xf]
        %v913 = vld [vmem:[%s1 + $0x1d4] sm:$0xf]
        %v914 = vld [vmem:[%s1 + $0x1d8] sm:$0xf]
        %v915 = vld [vmem:[%s1 + $0x1dc] sm:$0xf]
        %v916 = vld [vmem:[%s1 + $0x1e0] sm:$0xf]
        %v917 = vld [vmem:[%s1 + $0x1e4] sm:$0xf]
        %v918 = vld [vmem:[%s1 + $0x1e8] sm:$0xf]
        %v919 = vld [vmem:[%s1 + $0x1ec] sm:$0xf]
        %v920 = vld [vmem:[%s1 + $0x1f0] sm:$0xf]
        %v921 = vld [vmem:[%s1 + $0x1f4] sm:$0xf]
        %v922 = vld [vmem:[%s1 + $0x1f8] sm:$0xf]
        %v923 = vld [vmem:[%s1 + $0x1fc] sm:$0xf]
        %v924 = vld [vmem:[%s1 + $0x200] sm:$0xf]
        %v925 = vld [vmem:[%s1 + $0x204] sm:$0xf]
        %v926 = vld [vmem:[%s1 + $0x208] sm:$0xf]
        %v927 = vld [vmem:[%s1 + $0x20c] sm:$0xf]
        %v928 = vld [vmem:[%s1 + $0x210] sm:$0xf]
        %v929 = vld [vmem:[%s1 + $0x214] sm:$0xf]
        %v930 = vld [vmem:[%s1 + $0x218] sm:$0xf]
        %v931 = vld [vmem:[%s1 + $0x21c] sm:$0xf]
        %v932 = vld [vmem:[%s1 + $0x220] sm:$0xf]
        %v933 = vld [vmem:[%s1 + $0x224] sm:$0xf]
        %v934 = vld [vmem:[%s1 + $0x228] sm:$0xf]
        %v935 = vld [vmem:[%s1 + $0x22c] sm:$0xf]
        %v936 = vld [vmem:[%s1 + $0x230] sm:$0xf]
        %v937 = vld [vmem:[%s1 + $0x234] sm:$0xf]
        %v938 = vld [vmem:[%s1 + $0x238] sm:$0xf]
        %v939 = vld [vmem:[%s1 + $0x23c] sm:$0xf]
        %v940 = vld [vmem:[%s1 + $0x240] sm:$0xf]
        %v941 = vld [vmem:[%s1 + $0x244] sm:$0xf]
        %v942 = vld [vmem:[%s1 + $0x248] sm:$0xf]
        %v943 = vld [vmem:[%s1 + $0x24c] sm:$0xf]
        %v944 = vld [vmem:[%s1 + $0x250] sm:$0xf]
        %v945 = vld [vmem:[%s1 + $0x254] sm:$0xf]
        %v946 = vld [vmem:[%s1 + $0x258] sm:$0xf]
        %v947 = vld [vmem:[%s1 + $0x25c] sm:$0xf]
        %v948 = vld [vmem:[%s1 + $0x260] sm:$0xf]
        %v949 = vld [vmem:[%s1 + $0x264] sm:$0xf]
        %v950 = vld [vmem:[%s1 + $0x268] sm:$0xf]
        %v951 = vld [vmem:[%s1 + $0x26c] sm:$0xf]
        %v952 = vld [vmem:[%s1 + $0x270] sm:$0xf]
        %v953 = vld [vmem:[%s1 + $0x274] sm:$0xf]
        %v954 = vld [vmem:[%s1 + $0x278] sm:$0xf]
        %v955 = vld [vmem:[%s1 + $0x27c] sm:$0xf]
        %v956 = vld [vmem:[%s1 + $0x280] sm:$0xf]
        %v957 = vld [vmem:[%s1 + $0x284] sm:$0xf]
        %v958 = vld [vmem:[%s1 + $0x288] sm:$0xf]
        %v959 = vld [vmem:[%s1 + $0x28c] sm:$0xf]
        %v960 = vld [vmem:[%s1 + $0x290] sm:$0xf]
        %v961 = vld [vmem:[%s1 + $0x294] sm:$0xf]
        %v962 = vld [vmem:[%s1 + $0x298] sm:$0xf]
        %v963 = vld [vmem:[%s1 + $0x29c] sm:$0xf]
        %v964 = vld [vmem:[%s1 + $0x2a0] sm:$0xf]
        %v965 = vld [vmem:[%s1 + $0x2a4] sm:$0xf]
        %v966 = vld [vmem:[%s1 + $0x2a8] sm:$0xf]
        %v967 = vld [vmem:[%s1 + $0x2ac] sm:$0xf]
        %v968 = vld [vmem:[%s1 + $0x2b0] sm:$0xf]
        %v969 = vld [vmem:[%s1 + $0x2b4] sm:$0xf]
        %v970 = vld [vmem:[%s1 + $0x2b8] sm:$0xf]
        %v971 = vld [vmem:[%s1 + $0x2bc] sm:$0xf]
        %v972 = vld [vmem:[%s1 + $0x2c0] sm:$0xf]
        %v973 = vld [vmem:[%s1 + $0x2c4] sm:$0xf]
        %v974 = vld [vmem:[%s1 + $0x2c8] sm:$0xf]
        %v975 = vld [vmem:[%s1 + $0x2cc] sm:$0xf]
        %v976 = vld [vmem:[%s1 + $0x2d0] sm:$0xf]
        %v977 = vld [vmem:[%s1 + $0x2d4] sm:$0xf]
        %v978 = vld [vmem:[%s1 + $0x2d8] sm:$0xf]
        %v979 = vld [vmem:[%s1 + $0x2dc] sm:$0xf]
        %v980 = vld [vmem:[%s1 + $0x2e0] sm:$0xf]
        %v981 = vld [vmem:[%s1 + $0x2e4] sm:$0xf]
        %v982 = vld [vmem:[%s1 + $0x2e8] sm:$0xf]
        %v983 = vld [vmem:[%s1 + $0x2ec] sm:$0xf]
        %v984 = vld [vmem:[%s1 + $0x2f0] sm:$0xf]
        %v985 = vld [vmem:[%s1 + $0x2f4] sm:$0xf]
        %v986 = vld [vmem:[%s1 + $0x2f8] sm:$0xf]
        %v987 = vld [vmem:[%s1 + $0x2fc] sm:$0xf]
        %v988 = vld [vmem:[%s1 + $0x300] sm:$0xf]
        %v989 = vld [vmem:[%s1 + $0x304] sm:$0xf]
        %v990 = vld [vmem:[%s1 + $0x308] sm:$0xf]
        %v991 = vld [vmem:[%s1 + $0x30c] sm:$0xf]
        %v992 = vld [vmem:[%s2] sm:$0x1]
        %v994 = vperm.slane %v992, 0
        %v1192 = vunpack.c.l.b16 %v796
        %v1193 = vunpack.c.l.b16 %v797
        %v1194 = vunpack.c.l.b16 %v798
        %v1195 = vunpack.c.l.b16 %v799
        %v1196 = vunpack.c.l.b16 %v800
        %v1197 = vunpack.c.l.b16 %v801
        %v1198 = vunpack.c.l.b16 %v802
        %v1199 = vunpack.c.l.b16 %v803
        %v1200 = vunpack.c.l.b16 %v804
        %v1201 = vunpack.c.l.b16 %v805
        %v1202 = vunpack.c.l.b16 %v806
        %v1203 = vunpack.c.l.b16 %v807
        %v1204 = vunpack.c.l.b16 %v808
        %v1205 = vunpack.c.l.b16 %v809
        %v1206 = vunpack.c.l.b16 %v810
        %v1207 = vunpack.c.l.b16 %v811
        %v1208 = vunpack.c.l.b16 %v812
        %v1209 = vunpack.c.l.b16 %v813
        %v1210 = vunpack.c.l.b16 %v814
        %v1211 = vunpack.c.l.b16 %v815
        %v1212 = vunpack.c.l.b16 %v816
        %v1213 = vunpack.c.l.b16 %v817
        %v1214 = vunpack.c.l.b16 %v818
        %v1215 = vunpack.c.l.b16 %v819
        %v1216 = vunpack.c.l.b16 %v820
        %v1217 = vunpack.c.l.b16 %v821
        %v1218 = vunpack.c.l.b16 %v822
        %v1219 = vunpack.c.l.b16 %v823
        %v1220 = vunpack.c.l.b16 %v824
        %v1221 = vunpack.c.l.b16 %v825
        %v1222 = vunpack.c.l.b16 %v826
        %v1223 = vunpack.c.l.b16 %v827
        %v1224 = vunpack.c.l.b16 %v828
        %v1225 = vunpack.c.l.b16 %v829
        %v1226 = vunpack.c.l.b16 %v830
        %v1227 = vunpack.c.l.b16 %v831
        %v1228 = vunpack.c.l.b16 %v832
        %v1229 = vunpack.c.l.b16 %v833
        %v1230 = vunpack.c.l.b16 %v834
        %v1231 = vunpack.c.l.b16 %v835
        %v1232 = vunpack.c.l.b16 %v836
        %v1233 = vunpack.c.l.b16 %v837
        %v1234 = vunpack.c.l.b16 %v838
        %v1235 = vunpack.c.l.b16 %v839
        %v1236 = vunpack.c.l.b16 %v840
        %v1237 = vunpack.c.l.b16 %v841
        %v1238 = vunpack.c.l.b16 %v842
        %v1239 = vunpack.c.l.b16 %v843
        %v1240 = vunpack.c.l.b16 %v844
        %v1241 = vunpack.c.l.b16 %v845
        %v1242 = vunpack.c.l.b16 %v846
        %v1243 = vunpack.c.l.b16 %v847
        %v1244 = vunpack.c.l.b16 %v848
        %v1245 = vunpack.c.l.b16 %v849
        %v1246 = vunpack.c.l.b16 %v850
        %v1247 = vunpack.c.l.b16 %v851
        %v1248 = vunpack.c.l.b16 %v852
        %v1249 = vunpack.c.l.b16 %v853
        %v1250 = vunpack.c.l.b16 %v854
        %v1251 = vunpack.c.l.b16 %v855
        %v1252 = vunpack.c.l.b16 %v856
        %v1253 = vunpack.c.l.b16 %v857
        %v1254 = vunpack.c.l.b16 %v858
        %v1255 = vunpack.c.l.b16 %v859
        %v1256 = vunpack.c.l.b16 %v860
        %v1257 = vunpack.c.l.b16 %v861
        %v1258 = vunpack.c.l.b16 %v862
        %v1259 = vunpack.c.l.b16 %v863
        %v1260 = vunpack.c.l.b16 %v864
        %v1261 = vunpack.c.l.b16 %v865
        %v1262 = vunpack.c.l.b16 %v866
        %v1263 = vunpack.c.l.b16 %v867
        %v1264 = vunpack.c.l.b16 %v868
        %v1265 = vunpack.c.l.b16 %v869
        %v1266 = vunpack.c.l.b16 %v870
        %v1267 = vunpack.c.l.b16 %v871
        %v1268 = vunpack.c.l.b16 %v872
        %v1269 = vunpack.c.l.b16 %v873
        %v1270 = vunpack.c.l.b16 %v874
        %v1271 = vunpack.c.l.b16 %v875
        %v1272 = vunpack.c.l.b16 %v876
        %v1273 = vunpack.c.l.b16 %v877
        %v1274 = vunpack.c.l.b16 %v878
        %v1275 = vunpack.c.l.b16 %v879
        %v1276 = vunpack.c.l.b16 %v880
        %v1277 = vunpack.c.l.b16 %v881
        %v1278 = vunpack.c.l.b16 %v882
        %v1279 = vunpack.c.l.b16 %v883
        %v1280 = vunpack.c.l.b16 %v884
        %v1281 = vunpack.c.l.b16 %v885
        %v1282 = vunpack.c.l.b16 %v886
        %v1283 = vunpack.c.l.b16 %v887
        %v1284 = vunpack.c.l.b16 %v888
        %v1285 = vunpack.c.l.b16 %v889
        %v1286 = vunpack.c.l.b16 %v890
        %v1287 = vunpack.c.l.b16 %v891
        %v1288 = vunpack.c.l.b16 %v892
        %v1289 = vunpack.c.l.b16 %v893
        %v1290 = vunpack.c.l.b16 %v894
        %v1291 = vunpack.c.l.b16 %v895
        %v1292 = vunpack.c.l.b16 %v896
        %v1293 = vunpack.c.l.b16 %v897
        %v1294 = vunpack.c.l.b16 %v898
        %v1295 = vunpack.c.l.b16 %v899
        %v1296 = vunpack.c.l.b16 %v900
        %v1297 = vunpack.c.l.b16 %v901
        %v1298 = vunpack.c.l.b16 %v902
        %v1299 = vunpack.c.l.b16 %v903
        %v1300 = vunpack.c.l.b16 %v904
        %v1301 = vunpack.c.l.b16 %v905
        %v1302 = vunpack.c.l.b16 %v906
        %v1303 = vunpack.c.l.b16 %v907
        %v1304 = vunpack.c.l.b16 %v908
        %v1305 = vunpack.c.l.b16 %v909
        %v1306 = vunpack.c.l.b16 %v910
        %v1307 = vunpack.c.l.b16 %v911
        %v1308 = vunpack.c.l.b16 %v912
        %v1309 = vunpack.c.l.b16 %v913
        %v1310 = vunpack.c.l.b16 %v914
        %v1311 = vunpack.c.l.b16 %v915
        %v1312 = vunpack.c.l.b16 %v916
        %v1313 = vunpack.c.l.b16 %v917
        %v1314 = vunpack.c.l.b16 %v918
        %v1315 = vunpack.c.l.b16 %v919
        %v1316 = vunpack.c.l.b16 %v920
        %v1317 = vunpack.c.l.b16 %v921
        %v1318 = vunpack.c.l.b16 %v922
        %v1319 = vunpack.c.l.b16 %v923
        %v1320 = vunpack.c.l.b16 %v924
        %v1321 = vunpack.c.l.b16 %v925
        %v1322 = vunpack.c.l.b16 %v926
        %v1323 = vunpack.c.l.b16 %v927
        %v1324 = vunpack.c.l.b16 %v928
        %v1325 = vunpack.c.l.b16 %v929
        %v1326 = vunpack.c.l.b16 %v930
        %v1327 = vunpack.c.l.b16 %v931
        %v1328 = vunpack.c.l.b16 %v932
        %v1329 = vunpack.c.l.b16 %v933
        %v1330 = vunpack.c.l.b16 %v934
        %v1331 = vunpack.c.l.b16 %v935
        %v1332 = vunpack.c.l.b16 %v936
        %v1333 = vunpack.c.l.b16 %v937
        %v1334 = vunpack.c.l.b16 %v938
        %v1335 = vunpack.c.l.b16 %v939
        %v1336 = vunpack.c.l.b16 %v940
        %v1337 = vunpack.c.l.b16 %v941
        %v1338 = vunpack.c.l.b16 %v942
        %v1339 = vunpack.c.l.b16 %v943
        %v1340 = vunpack.c.l.b16 %v944
        %v1341 = vunpack.c.l.b16 %v945
        %v1342 = vunpack.c.l.b16 %v946
        %v1343 = vunpack.c.l.b16 %v947
        %v1344 = vunpack.c.l.b16 %v948
        %v1345 = vunpack.c.l.b16 %v949
        %v1346 = vunpack.c.l.b16 %v950
        %v1347 = vunpack.c.l.b16 %v951
        %v1348 = vunpack.c.l.b16 %v952
        %v1349 = vunpack.c.l.b16 %v953
        %v1350 = vunpack.c.l.b16 %v954
        %v1351 = vunpack.c.l.b16 %v955
        %v1352 = vunpack.c.l.b16 %v956
        %v1353 = vunpack.c.l.b16 %v957
        %v1354 = vunpack.c.l.b16 %v958
        %v1355 = vunpack.c.l.b16 %v959
        %v1356 = vunpack.c.l.b16 %v960
        %v1357 = vunpack.c.l.b16 %v961
        %v1358 = vunpack.c.l.b16 %v962
        %v1359 = vunpack.c.l.b16 %v963
        %v1360 = vunpack.c.l.b16 %v964
        %v1361 = vunpack.c.l.b16 %v965
        %v1362 = vunpack.c.l.b16 %v966
        %v1363 = vunpack.c.l.b16 %v967
        %v1364 = vunpack.c.l.b16 %v968
        %v1365 = vunpack.c.l.b16 %v969
        %v1366 = vunpack.c.l.b16 %v970
        %v1367 = vunpack.c.l.b16 %v971
        %v1368 = vunpack.c.l.b16 %v972
        %v1369 = vunpack.c.l.b16 %v973
        %v1370 = vunpack.c.l.b16 %v974
        %v1371 = vunpack.c.l.b16 %v975
        %v1372 = vunpack.c.l.b16 %v976
        %v1373 = vunpack.c.l.b16 %v977
        %v1374 = vunpack.c.l.b16 %v978
        %v1375 = vunpack.c.l.b16 %v979
        %v1376 = vunpack.c.l.b16 %v980
        %v1377 = vunpack.c.l.b16 %v981
        %v1378 = vunpack.c.l.b16 %v982
        %v1379 = vunpack.c.l.b16 %v983
        %v1380 = vunpack.c.l.b16 %v984
        %v1381 = vunpack.c.l.b16 %v985
        %v1382 = vunpack.c.l.b16 %v986
        %v1383 = vunpack.c.l.b16 %v987
        %v1384 = vunpack.c.l.b16 %v988
        %v1385 = vunpack.c.l.b16 %v989
        %v1386 = vunpack.c.l.b16 %v990
        %v1387 = vunpack.c.l.b16 %v991
        %v1388 = vpack.c.b16 %v1193, %v1192
        %v1389 = vpack.c.b16 %v1195, %v1194
        %v1390 = vpack.c.b16 %v1197, %v1196
        %v1391 = vpack.c.b16 %v1199, %v1198
        %v1392 = vpack.c.b16 %v1201, %v1200
        %v1393 = vpack.c.b16 %v1203, %v1202
        %v1394 = vpack.c.b16 %v1205, %v1204
        %v1395 = vpack.c.b16 %v1207, %v1206
        %v1396 = vpack.c.b16 %v1209, %v1208
        %v1397 = vpack.c.b16 %v1211, %v1210
        %v1398 = vpack.c.b16 %v1213, %v1212
        %v1399 = vpack.c.b16 %v1215, %v1214
        %v1400 = vpack.c.b16 %v1217, %v1216
        %v1401 = vpack.c.b16 %v1219, %v1218
        %v1402 = vpack.c.b16 %v1221, %v1220
        %v1403 = vpack.c.b16 %v1223, %v1222
        %v1404 = vpack.c.b16 %v1225, %v1224
        %v1405 = vpack.c.b16 %v1227, %v1226
        %v1406 = vpack.c.b16 %v1229, %v1228
        %v1407 = vpack.c.b16 %v1231, %v1230
        %v1408 = vpack.c.b16 %v1233, %v1232
        %v1409 = vpack.c.b16 %v1235, %v1234
        %v1410 = vpack.c.b16 %v1237, %v1236
        %v1411 = vpack.c.b16 %v1239, %v1238
        %v1412 = vpack.c.b16 %v1241, %v1240
        %v1413 = vpack.c.b16 %v1243, %v1242
        %v1414 = vpack.c.b16 %v1245, %v1244
        %v1415 = vpack.c.b16 %v1247, %v1246
        %v1416 = vpack.c.b16 %v1249, %v1248
        %v1417 = vpack.c.b16 %v1251, %v1250
        %v1418 = vpack.c.b16 %v1253, %v1252
        %v1419 = vpack.c.b16 %v1255, %v1254
        %v1420 = vpack.c.b16 %v1257, %v1256
        %v1421 = vpack.c.b16 %v1259, %v1258
        %v1422 = vpack.c.b16 %v1261, %v1260
        %v1423 = vpack.c.b16 %v1263, %v1262
        %v1424 = vpack.c.b16 %v1265, %v1264
        %v1425 = vpack.c.b16 %v1267, %v1266
        %v1426 = vpack.c.b16 %v1269, %v1268
        %v1427 = vpack.c.b16 %v1271, %v1270
        %v1428 = vpack.c.b16 %v1273, %v1272
        %v1429 = vpack.c.b16 %v1275, %v1274
        %v1430 = vpack.c.b16 %v1277, %v1276
        %v1431 = vpack.c.b16 %v1279, %v1278
        %v1432 = vpack.c.b16 %v1281, %v1280
        %v1433 = vpack.c.b16 %v1283, %v1282
        %v1434 = vpack.c.b16 %v1285, %v1284
        %v1435 = vpack.c.b16 %v1287, %v1286
        %v1436 = vpack.c.b16 %v1289, %v1288
        %v1437 = vpack.c.b16 %v1291, %v1290
        %v1438 = vpack.c.b16 %v1293, %v1292
        %v1439 = vpack.c.b16 %v1295, %v1294
        %v1440 = vpack.c.b16 %v1297, %v1296
        %v1441 = vpack.c.b16 %v1299, %v1298
        %v1442 = vpack.c.b16 %v1301, %v1300
        %v1443 = vpack.c.b16 %v1303, %v1302
        %v1444 = vpack.c.b16 %v1305, %v1304
        %v1445 = vpack.c.b16 %v1307, %v1306
        %v1446 = vpack.c.b16 %v1309, %v1308
        %v1447 = vpack.c.b16 %v1311, %v1310
        %v1448 = vpack.c.b16 %v1313, %v1312
        %v1449 = vpack.c.b16 %v1315, %v1314
        %v1450 = vpack.c.b16 %v1317, %v1316
        %v1451 = vpack.c.b16 %v1319, %v1318
        %v1452 = vpack.c.b16 %v1321, %v1320
        %v1453 = vpack.c.b16 %v1323, %v1322
        %v1454 = vpack.c.b16 %v1325, %v1324
        %v1455 = vpack.c.b16 %v1327, %v1326
        %v1456 = vpack.c.b16 %v1329, %v1328
        %v1457 = vpack.c.b16 %v1331, %v1330
        %v1458 = vpack.c.b16 %v1333, %v1332
        %v1459 = vpack.c.b16 %v1335, %v1334
        %v1460 = vpack.c.b16 %v1337, %v1336
        %v1461 = vpack.c.b16 %v1339, %v1338
        %v1462 = vpack.c.b16 %v1341, %v1340
        %v1463 = vpack.c.b16 %v1343, %v1342
        %v1464 = vpack.c.b16 %v1345, %v1344
        %v1465 = vpack.c.b16 %v1347, %v1346
        %v1466 = vpack.c.b16 %v1349, %v1348
        %v1467 = vpack.c.b16 %v1351, %v1350
        %v1468 = vpack.c.b16 %v1353, %v1352
        %v1469 = vpack.c.b16 %v1355, %v1354
        %v1470 = vpack.c.b16 %v1357, %v1356
        %v1471 = vpack.c.b16 %v1359, %v1358
        %v1472 = vpack.c.b16 %v1361, %v1360
        %v1473 = vpack.c.b16 %v1363, %v1362
        %v1474 = vpack.c.b16 %v1365, %v1364
        %v1475 = vpack.c.b16 %v1367, %v1366
        %v1476 = vpack.c.b16 %v1369, %v1368
        %v1477 = vpack.c.b16 %v1371, %v1370
        %v1478 = vpack.c.b16 %v1373, %v1372
        %v1479 = vpack.c.b16 %v1375, %v1374
        %v1480 = vpack.c.b16 %v1377, %v1376
        %v1481 = vpack.c.b16 %v1379, %v1378
        %v1482 = vpack.c.b16 %v1381, %v1380
        %v1483 = vpack.c.b16 %v1383, %v1382
        %v1484 = vpack.c.b16 %v1385, %v1384
        %v1485 = vpack.c.b16 %v1387, %v1386
        %vm1584 = vcmask 261120
        %v1586 = vsel %vm1584, %v704, 0
        %v1589 = vsel %vm1584, %v717, 0
        %v1592 = vsel %vm1584, %v730, 0
        %v1595 = vsel %vm1584, %v743, 0
        %v1598 = vsel %vm1584, %v756, 0
        %v1601 = vsel %vm1584, %v769, 0
        %v1604 = vsel %vm1584, %v782, 0
        %v1607 = vsel %vm1584, %v795, 0
        %1609 = vmatpush.bf16.msra.mxu0 %v1395
        %1610 = vmatpush.bf16.msra.mxu0 %v1394
        %1611 = vmatpush.bf16.msra.mxu0 %v1393
        %1612 = vmatpush.bf16.msra.mxu0 %v1392
        %1613 = vmatpush.bf16.msra.mxu0 %v1391
        %1614 = vmatpush.bf16.msra.mxu0 %v1390
        %1615 = vmatpush.bf16.msra.mxu0 %v1389
        %1616 = vmatpush.bf16.msra.mxu0 %v1388
        %1617 = vmatmul.bf16.gmra.mxu0 %v692
        %v1618 = vpop.f32.mrf.mxu0
        %v1619 = vadd.f32 %v994, %v1618
        %v1620 = vpop.f32.mrf.mxu0
        %v1621 = vadd.f32 %v994, %v1620
        %1622 = vmatmul.bf16.gmra.mxu0 %v705
        %v1623 = vpop.f32.mrf.mxu0
        %v1624 = vadd.f32 %v994, %v1623
        %v1625 = vpop.f32.mrf.mxu0
        %v1626 = vadd.f32 %v994, %v1625
        %1627 = vmatmul.bf16.gmra.mxu0 %v718
        %v1628 = vpop.f32.mrf.mxu0
        %v1629 = vadd.f32 %v994, %v1628
        %v1630 = vpop.f32.mrf.mxu0
        %v1631 = vadd.f32 %v994, %v1630
        %1632 = vmatmul.bf16.gmra.mxu0 %v731
        %v1633 = vpop.f32.mrf.mxu0
        %v1634 = vadd.f32 %v994, %v1633
        %v1635 = vpop.f32.mrf.mxu0
        %v1636 = vadd.f32 %v994, %v1635
        %1637 = vmatmul.bf16.gmra.mxu0 %v744
        %v1638 = vpop.f32.mrf.mxu0
        %v1639 = vadd.f32 %v994, %v1638
        %v1640 = vpop.f32.mrf.mxu0
        %v1641 = vadd.f32 %v994, %v1640
        %1642 = vmatmul.bf16.gmra.mxu0 %v757
        %v1643 = vpop.f32.mrf.mxu0
        %v1644 = vadd.f32 %v994, %v1643
        %v1645 = vpop.f32.mrf.mxu0
        %v1646 = vadd.f32 %v994, %v1645
        %1647 = vmatmul.bf16.gmra.mxu0 %v770
        %v1648 = vpop.f32.mrf.mxu0
        %v1649 = vadd.f32 %v994, %v1648
        %v1650 = vpop.f32.mrf.mxu0
        %v1651 = vadd.f32 %v994, %v1650
        %1652 = vmatmul.bf16.gmra.mxu0 %v783
        %v1653 = vpop.f32.mrf.mxu0
        %v1654 = vadd.f32 %v994, %v1653
        %v1655 = vpop.f32.mrf.mxu0
        %v1656 = vadd.f32 %v994, %v1655
        %1657 = vdwg.mxu0
        %1658 = vmatpush.bf16.msra.mxu0 %v1403
        %1659 = vmatpush.bf16.msra.mxu0 %v1402
        %1660 = vmatpush.bf16.msra.mxu0 %v1401
        %1661 = vmatpush.bf16.msra.mxu0 %v1400
        %1662 = vmatpush.bf16.msra.mxu0 %v1399
        %1663 = vmatpush.bf16.msra.mxu0 %v1398
        %1664 = vmatpush.bf16.msra.mxu0 %v1397
        %1665 = vmatpush.bf16.msra.mxu0 %v1396
        %1666 = vmatmul.bf16.gmra.mxu0 %v693
        %v1667 = vpop.f32.mrf.mxu0
        %v1668 = vadd.f32 %v1619, %v1667
        %v1669 = vpop.f32.mrf.mxu0
        %v1670 = vadd.f32 %v1621, %v1669
        %1671 = vmatmul.bf16.gmra.mxu0 %v706
        %v1672 = vpop.f32.mrf.mxu0
        %v1673 = vadd.f32 %v1624, %v1672
        %v1674 = vpop.f32.mrf.mxu0
        %v1675 = vadd.f32 %v1626, %v1674
        %1676 = vmatmul.bf16.gmra.mxu0 %v719
        %v1677 = vpop.f32.mrf.mxu0
        %v1678 = vadd.f32 %v1629, %v1677
        %v1679 = vpop.f32.mrf.mxu0
        %v1680 = vadd.f32 %v1631, %v1679
        %1681 = vmatmul.bf16.gmra.mxu0 %v732
        %v1682 = vpop.f32.mrf.mxu0
        %v1683 = vadd.f32 %v1634, %v1682
        %v1684 = vpop.f32.mrf.mxu0
        %v1685 = vadd.f32 %v1636, %v1684
        %1686 = vmatmul.bf16.gmra.mxu0 %v745
        %v1687 = vpop.f32.mrf.mxu0
        %v1688 = vadd.f32 %v1639, %v1687
        %v1689 = vpop.f32.mrf.mxu0
        %v1690 = vadd.f32 %v1641, %v1689
        %1691 = vmatmul.bf16.gmra.mxu0 %v758
        %v1692 = vpop.f32.mrf.mxu0
        %v1693 = vadd.f32 %v1644, %v1692
        %v1694 = vpop.f32.mrf.mxu0
        %v1695 = vadd.f32 %v1646, %v1694
        %1696 = vmatmul.bf16.gmra.mxu0 %v771
        %v1697 = vpop.f32.mrf.mxu0
        %v1698 = vadd.f32 %v1649, %v1697
        %v1699 = vpop.f32.mrf.mxu0
        %v1700 = vadd.f32 %v1651, %v1699
        %1701 = vmatmul.bf16.gmra.mxu0 %v784
        %v1702 = vpop.f32.mrf.mxu0
        %v1703 = vadd.f32 %v1654, %v1702
        %v1704 = vpop.f32.mrf.mxu0
        %v1705 = vadd.f32 %v1656, %v1704
        %1706 = vdwg.mxu0
        %1707 = vmatpush.bf16.msra.mxu0 %v1411
        %1708 = vmatpush.bf16.msra.mxu0 %v1410
        %1709 = vmatpush.bf16.msra.mxu0 %v1409
        %1710 = vmatpush.bf16.msra.mxu0 %v1408
        %1711 = vmatpush.bf16.msra.mxu0 %v1407
        %1712 = vmatpush.bf16.msra.mxu0 %v1406
        %1713 = vmatpush.bf16.msra.mxu0 %v1405
        %1714 = vmatpush.bf16.msra.mxu0 %v1404
        %1715 = vmatmul.bf16.gmra.mxu0 %v694
        %v1716 = vpop.f32.mrf.mxu0
        %v1717 = vadd.f32 %v1668, %v1716
        %v1718 = vpop.f32.mrf.mxu0
        %v1719 = vadd.f32 %v1670, %v1718
        %1720 = vmatmul.bf16.gmra.mxu0 %v707
        %v1721 = vpop.f32.mrf.mxu0
        %v1722 = vadd.f32 %v1673, %v1721
        %v1723 = vpop.f32.mrf.mxu0
        %v1724 = vadd.f32 %v1675, %v1723
        %1725 = vmatmul.bf16.gmra.mxu0 %v720
        %v1726 = vpop.f32.mrf.mxu0
        %v1727 = vadd.f32 %v1678, %v1726
        %v1728 = vpop.f32.mrf.mxu0
        %v1729 = vadd.f32 %v1680, %v1728
        %1730 = vmatmul.bf16.gmra.mxu0 %v733
        %v1731 = vpop.f32.mrf.mxu0
        %v1732 = vadd.f32 %v1683, %v1731
        %v1733 = vpop.f32.mrf.mxu0
        %v1734 = vadd.f32 %v1685, %v1733
        %1735 = vmatmul.bf16.gmra.mxu0 %v746
        %v1736 = vpop.f32.mrf.mxu0
        %v1737 = vadd.f32 %v1688, %v1736
        %v1738 = vpop.f32.mrf.mxu0
        %v1739 = vadd.f32 %v1690, %v1738
        %1740 = vmatmul.bf16.gmra.mxu0 %v759
        %v1741 = vpop.f32.mrf.mxu0
        %v1742 = vadd.f32 %v1693, %v1741
        %v1743 = vpop.f32.mrf.mxu0
        %v1744 = vadd.f32 %v1695, %v1743
        %1745 = vmatmul.bf16.gmra.mxu0 %v772
        %v1746 = vpop.f32.mrf.mxu0
        %v1747 = vadd.f32 %v1698, %v1746
        %v1748 = vpop.f32.mrf.mxu0
        %v1749 = vadd.f32 %v1700, %v1748
        %1750 = vmatmul.bf16.gmra.mxu0 %v785
        %v1751 = vpop.f32.mrf.mxu0
        %v1752 = vadd.f32 %v1703, %v1751
        %v1753 = vpop.f32.mrf.mxu0
        %v1754 = vadd.f32 %v1705, %v1753
        %1755 = vdwg.mxu0
        %1756 = vmatpush.bf16.msra.mxu0 %v1419
        %1757 = vmatpush.bf16.msra.mxu0 %v1418
        %1758 = vmatpush.bf16.msra.mxu0 %v1417
        %1759 = vmatpush.bf16.msra.mxu0 %v1416
        %1760 = vmatpush.bf16.msra.mxu0 %v1415
        %1761 = vmatpush.bf16.msra.mxu0 %v1414
        %1762 = vmatpush.bf16.msra.mxu0 %v1413
        %1763 = vmatpush.bf16.msra.mxu0 %v1412
        %1764 = vmatmul.bf16.gmra.mxu0 %v695
        %v1765 = vpop.f32.mrf.mxu0
        %v1766 = vadd.f32 %v1717, %v1765
        %v1767 = vpop.f32.mrf.mxu0
        %v1768 = vadd.f32 %v1719, %v1767
        %1769 = vmatmul.bf16.gmra.mxu0 %v708
        %v1770 = vpop.f32.mrf.mxu0
        %v1771 = vadd.f32 %v1722, %v1770
        %v1772 = vpop.f32.mrf.mxu0
        %v1773 = vadd.f32 %v1724, %v1772
        %1774 = vmatmul.bf16.gmra.mxu0 %v721
        %v1775 = vpop.f32.mrf.mxu0
        %v1776 = vadd.f32 %v1727, %v1775
        %v1777 = vpop.f32.mrf.mxu0
        %v1778 = vadd.f32 %v1729, %v1777
        %1779 = vmatmul.bf16.gmra.mxu0 %v734
        %v1780 = vpop.f32.mrf.mxu0
        %v1781 = vadd.f32 %v1732, %v1780
        %v1782 = vpop.f32.mrf.mxu0
        %v1783 = vadd.f32 %v1734, %v1782
        %1784 = vmatmul.bf16.gmra.mxu0 %v747
        %v1785 = vpop.f32.mrf.mxu0
        %v1786 = vadd.f32 %v1737, %v1785
        %v1787 = vpop.f32.mrf.mxu0
        %v1788 = vadd.f32 %v1739, %v1787
        %1789 = vmatmul.bf16.gmra.mxu0 %v760
        %v1790 = vpop.f32.mrf.mxu0
        %v1791 = vadd.f32 %v1742, %v1790
        %v1792 = vpop.f32.mrf.mxu0
        %v1793 = vadd.f32 %v1744, %v1792
        %1794 = vmatmul.bf16.gmra.mxu0 %v773
        %v1795 = vpop.f32.mrf.mxu0
        %v1796 = vadd.f32 %v1747, %v1795
        %v1797 = vpop.f32.mrf.mxu0
        %v1798 = vadd.f32 %v1749, %v1797
        %1799 = vmatmul.bf16.gmra.mxu0 %v786
        %v1800 = vpop.f32.mrf.mxu0
        %v1801 = vadd.f32 %v1752, %v1800
        %v1802 = vpop.f32.mrf.mxu0
        %v1803 = vadd.f32 %v1754, %v1802
        %1804 = vdwg.mxu0
        %1805 = vmatpush.bf16.msra.mxu0 %v1427
        %1806 = vmatpush.bf16.msra.mxu0 %v1426
        %1807 = vmatpush.bf16.msra.mxu0 %v1425
        %1808 = vmatpush.bf16.msra.mxu0 %v1424
        %1809 = vmatpush.bf16.msra.mxu0 %v1423
        %1810 = vmatpush.bf16.msra.mxu0 %v1422
        %1811 = vmatpush.bf16.msra.mxu0 %v1421
        %1812 = vmatpush.bf16.msra.mxu0 %v1420
        %1813 = vmatmul.bf16.gmra.mxu0 %v696
        %v1814 = vpop.f32.mrf.mxu0
        %v1815 = vadd.f32 %v1766, %v1814
        %v1816 = vpop.f32.mrf.mxu0
        %v1817 = vadd.f32 %v1768, %v1816
        %1818 = vmatmul.bf16.gmra.mxu0 %v709
        %v1819 = vpop.f32.mrf.mxu0
        %v1820 = vadd.f32 %v1771, %v1819
        %v1821 = vpop.f32.mrf.mxu0
        %v1822 = vadd.f32 %v1773, %v1821
        %1823 = vmatmul.bf16.gmra.mxu0 %v722
        %v1824 = vpop.f32.mrf.mxu0
        %v1825 = vadd.f32 %v1776, %v1824
        %v1826 = vpop.f32.mrf.mxu0
        %v1827 = vadd.f32 %v1778, %v1826
        %1828 = vmatmul.bf16.gmra.mxu0 %v735
        %v1829 = vpop.f32.mrf.mxu0
        %v1830 = vadd.f32 %v1781, %v1829
        %v1831 = vpop.f32.mrf.mxu0
        %v1832 = vadd.f32 %v1783, %v1831
        %1833 = vmatmul.bf16.gmra.mxu0 %v748
        %v1834 = vpop.f32.mrf.mxu0
        %v1835 = vadd.f32 %v1786, %v1834
        %v1836 = vpop.f32.mrf.mxu0
        %v1837 = vadd.f32 %v1788, %v1836
        %1838 = vmatmul.bf16.gmra.mxu0 %v761
        %v1839 = vpop.f32.mrf.mxu0
        %v1840 = vadd.f32 %v1791, %v1839
        %v1841 = vpop.f32.mrf.mxu0
        %v1842 = vadd.f32 %v1793, %v1841
        %1843 = vmatmul.bf16.gmra.mxu0 %v774
        %v1844 = vpop.f32.mrf.mxu0
        %v1845 = vadd.f32 %v1796, %v1844
        %v1846 = vpop.f32.mrf.mxu0
        %v1847 = vadd.f32 %v1798, %v1846
        %1848 = vmatmul.bf16.gmra.mxu0 %v787
        %v1849 = vpop.f32.mrf.mxu0
        %v1850 = vadd.f32 %v1801, %v1849
        %v1851 = vpop.f32.mrf.mxu0
        %v1852 = vadd.f32 %v1803, %v1851
        %1853 = vdwg.mxu0
        %1854 = vmatpush.bf16.msra.mxu0 %v1435
        %1855 = vmatpush.bf16.msra.mxu0 %v1434
        %1856 = vmatpush.bf16.msra.mxu0 %v1433
        %1857 = vmatpush.bf16.msra.mxu0 %v1432
        %1858 = vmatpush.bf16.msra.mxu0 %v1431
        %1859 = vmatpush.bf16.msra.mxu0 %v1430
        %1860 = vmatpush.bf16.msra.mxu0 %v1429
        %1861 = vmatpush.bf16.msra.mxu0 %v1428
        %1862 = vmatmul.bf16.gmra.mxu0 %v697
        %v1863 = vpop.f32.mrf.mxu0
        %v1864 = vadd.f32 %v1815, %v1863
        %v1865 = vpop.f32.mrf.mxu0
        %v1866 = vadd.f32 %v1817, %v1865
        %1867 = vmatmul.bf16.gmra.mxu0 %v710
        %v1868 = vpop.f32.mrf.mxu0
        %v1869 = vadd.f32 %v1820, %v1868
        %v1870 = vpop.f32.mrf.mxu0
        %v1871 = vadd.f32 %v1822, %v1870
        %1872 = vmatmul.bf16.gmra.mxu0 %v723
        %v1873 = vpop.f32.mrf.mxu0
        %v1874 = vadd.f32 %v1825, %v1873
        %v1875 = vpop.f32.mrf.mxu0
        %v1876 = vadd.f32 %v1827, %v1875
        %1877 = vmatmul.bf16.gmra.mxu0 %v736
        %v1878 = vpop.f32.mrf.mxu0
        %v1879 = vadd.f32 %v1830, %v1878
        %v1880 = vpop.f32.mrf.mxu0
        %v1881 = vadd.f32 %v1832, %v1880
        %1882 = vmatmul.bf16.gmra.mxu0 %v749
        %v1883 = vpop.f32.mrf.mxu0
        %v1884 = vadd.f32 %v1835, %v1883
        %v1885 = vpop.f32.mrf.mxu0
        %v1886 = vadd.f32 %v1837, %v1885
        %1887 = vmatmul.bf16.gmra.mxu0 %v762
        %v1888 = vpop.f32.mrf.mxu0
        %v1889 = vadd.f32 %v1840, %v1888
        %v1890 = vpop.f32.mrf.mxu0
        %v1891 = vadd.f32 %v1842, %v1890
        %1892 = vmatmul.bf16.gmra.mxu0 %v775
        %v1893 = vpop.f32.mrf.mxu0
        %v1894 = vadd.f32 %v1845, %v1893
        %v1895 = vpop.f32.mrf.mxu0
        %v1896 = vadd.f32 %v1847, %v1895
        %1897 = vmatmul.bf16.gmra.mxu0 %v788
        %v1898 = vpop.f32.mrf.mxu0
        %v1899 = vadd.f32 %v1850, %v1898
        %v1900 = vpop.f32.mrf.mxu0
        %v1901 = vadd.f32 %v1852, %v1900
        %1902 = vdwg.mxu0
        %1903 = vmatpush.bf16.msra.mxu0 %v1443
        %1904 = vmatpush.bf16.msra.mxu0 %v1442
        %1905 = vmatpush.bf16.msra.mxu0 %v1441
        %1906 = vmatpush.bf16.msra.mxu0 %v1440
        %1907 = vmatpush.bf16.msra.mxu0 %v1439
        %1908 = vmatpush.bf16.msra.mxu0 %v1438
        %1909 = vmatpush.bf16.msra.mxu0 %v1437
        %1910 = vmatpush.bf16.msra.mxu0 %v1436
        %1911 = vmatmul.bf16.gmra.mxu0 %v698
        %v1912 = vpop.f32.mrf.mxu0
        %v1913 = vadd.f32 %v1864, %v1912
        %v1914 = vpop.f32.mrf.mxu0
        %v1915 = vadd.f32 %v1866, %v1914
        %1916 = vmatmul.bf16.gmra.mxu0 %v711
        %v1917 = vpop.f32.mrf.mxu0
        %v1918 = vadd.f32 %v1869, %v1917
        %v1919 = vpop.f32.mrf.mxu0
        %v1920 = vadd.f32 %v1871, %v1919
        %1921 = vmatmul.bf16.gmra.mxu0 %v724
        %v1922 = vpop.f32.mrf.mxu0
        %v1923 = vadd.f32 %v1874, %v1922
        %v1924 = vpop.f32.mrf.mxu0
        %v1925 = vadd.f32 %v1876, %v1924
        %1926 = vmatmul.bf16.gmra.mxu0 %v737
        %v1927 = vpop.f32.mrf.mxu0
        %v1928 = vadd.f32 %v1879, %v1927
        %v1929 = vpop.f32.mrf.mxu0
        %v1930 = vadd.f32 %v1881, %v1929
        %1931 = vmatmul.bf16.gmra.mxu0 %v750
        %v1932 = vpop.f32.mrf.mxu0
        %v1933 = vadd.f32 %v1884, %v1932
        %v1934 = vpop.f32.mrf.mxu0
        %v1935 = vadd.f32 %v1886, %v1934
        %1936 = vmatmul.bf16.gmra.mxu0 %v763
        %v1937 = vpop.f32.mrf.mxu0
        %v1938 = vadd.f32 %v1889, %v1937
        %v1939 = vpop.f32.mrf.mxu0
        %v1940 = vadd.f32 %v1891, %v1939
        %1941 = vmatmul.bf16.gmra.mxu0 %v776
        %v1942 = vpop.f32.mrf.mxu0
        %v1943 = vadd.f32 %v1894, %v1942
        %v1944 = vpop.f32.mrf.mxu0
        %v1945 = vadd.f32 %v1896, %v1944
        %1946 = vmatmul.bf16.gmra.mxu0 %v789
        %v1947 = vpop.f32.mrf.mxu0
        %v1948 = vadd.f32 %v1899, %v1947
        %v1949 = vpop.f32.mrf.mxu0
        %v1950 = vadd.f32 %v1901, %v1949
        %1951 = vdwg.mxu0
        %1952 = vmatpush.bf16.msra.mxu0 %v1451
        %1953 = vmatpush.bf16.msra.mxu0 %v1450
        %1954 = vmatpush.bf16.msra.mxu0 %v1449
        %1955 = vmatpush.bf16.msra.mxu0 %v1448
        %1956 = vmatpush.bf16.msra.mxu0 %v1447
        %1957 = vmatpush.bf16.msra.mxu0 %v1446
        %1958 = vmatpush.bf16.msra.mxu0 %v1445
        %1959 = vmatpush.bf16.msra.mxu0 %v1444
        %1960 = vmatmul.bf16.gmra.mxu0 %v699
        %v1961 = vpop.f32.mrf.mxu0
        %v1962 = vadd.f32 %v1913, %v1961
        %v1963 = vpop.f32.mrf.mxu0
        %v1964 = vadd.f32 %v1915, %v1963
        %1965 = vmatmul.bf16.gmra.mxu0 %v712
        %v1966 = vpop.f32.mrf.mxu0
        %v1967 = vadd.f32 %v1918, %v1966
        %v1968 = vpop.f32.mrf.mxu0
        %v1969 = vadd.f32 %v1920, %v1968
        %1970 = vmatmul.bf16.gmra.mxu0 %v725
        %v1971 = vpop.f32.mrf.mxu0
        %v1972 = vadd.f32 %v1923, %v1971
        %v1973 = vpop.f32.mrf.mxu0
        %v1974 = vadd.f32 %v1925, %v1973
        %1975 = vmatmul.bf16.gmra.mxu0 %v738
        %v1976 = vpop.f32.mrf.mxu0
        %v1977 = vadd.f32 %v1928, %v1976
        %v1978 = vpop.f32.mrf.mxu0
        %v1979 = vadd.f32 %v1930, %v1978
        %1980 = vmatmul.bf16.gmra.mxu0 %v751
        %v1981 = vpop.f32.mrf.mxu0
        %v1982 = vadd.f32 %v1933, %v1981
        %v1983 = vpop.f32.mrf.mxu0
        %v1984 = vadd.f32 %v1935, %v1983
        %1985 = vmatmul.bf16.gmra.mxu0 %v764
        %v1986 = vpop.f32.mrf.mxu0
        %v1987 = vadd.f32 %v1938, %v1986
        %v1988 = vpop.f32.mrf.mxu0
        %v1989 = vadd.f32 %v1940, %v1988
        %1990 = vmatmul.bf16.gmra.mxu0 %v777
        %v1991 = vpop.f32.mrf.mxu0
        %v1992 = vadd.f32 %v1943, %v1991
        %v1993 = vpop.f32.mrf.mxu0
        %v1994 = vadd.f32 %v1945, %v1993
        %1995 = vmatmul.bf16.gmra.mxu0 %v790
        %v1996 = vpop.f32.mrf.mxu0
        %v1997 = vadd.f32 %v1948, %v1996
        %v1998 = vpop.f32.mrf.mxu0
        %v1999 = vadd.f32 %v1950, %v1998
        %2000 = vdwg.mxu0
        %2001 = vmatpush.bf16.msra.mxu0 %v1459
        %2002 = vmatpush.bf16.msra.mxu0 %v1458
        %2003 = vmatpush.bf16.msra.mxu0 %v1457
        %2004 = vmatpush.bf16.msra.mxu0 %v1456
        %2005 = vmatpush.bf16.msra.mxu0 %v1455
        %2006 = vmatpush.bf16.msra.mxu0 %v1454
        %2007 = vmatpush.bf16.msra.mxu0 %v1453
        %2008 = vmatpush.bf16.msra.mxu0 %v1452
        %2009 = vmatmul.bf16.gmra.mxu0 %v700
        %v2010 = vpop.f32.mrf.mxu0
        %v2011 = vadd.f32 %v1962, %v2010
        %v2012 = vpop.f32.mrf.mxu0
        %v2013 = vadd.f32 %v1964, %v2012
        %2014 = vmatmul.bf16.gmra.mxu0 %v713
        %v2015 = vpop.f32.mrf.mxu0
        %v2016 = vadd.f32 %v1967, %v2015
        %v2017 = vpop.f32.mrf.mxu0
        %v2018 = vadd.f32 %v1969, %v2017
        %2019 = vmatmul.bf16.gmra.mxu0 %v726
        %v2020 = vpop.f32.mrf.mxu0
        %v2021 = vadd.f32 %v1972, %v2020
        %v2022 = vpop.f32.mrf.mxu0
        %v2023 = vadd.f32 %v1974, %v2022
        %2024 = vmatmul.bf16.gmra.mxu0 %v739
        %v2025 = vpop.f32.mrf.mxu0
        %v2026 = vadd.f32 %v1977, %v2025
        %v2027 = vpop.f32.mrf.mxu0
        %v2028 = vadd.f32 %v1979, %v2027
        %2029 = vmatmul.bf16.gmra.mxu0 %v752
        %v2030 = vpop.f32.mrf.mxu0
        %v2031 = vadd.f32 %v1982, %v2030
        %v2032 = vpop.f32.mrf.mxu0
        %v2033 = vadd.f32 %v1984, %v2032
        %2034 = vmatmul.bf16.gmra.mxu0 %v765
        %v2035 = vpop.f32.mrf.mxu0
        %v2036 = vadd.f32 %v1987, %v2035
        %v2037 = vpop.f32.mrf.mxu0
        %v2038 = vadd.f32 %v1989, %v2037
        %2039 = vmatmul.bf16.gmra.mxu0 %v778
        %v2040 = vpop.f32.mrf.mxu0
        %v2041 = vadd.f32 %v1992, %v2040
        %v2042 = vpop.f32.mrf.mxu0
        %v2043 = vadd.f32 %v1994, %v2042
        %2044 = vmatmul.bf16.gmra.mxu0 %v791
        %v2045 = vpop.f32.mrf.mxu0
        %v2046 = vadd.f32 %v1997, %v2045
        %v2047 = vpop.f32.mrf.mxu0
        %v2048 = vadd.f32 %v1999, %v2047
        %2049 = vdwg.mxu0
        %2050 = vmatpush.bf16.msra.mxu0 %v1467
        %2051 = vmatpush.bf16.msra.mxu0 %v1466
        %2052 = vmatpush.bf16.msra.mxu0 %v1465
        %2053 = vmatpush.bf16.msra.mxu0 %v1464
        %2054 = vmatpush.bf16.msra.mxu0 %v1463
        %2055 = vmatpush.bf16.msra.mxu0 %v1462
        %2056 = vmatpush.bf16.msra.mxu0 %v1461
        %2057 = vmatpush.bf16.msra.mxu0 %v1460
        %2058 = vmatmul.bf16.gmra.mxu0 %v701
        %v2059 = vpop.f32.mrf.mxu0
        %v2060 = vadd.f32 %v2011, %v2059
        %v2061 = vpop.f32.mrf.mxu0
        %v2062 = vadd.f32 %v2013, %v2061
        %2063 = vmatmul.bf16.gmra.mxu0 %v714
        %v2064 = vpop.f32.mrf.mxu0
        %v2065 = vadd.f32 %v2016, %v2064
        %v2066 = vpop.f32.mrf.mxu0
        %v2067 = vadd.f32 %v2018, %v2066
        %2068 = vmatmul.bf16.gmra.mxu0 %v727
        %v2069 = vpop.f32.mrf.mxu0
        %v2070 = vadd.f32 %v2021, %v2069
        %v2071 = vpop.f32.mrf.mxu0
        %v2072 = vadd.f32 %v2023, %v2071
        %2073 = vmatmul.bf16.gmra.mxu0 %v740
        %v2074 = vpop.f32.mrf.mxu0
        %v2075 = vadd.f32 %v2026, %v2074
        %v2076 = vpop.f32.mrf.mxu0
        %v2077 = vadd.f32 %v2028, %v2076
        %2078 = vmatmul.bf16.gmra.mxu0 %v753
        %v2079 = vpop.f32.mrf.mxu0
        %v2080 = vadd.f32 %v2031, %v2079
        %v2081 = vpop.f32.mrf.mxu0
        %v2082 = vadd.f32 %v2033, %v2081
        %2083 = vmatmul.bf16.gmra.mxu0 %v766
        %v2084 = vpop.f32.mrf.mxu0
        %v2085 = vadd.f32 %v2036, %v2084
        %v2086 = vpop.f32.mrf.mxu0
        %v2087 = vadd.f32 %v2038, %v2086
        %2088 = vmatmul.bf16.gmra.mxu0 %v779
        %v2089 = vpop.f32.mrf.mxu0
        %v2090 = vadd.f32 %v2041, %v2089
        %v2091 = vpop.f32.mrf.mxu0
        %v2092 = vadd.f32 %v2043, %v2091
        %2093 = vmatmul.bf16.gmra.mxu0 %v792
        %v2094 = vpop.f32.mrf.mxu0
        %v2095 = vadd.f32 %v2046, %v2094
        %v2096 = vpop.f32.mrf.mxu0
        %v2097 = vadd.f32 %v2048, %v2096
        %2098 = vdwg.mxu0
        %2099 = vmatpush.bf16.msra.mxu0 %v1475
        %2100 = vmatpush.bf16.msra.mxu0 %v1474
        %2101 = vmatpush.bf16.msra.mxu0 %v1473
        %2102 = vmatpush.bf16.msra.mxu0 %v1472
        %2103 = vmatpush.bf16.msra.mxu0 %v1471
        %2104 = vmatpush.bf16.msra.mxu0 %v1470
        %2105 = vmatpush.bf16.msra.mxu0 %v1469
        %2106 = vmatpush.bf16.msra.mxu0 %v1468
        %2107 = vmatmul.bf16.gmra.mxu0 %v702
        %v2108 = vpop.f32.mrf.mxu0
        %v2109 = vadd.f32 %v2060, %v2108
        %v2110 = vpop.f32.mrf.mxu0
        %v2111 = vadd.f32 %v2062, %v2110
        %2112 = vmatmul.bf16.gmra.mxu0 %v715
        %v2113 = vpop.f32.mrf.mxu0
        %v2114 = vadd.f32 %v2065, %v2113
        %v2115 = vpop.f32.mrf.mxu0
        %v2116 = vadd.f32 %v2067, %v2115
        %2117 = vmatmul.bf16.gmra.mxu0 %v728
        %v2118 = vpop.f32.mrf.mxu0
        %v2119 = vadd.f32 %v2070, %v2118
        %v2120 = vpop.f32.mrf.mxu0
        %v2121 = vadd.f32 %v2072, %v2120
        %2122 = vmatmul.bf16.gmra.mxu0 %v741
        %v2123 = vpop.f32.mrf.mxu0
        %v2124 = vadd.f32 %v2075, %v2123
        %v2125 = vpop.f32.mrf.mxu0
        %v2126 = vadd.f32 %v2077, %v2125
        %2127 = vmatmul.bf16.gmra.mxu0 %v754
        %v2128 = vpop.f32.mrf.mxu0
        %v2129 = vadd.f32 %v2080, %v2128
        %v2130 = vpop.f32.mrf.mxu0
        %v2131 = vadd.f32 %v2082, %v2130
        %2132 = vmatmul.bf16.gmra.mxu0 %v767
        %v2133 = vpop.f32.mrf.mxu0
        %v2134 = vadd.f32 %v2085, %v2133
        %v2135 = vpop.f32.mrf.mxu0
        %v2136 = vadd.f32 %v2087, %v2135
        %2137 = vmatmul.bf16.gmra.mxu0 %v780
        %v2138 = vpop.f32.mrf.mxu0
        %v2139 = vadd.f32 %v2090, %v2138
        %v2140 = vpop.f32.mrf.mxu0
        %v2141 = vadd.f32 %v2092, %v2140
        %2142 = vmatmul.bf16.gmra.mxu0 %v793
        %v2143 = vpop.f32.mrf.mxu0
        %v2144 = vadd.f32 %v2095, %v2143
        %v2145 = vpop.f32.mrf.mxu0
        %v2146 = vadd.f32 %v2097, %v2145
        %2147 = vdwg.mxu0
        %2148 = vmatpush.bf16.msra.mxu0 %v1483
        %2149 = vmatpush.bf16.msra.mxu0 %v1482
        %2150 = vmatpush.bf16.msra.mxu0 %v1481
        %2151 = vmatpush.bf16.msra.mxu0 %v1480
        %2152 = vmatpush.bf16.msra.mxu0 %v1479
        %2153 = vmatpush.bf16.msra.mxu0 %v1478
        %2154 = vmatpush.bf16.msra.mxu0 %v1477
        %2155 = vmatpush.bf16.msra.mxu0 %v1476
        %2156 = vmatmul.bf16.gmra.mxu0 %v703
        %v2157 = vpop.f32.mrf.mxu0
        %v2158 = vadd.f32 %v2109, %v2157
        %v2159 = vpop.f32.mrf.mxu0
        %v2160 = vadd.f32 %v2111, %v2159
        %2161 = vmatmul.bf16.gmra.mxu0 %v716
        %v2162 = vpop.f32.mrf.mxu0
        %v2163 = vadd.f32 %v2114, %v2162
        %v2164 = vpop.f32.mrf.mxu0
        %v2165 = vadd.f32 %v2116, %v2164
        %2166 = vmatmul.bf16.gmra.mxu0 %v729
        %v2167 = vpop.f32.mrf.mxu0
        %v2168 = vadd.f32 %v2119, %v2167
        %v2169 = vpop.f32.mrf.mxu0
        %v2170 = vadd.f32 %v2121, %v2169
        %2171 = vmatmul.bf16.gmra.mxu0 %v742
        %v2172 = vpop.f32.mrf.mxu0
        %v2173 = vadd.f32 %v2124, %v2172
        %v2174 = vpop.f32.mrf.mxu0
        %v2175 = vadd.f32 %v2126, %v2174
        %2176 = vmatmul.bf16.gmra.mxu0 %v755
        %v2177 = vpop.f32.mrf.mxu0
        %v2178 = vadd.f32 %v2129, %v2177
        %v2179 = vpop.f32.mrf.mxu0
        %v2180 = vadd.f32 %v2131, %v2179
        %2181 = vmatmul.bf16.gmra.mxu0 %v768
        %v2182 = vpop.f32.mrf.mxu0
        %v2183 = vadd.f32 %v2134, %v2182
        %v2184 = vpop.f32.mrf.mxu0
        %v2185 = vadd.f32 %v2136, %v2184
        %2186 = vmatmul.bf16.gmra.mxu0 %v781
        %v2187 = vpop.f32.mrf.mxu0
        %v2188 = vadd.f32 %v2139, %v2187
        %v2189 = vpop.f32.mrf.mxu0
        %v2190 = vadd.f32 %v2141, %v2189
        %2191 = vmatmul.bf16.gmra.mxu0 %v794
        %v2192 = vpop.f32.mrf.mxu0
        %v2193 = vadd.f32 %v2144, %v2192
        %v2194 = vpop.f32.mrf.mxu0
        %v2195 = vadd.f32 %v2146, %v2194
        %2196 = vdwg.mxu0
        %2197 = vmatpush.bf16.msra.mxu0 0
        %2198 = vmatpush.bf16.msra.mxu0 0
        %2199 = vmatpush.bf16.msra.mxu0 0
        %2200 = vmatpush.bf16.msra.mxu0 0
        %2201 = vmatpush.bf16.msra.mxu0 0
        %2202 = vmatpush.bf16.msra.mxu0 0
        %2203 = vmatpush.bf16.msra.mxu0 %v1485
        %2204 = vmatpush.bf16.msra.mxu0 %v1484
        %2205 = vmatmul.bf16.gmra.mxu0 %v1586
        %v2206 = vpop.f32.mrf.mxu0
        %v2207 = vadd.f32 %v2158, %v2206
        %v2208 = vpop.f32.mrf.mxu0
        %v2209 = vadd.f32 %v2160, %v2208
        %2210 = vmatmul.bf16.gmra.mxu0 %v1589
        %v2211 = vpop.f32.mrf.mxu0
        %v2212 = vadd.f32 %v2163, %v2211
        %v2213 = vpop.f32.mrf.mxu0
        %v2214 = vadd.f32 %v2165, %v2213
        %2215 = vmatmul.bf16.gmra.mxu0 %v1592
        %v2216 = vpop.f32.mrf.mxu0
        %v2217 = vadd.f32 %v2168, %v2216
        %v2218 = vpop.f32.mrf.mxu0
        %v2219 = vadd.f32 %v2170, %v2218
        %2220 = vmatmul.bf16.gmra.mxu0 %v1595
        %v2221 = vpop.f32.mrf.mxu0
        %v2222 = vadd.f32 %v2173, %v2221
        %v2223 = vpop.f32.mrf.mxu0
        %v2224 = vadd.f32 %v2175, %v2223
        %2225 = vmatmul.bf16.gmra.mxu0 %v1598
        %v2226 = vpop.f32.mrf.mxu0
        %v2227 = vadd.f32 %v2178, %v2226
        %v2228 = vpop.f32.mrf.mxu0
        %v2229 = vadd.f32 %v2180, %v2228
        %2230 = vmatmul.bf16.gmra.mxu0 %v1601
        %v2231 = vpop.f32.mrf.mxu0
        %v2232 = vadd.f32 %v2183, %v2231
        %v2233 = vpop.f32.mrf.mxu0
        %v2234 = vadd.f32 %v2185, %v2233
        %2235 = vmatmul.bf16.gmra.mxu0 %v1604
        %v2236 = vpop.f32.mrf.mxu0
        %v2237 = vadd.f32 %v2188, %v2236
        %v2238 = vpop.f32.mrf.mxu0
        %v2239 = vadd.f32 %v2190, %v2238
        %2240 = vmatmul.bf16.gmra.mxu0 %v1607
        %v2241 = vpop.f32.mrf.mxu0
        %v2242 = vadd.f32 %v2193, %v2241
        %v2243 = vpop.f32.mrf.mxu0
        %v2244 = vadd.f32 %v2195, %v2243
        %2245 = vdwg.mxu0
        %v2246 = vmax.f32 %v2207, 0.0
        %v2247 = vmax.f32 %v2209, 0.0
        %v2248 = vmax.f32 %v2212, 0.0
        %v2249 = vmax.f32 %v2214, 0.0
        %v2250 = vmax.f32 %v2217, 0.0
        %v2251 = vmax.f32 %v2219, 0.0
        %v2252 = vmax.f32 %v2222, 0.0
        %v2253 = vmax.f32 %v2224, 0.0
        %v2254 = vmax.f32 %v2227, 0.0
        %v2255 = vmax.f32 %v2229, 0.0
        %v2256 = vmax.f32 %v2232, 0.0
        %v2257 = vmax.f32 %v2234, 0.0
        %v2258 = vmax.f32 %v2237, 0.0
        %v2259 = vmax.f32 %v2239, 0.0
        %v2260 = vmax.f32 %v2242, 0.0
        %v2261 = vmax.f32 %v2244, 0.0
        %v2262 = vpack.c.bf16 %v2247, %v2246
        %v2263 = vpack.c.bf16 %v2249, %v2248
        %v2264 = vpack.c.bf16 %v2251, %v2250
        %v2265 = vpack.c.bf16 %v2253, %v2252
        %v2266 = vpack.c.bf16 %v2255, %v2254
        %v2267 = vpack.c.bf16 %v2257, %v2256
        %v2268 = vpack.c.bf16 %v2259, %v2258
        %v2269 = vpack.c.bf16 %v2261, %v2260
        %v2270 = vld [vmem:[%s3] sm:$0xf]
        %v2271 = vld [vmem:[%s3 + $0x4] sm:$0xf]
        %v2272 = vld [vmem:[%s3 + $0x8] sm:$0xf]
        %v2273 = vld [vmem:[%s3 + $0xc] sm:$0xf]
        %v2274 = vld [vmem:[%s4] sm:$0x1]
        %v2276 = vperm.slane %v2274, 0
        %v2282 = vunpack.c.l.b16 %v2270
        %v2283 = vunpack.c.l.b16 %v2271
        %v2284 = vunpack.c.l.b16 %v2272
        %v2285 = vunpack.c.l.b16 %v2273
        %v2286 = vpack.c.b16 %v2283, %v2282
        %v2287 = vpack.c.b16 %v2285, %v2284
        %v2291 = vsel %vm1584, %v2262, 0
        %v2294 = vsel %vm1584, %v2263, 0
        %v2297 = vsel %vm1584, %v2264, 0
        %v2300 = vsel %vm1584, %v2265, 0
        %v2303 = vsel %vm1584, %v2266, 0
        %v2306 = vsel %vm1584, %v2267, 0
        %v2309 = vsel %vm1584, %v2268, 0
        %v2312 = vsel %vm1584, %v2269, 0
        %2314 = vmatpush.bf16.msra.mxu0 0
        %2315 = vmatpush.bf16.msra.mxu0 0
        %2316 = vmatpush.bf16.msra.mxu0 0
        %2317 = vmatpush.bf16.msra.mxu0 0
        %2318 = vmatpush.bf16.msra.mxu0 0
        %2319 = vmatpush.bf16.msra.mxu0 0
        %2320 = vmatpush.bf16.msra.mxu0 %v2287
        %2321 = vmatpush.bf16.msra.mxu0 %v2286
        %2322 = vmatmul.bf16.gmra.mxu0 %v2291
        %v2323 = vpop.f32.mrf.mxu0
        %v2324 = vadd.f32 %v2276, %v2323
        %v2325 = vpop.f32.mrf.mxu0
        %v2326 = vadd.f32 %v2276, %v2325
        %2327 = vmatmul.bf16.gmra.mxu0 %v2294
        %v2328 = vpop.f32.mrf.mxu0
        %v2329 = vadd.f32 %v2276, %v2328
        %v2330 = vpop.f32.mrf.mxu0
        %v2331 = vadd.f32 %v2276, %v2330
        %2332 = vmatmul.bf16.gmra.mxu0 %v2297
        %v2333 = vpop.f32.mrf.mxu0
        %v2334 = vadd.f32 %v2276, %v2333
        %v2335 = vpop.f32.mrf.mxu0
        %v2336 = vadd.f32 %v2276, %v2335
        %2337 = vmatmul.bf16.gmra.mxu0 %v2300
        %v2338 = vpop.f32.mrf.mxu0
        %v2339 = vadd.f32 %v2276, %v2338
        %v2340 = vpop.f32.mrf.mxu0
        %v2341 = vadd.f32 %v2276, %v2340
        %2342 = vmatmul.bf16.gmra.mxu0 %v2303
        %v2343 = vpop.f32.mrf.mxu0
        %v2344 = vadd.f32 %v2276, %v2343
        %v2345 = vpop.f32.mrf.mxu0
        %v2346 = vadd.f32 %v2276, %v2345
        %2347 = vmatmul.bf16.gmra.mxu0 %v2306
        %v2348 = vpop.f32.mrf.mxu0
        %v2349 = vadd.f32 %v2276, %v2348
        %v2350 = vpop.f32.mrf.mxu0
        %v2351 = vadd.f32 %v2276, %v2350
        %2352 = vmatmul.bf16.gmra.mxu0 %v2309
        %v2353 = vpop.f32.mrf.mxu0
        %v2354 = vadd.f32 %v2276, %v2353
        %v2355 = vpop.f32.mrf.mxu0
        %v2356 = vadd.f32 %v2276, %v2355
        %2357 = vmatmul.bf16.gmra.mxu0 %v2312
        %v2358 = vpop.f32.mrf.mxu0
        %v2359 = vadd.f32 %v2276, %v2358
        %v2360 = vpop.f32.mrf.mxu0
        %v2361 = vadd.f32 %v2276, %v2360
        %2362 = vdwg.mxu0
        %v2363 = vmax.f32 %v2324, 0.0
        %v2364 = vmax.f32 %v2326, 0.0
        %v2365 = vmax.f32 %v2329, 0.0
        %v2366 = vmax.f32 %v2331, 0.0
        %v2367 = vmax.f32 %v2334, 0.0
        %v2368 = vmax.f32 %v2336, 0.0
        %v2369 = vmax.f32 %v2339, 0.0
        %v2370 = vmax.f32 %v2341, 0.0
        %v2371 = vmax.f32 %v2344, 0.0
        %v2372 = vmax.f32 %v2346, 0.0
        %v2373 = vmax.f32 %v2349, 0.0
        %v2374 = vmax.f32 %v2351, 0.0
        %v2375 = vmax.f32 %v2354, 0.0
        %v2376 = vmax.f32 %v2356, 0.0
        %v2377 = vmax.f32 %v2359, 0.0
        %v2378 = vmax.f32 %v2361, 0.0
        %v2379 = vpack.c.bf16 %v2363, %v2363
        %v2380 = vpack.c.bf16 %v2364, %v2364
        %v2381 = vpack.c.bf16 %v2365, %v2365
        %v2382 = vpack.c.bf16 %v2366, %v2366
        %v2383 = vpack.c.bf16 %v2367, %v2367
        %v2384 = vpack.c.bf16 %v2368, %v2368
        %v2385 = vpack.c.bf16 %v2369, %v2369
        %v2386 = vpack.c.bf16 %v2370, %v2370
        %v2387 = vpack.c.bf16 %v2371, %v2371
        %v2388 = vpack.c.bf16 %v2372, %v2372
        %v2389 = vpack.c.bf16 %v2373, %v2373
        %v2390 = vpack.c.bf16 %v2374, %v2374
        %v2391 = vpack.c.bf16 %v2375, %v2375
        %v2392 = vpack.c.bf16 %v2376, %v2376
        %v2393 = vpack.c.bf16 %v2377, %v2377
        %v2394 = vpack.c.bf16 %v2378, %v2378
        %vm2395 = vcmask 257024
        %2396 = vst.msk [vmem:[%s473] sm:$0xf] %vm2395, %v2379
        %2397 = vst.msk [vmem:[%s473 + $0x4] sm:$0xf] %vm2395, %v2380
        %2398 = vst.msk [vmem:[%s473 + $0x8] sm:$0xf] %vm2395, %v2381
        %2399 = vst.msk [vmem:[%s473 + $0xc] sm:$0xf] %vm2395, %v2382
        %2400 = vst.msk [vmem:[%s473 + $0x10] sm:$0xf] %vm2395, %v2383
        %2401 = vst.msk [vmem:[%s473 + $0x14] sm:$0xf] %vm2395, %v2384
        %2402 = vst.msk [vmem:[%s473 + $0x18] sm:$0xf] %vm2395, %v2385
        %2403 = vst.msk [vmem:[%s473 + $0x1c] sm:$0xf] %vm2395, %v2386
        %2404 = vst.msk [vmem:[%s473 + $0x20] sm:$0xf] %vm2395, %v2387
        %2405 = vst.msk [vmem:[%s473 + $0x24] sm:$0xf] %vm2395, %v2388
        %2406 = vst.msk [vmem:[%s473 + $0x28] sm:$0xf] %vm2395, %v2389
        %2407 = vst.msk [vmem:[%s473 + $0x2c] sm:$0xf] %vm2395, %v2390
        %2408 = vst.msk [vmem:[%s473 + $0x30] sm:$0xf] %vm2395, %v2391
        %2409 = vst.msk [vmem:[%s473 + $0x34] sm:$0xf] %vm2395, %v2392
        %2410 = vst.msk [vmem:[%s473 + $0x38] sm:$0xf] %vm2395, %v2393
        %2411 = vst.msk [vmem:[%s473 + $0x3c] sm:$0xf] %vm2395, %v2394
        %v2412 = vld [vmem:[%s5] sm:$0xff]
        %v2413 = vld [vmem:[%s5 + $0x8] sm:$0xff]
        %v2414 = vld [vmem:[%s5 + $0x10] sm:$0xff]
        %v2415 = vld [vmem:[%s5 + $0x18] sm:$0xff]
        %v2416 = vld [vmem:[%s6] sm:$0x3]
        %v2418 = vperm.slane %v2416, 0
        %v2419 = vperm.slane %v2416, 1
        %v2438 = vunpack.c.l.b16 %v2379
        %v2439 = vunpack.c.l.b16 %v2380
        %v2440 = vunpack.c.l.b16 %v2381
        %v2441 = vunpack.c.l.b16 %v2382
        %v2442 = vunpack.c.l.b16 %v2383
        %v2443 = vunpack.c.l.b16 %v2384
        %v2444 = vunpack.c.l.b16 %v2385
        %v2445 = vunpack.c.l.b16 %v2386
        %v2446 = vunpack.c.l.b16 %v2387
        %v2447 = vunpack.c.l.b16 %v2388
        %v2448 = vunpack.c.l.b16 %v2389
        %v2449 = vunpack.c.l.b16 %v2390
        %v2450 = vunpack.c.l.b16 %v2391
        %v2451 = vunpack.c.l.b16 %v2392
        %v2452 = vunpack.c.l.b16 %v2393
        %v2453 = vunpack.c.l.b16 %v2394
        %v2454 = vpack.c.b16 %v2439, %v2438
        %v2455 = vpack.c.b16 %v2441, %v2440
        %v2456 = vpack.c.b16 %v2443, %v2442
        %v2457 = vpack.c.b16 %v2445, %v2444
        %v2458 = vpack.c.b16 %v2447, %v2446
        %v2459 = vpack.c.b16 %v2449, %v2448
        %v2460 = vpack.c.b16 %v2451, %v2450
        %v2461 = vpack.c.b16 %v2453, %v2452
        %v2466 = vunpack.c.l.b16 %v2412
        %v2467 = vunpack.c.h.b16 %v2412
        %v2468 = vunpack.c.l.b16 %v2413
        %v2469 = vunpack.c.h.b16 %v2413
        %v2470 = vunpack.c.l.b16 %v2414
        %v2471 = vunpack.c.h.b16 %v2414
        %v2472 = vunpack.c.l.b16 %v2415
        %v2473 = vunpack.c.h.b16 %v2415
        %v2474 = vpack.c.b16 %v2468, %v2466
        %v2475 = vpack.c.b16 %v2469, %v2467
        %v2476 = vpack.c.b16 %v2472, %v2470
        %v2477 = vpack.c.b16 %v2473, %v2471
        %v2483 = vsel %vm1584, %v2454, 0
        %v2486 = vsel %vm1584, %v2455, 0
        %v2489 = vsel %vm1584, %v2456, 0
        %v2492 = vsel %vm1584, %v2457, 0
        %v2495 = vsel %vm1584, %v2458, 0
        %v2498 = vsel %vm1584, %v2459, 0
        %v2501 = vsel %vm1584, %v2460, 0
        %v2504 = vsel %vm1584, %v2461, 0
        %2506 = vmatpush.bf16.msra.mxu0 0
        %2507 = vmatpush.bf16.msra.mxu0 0
        %2508 = vmatpush.bf16.msra.mxu0 0
        %2509 = vmatpush.bf16.msra.mxu0 0
        %2510 = vmatpush.bf16.msra.mxu0 0
        %2511 = vmatpush.bf16.msra.mxu0 0
        %2512 = vmatpush.bf16.msra.mxu0 %v2476
        %2513 = vmatpush.bf16.msra.mxu0 %v2474
        %2514 = vmatmul.bf16.gmra.mxu0 %v2483
        %v2515 = vpop.f32.mrf.mxu0
        %v2516 = vadd.f32 %v2418, %v2515
        %v2517 = vpop.f32.mrf.mxu0
        %v2518 = vadd.f32 %v2418, %v2517
        %2519 = vmatmul.bf16.gmra.mxu0 %v2486
        %v2520 = vpop.f32.mrf.mxu0
        %v2521 = vadd.f32 %v2418, %v2520
        %v2522 = vpop.f32.mrf.mxu0
        %v2523 = vadd.f32 %v2418, %v2522
        %2524 = vmatmul.bf16.gmra.mxu0 %v2489
        %v2525 = vpop.f32.mrf.mxu0
        %v2526 = vadd.f32 %v2418, %v2525
        %v2527 = vpop.f32.mrf.mxu0
        %v2528 = vadd.f32 %v2418, %v2527
        %2529 = vmatmul.bf16.gmra.mxu0 %v2492
        %v2530 = vpop.f32.mrf.mxu0
        %v2531 = vadd.f32 %v2418, %v2530
        %v2532 = vpop.f32.mrf.mxu0
        %v2533 = vadd.f32 %v2418, %v2532
        %2534 = vmatmul.bf16.gmra.mxu0 %v2495
        %v2535 = vpop.f32.mrf.mxu0
        %v2536 = vadd.f32 %v2418, %v2535
        %v2537 = vpop.f32.mrf.mxu0
        %v2538 = vadd.f32 %v2418, %v2537
        %2539 = vmatmul.bf16.gmra.mxu0 %v2498
        %v2540 = vpop.f32.mrf.mxu0
        %v2541 = vadd.f32 %v2418, %v2540
        %v2542 = vpop.f32.mrf.mxu0
        %v2543 = vadd.f32 %v2418, %v2542
        %2544 = vmatmul.bf16.gmra.mxu0 %v2501
        %v2545 = vpop.f32.mrf.mxu0
        %v2546 = vadd.f32 %v2418, %v2545
        %v2547 = vpop.f32.mrf.mxu0
        %v2548 = vadd.f32 %v2418, %v2547
        %2549 = vmatmul.bf16.gmra.mxu0 %v2504
        %v2550 = vpop.f32.mrf.mxu0
        %v2551 = vadd.f32 %v2418, %v2550
        %v2552 = vpop.f32.mrf.mxu0
        %v2553 = vadd.f32 %v2418, %v2552
        %2554 = vdwg.mxu0
        %2555 = vmatpush.bf16.msra.mxu0 0
        %2556 = vmatpush.bf16.msra.mxu0 0
        %2557 = vmatpush.bf16.msra.mxu0 0
        %2558 = vmatpush.bf16.msra.mxu0 0
        %2559 = vmatpush.bf16.msra.mxu0 0
        %2560 = vmatpush.bf16.msra.mxu0 0
        %2561 = vmatpush.bf16.msra.mxu0 %v2477
        %2562 = vmatpush.bf16.msra.mxu0 %v2475
        %2563 = vmatmul.bf16.gmra.mxu0 %v2483
        %v2564 = vpop.f32.mrf.mxu0
        %v2565 = vadd.f32 %v2419, %v2564
        %v2566 = vpop.f32.mrf.mxu0
        %v2567 = vadd.f32 %v2419, %v2566
        %2568 = vmatmul.bf16.gmra.mxu0 %v2486
        %v2569 = vpop.f32.mrf.mxu0
        %v2570 = vadd.f32 %v2419, %v2569
        %v2571 = vpop.f32.mrf.mxu0
        %v2572 = vadd.f32 %v2419, %v2571
        %2573 = vmatmul.bf16.gmra.mxu0 %v2489
        %v2574 = vpop.f32.mrf.mxu0
        %v2575 = vadd.f32 %v2419, %v2574
        %v2576 = vpop.f32.mrf.mxu0
        %v2577 = vadd.f32 %v2419, %v2576
        %2578 = vmatmul.bf16.gmra.mxu0 %v2492
        %v2579 = vpop.f32.mrf.mxu0
        %v2580 = vadd.f32 %v2419, %v2579
        %v2581 = vpop.f32.mrf.mxu0
        %v2582 = vadd.f32 %v2419, %v2581
        %2583 = vmatmul.bf16.gmra.mxu0 %v2495
        %v2584 = vpop.f32.mrf.mxu0
        %v2585 = vadd.f32 %v2419, %v2584
        %v2586 = vpop.f32.mrf.mxu0
        %v2587 = vadd.f32 %v2419, %v2586
        %2588 = vmatmul.bf16.gmra.mxu0 %v2498
        %v2589 = vpop.f32.mrf.mxu0
        %v2590 = vadd.f32 %v2419, %v2589
        %v2591 = vpop.f32.mrf.mxu0
        %v2592 = vadd.f32 %v2419, %v2591
        %2593 = vmatmul.bf16.gmra.mxu0 %v2501
        %v2594 = vpop.f32.mrf.mxu0
        %v2595 = vadd.f32 %v2419, %v2594
        %v2596 = vpop.f32.mrf.mxu0
        %v2597 = vadd.f32 %v2419, %v2596
        %2598 = vmatmul.bf16.gmra.mxu0 %v2504
        %v2599 = vpop.f32.mrf.mxu0
        %v2600 = vadd.f32 %v2419, %v2599
        %v2601 = vpop.f32.mrf.mxu0
        %v2602 = vadd.f32 %v2419, %v2601
        %2603 = vdwg.mxu0
        %2604 = vst [vmem:[%s447] sm:$0xff] %v2516
        %2605 = vst [vmem:[%s447 + $0x8] sm:$0xff] %v2518
        %2606 = vst [vmem:[%s447 + $0x10] sm:$0xff] %v2521
        %2607 = vst [vmem:[%s447 + $0x18] sm:$0xff] %v2523
        %2608 = vst [vmem:[%s447 + $0x20] sm:$0xff] %v2526
        %2609 = vst [vmem:[%s447 + $0x28] sm:$0xff] %v2528
        %2610 = vst [vmem:[%s447 + $0x30] sm:$0xff] %v2531
        %2611 = vst [vmem:[%s447 + $0x38] sm:$0xff] %v2533
        %2612 = vst [vmem:[%s447 + $0x40] sm:$0xff] %v2536
        %2613 = vst [vmem:[%s447 + $0x48] sm:$0xff] %v2538
        %2614 = vst [vmem:[%s447 + $0x50] sm:$0xff] %v2541
        %2615 = vst [vmem:[%s447 + $0x58] sm:$0xff] %v2543
        %2616 = vst [vmem:[%s447 + $0x60] sm:$0xff] %v2546
        %2617 = vst [vmem:[%s447 + $0x68] sm:$0xff] %v2548
        %2618 = vst [vmem:[%s447 + $0x70] sm:$0xff] %v2551
        %2619 = vst [vmem:[%s447 + $0x78] sm:$0xff] %v2553
        %v2620 = vmax.f32 %v2565, 0.0
        %v2621 = vmax.f32 %v2567, 0.0
        %v2622 = vmax.f32 %v2570, 0.0
        %v2623 = vmax.f32 %v2572, 0.0
        %v2624 = vmax.f32 %v2575, 0.0
        %v2625 = vmax.f32 %v2577, 0.0
        %v2626 = vmax.f32 %v2580, 0.0
        %v2627 = vmax.f32 %v2582, 0.0
        %v2628 = vmax.f32 %v2585, 0.0
        %v2629 = vmax.f32 %v2587, 0.0
        %v2630 = vmax.f32 %v2590, 0.0
        %v2631 = vmax.f32 %v2592, 0.0
        %v2632 = vmax.f32 %v2595, 0.0
        %v2633 = vmax.f32 %v2597, 0.0
        %v2634 = vmax.f32 %v2600, 0.0
        %v2635 = vmax.f32 %v2602, 0.0
        %v2636 = vpack.c.bf16 %v2621, %v2620
        %v2637 = vpack.c.bf16 %v2623, %v2622
        %v2638 = vpack.c.bf16 %v2625, %v2624
        %v2639 = vpack.c.bf16 %v2627, %v2626
        %v2640 = vpack.c.bf16 %v2629, %v2628
        %v2641 = vpack.c.bf16 %v2631, %v2630
        %v2642 = vpack.c.bf16 %v2633, %v2632
        %v2643 = vpack.c.bf16 %v2635, %v2634
        %v2644 = vld [vmem:[%s7] sm:$0xf]
        %v2645 = vld [vmem:[%s7 + $0x4] sm:$0xf]
        %v2646 = vld [vmem:[%s7 + $0x8] sm:$0xf]
        %v2647 = vld [vmem:[%s7 + $0xc] sm:$0xf]
        %v2648 = vld [vmem:[%s8] sm:$0x1]
        %v2650 = vperm.slane %v2648, 0
        %v2656 = vunpack.c.l.b16 %v2644
        %v2657 = vunpack.c.l.b16 %v2645
        %v2658 = vunpack.c.l.b16 %v2646
        %v2659 = vunpack.c.l.b16 %v2647
        %v2660 = vpack.c.b16 %v2657, %v2656
        %v2661 = vpack.c.b16 %v2659, %v2658
        %v2665 = vsel %vm1584, %v2636, 0
        %v2668 = vsel %vm1584, %v2637, 0
        %v2671 = vsel %vm1584, %v2638, 0
        %v2674 = vsel %vm1584, %v2639, 0
        %v2677 = vsel %vm1584, %v2640, 0
        %v2680 = vsel %vm1584, %v2641, 0
        %v2683 = vsel %vm1584, %v2642, 0
        %v2686 = vsel %vm1584, %v2643, 0
        %2688 = vmatpush.bf16.msra.mxu0 0
        %2689 = vmatpush.bf16.msra.mxu0 0
        %2690 = vmatpush.bf16.msra.mxu0 0
        %2691 = vmatpush.bf16.msra.mxu0 0
        %2692 = vmatpush.bf16.msra.mxu0 0
        %2693 = vmatpush.bf16.msra.mxu0 0
        %2694 = vmatpush.bf16.msra.mxu0 %v2661
        %2695 = vmatpush.bf16.msra.mxu0 %v2660
        %2696 = vmatmul.bf16.gmra.mxu0 %v2665
        %v2697 = vpop.f32.mrf.mxu0
        %v2698 = vadd.f32 %v2650, %v2697
        %v2699 = vpop.f32.mrf.mxu0
        %v2700 = vadd.f32 %v2650, %v2699
        %2701 = vmatmul.bf16.gmra.mxu0 %v2668
        %v2702 = vpop.f32.mrf.mxu0
        %v2703 = vadd.f32 %v2650, %v2702
        %v2704 = vpop.f32.mrf.mxu0
        %v2705 = vadd.f32 %v2650, %v2704
        %2706 = vmatmul.bf16.gmra.mxu0 %v2671
        %v2707 = vpop.f32.mrf.mxu0
        %v2708 = vadd.f32 %v2650, %v2707
        %v2709 = vpop.f32.mrf.mxu0
        %v2710 = vadd.f32 %v2650, %v2709
        %2711 = vmatmul.bf16.gmra.mxu0 %v2674
        %v2712 = vpop.f32.mrf.mxu0
        %v2713 = vadd.f32 %v2650, %v2712
        %v2714 = vpop.f32.mrf.mxu0
        %v2715 = vadd.f32 %v2650, %v2714
        %2716 = vmatmul.bf16.gmra.mxu0 %v2677
        %v2717 = vpop.f32.mrf.mxu0
        %v2718 = vadd.f32 %v2650, %v2717
        %v2719 = vpop.f32.mrf.mxu0
        %v2720 = vadd.f32 %v2650, %v2719
        %2721 = vmatmul.bf16.gmra.mxu0 %v2680
        %v2722 = vpop.f32.mrf.mxu0
        %v2723 = vadd.f32 %v2650, %v2722
        %v2724 = vpop.f32.mrf.mxu0
        %v2725 = vadd.f32 %v2650, %v2724
        %2726 = vmatmul.bf16.gmra.mxu0 %v2683
        %v2727 = vpop.f32.mrf.mxu0
        %v2728 = vadd.f32 %v2650, %v2727
        %v2729 = vpop.f32.mrf.mxu0
        %v2730 = vadd.f32 %v2650, %v2729
        %2731 = vmatmul.bf16.gmra.mxu0 %v2686
        %v2732 = vpop.f32.mrf.mxu0
        %v2733 = vadd.f32 %v2650, %v2732
        %v2734 = vpop.f32.mrf.mxu0
        %v2735 = vadd.f32 %v2650, %v2734
        %2736 = vdwg.mxu0
        %v2737 = vpack.c.bf16 %v2698, %v2698
        %v2738 = vpack.c.bf16 %v2700, %v2700
        %v2739 = vpack.c.bf16 %v2703, %v2703
        %v2740 = vpack.c.bf16 %v2705, %v2705
        %v2741 = vpack.c.bf16 %v2708, %v2708
        %v2742 = vpack.c.bf16 %v2710, %v2710
        %v2743 = vpack.c.bf16 %v2713, %v2713
        %v2744 = vpack.c.bf16 %v2715, %v2715
        %v2745 = vpack.c.bf16 %v2718, %v2718
        %v2746 = vpack.c.bf16 %v2720, %v2720
        %v2747 = vpack.c.bf16 %v2723, %v2723
        %v2748 = vpack.c.bf16 %v2725, %v2725
        %v2749 = vpack.c.bf16 %v2728, %v2728
        %v2750 = vpack.c.bf16 %v2730, %v2730
        %v2751 = vpack.c.bf16 %v2733, %v2733
        %v2752 = vpack.c.bf16 %v2735, %v2735
        %2753 = vst.msk [vmem:[%s480] sm:$0xf] %vm2395, %v2737
        %2754 = vst.msk [vmem:[%s480 + $0x4] sm:$0xf] %vm2395, %v2738
        %2755 = vst.msk [vmem:[%s480 + $0x8] sm:$0xf] %vm2395, %v2739
        %2756 = vst.msk [vmem:[%s480 + $0xc] sm:$0xf] %vm2395, %v2740
        %2757 = vst.msk [vmem:[%s480 + $0x10] sm:$0xf] %vm2395, %v2741
        %2758 = vst.msk [vmem:[%s480 + $0x14] sm:$0xf] %vm2395, %v2742
        %2759 = vst.msk [vmem:[%s480 + $0x18] sm:$0xf] %vm2395, %v2743
        %2760 = vst.msk [vmem:[%s480 + $0x1c] sm:$0xf] %vm2395, %v2744
        %2761 = vst.msk [vmem:[%s480 + $0x20] sm:$0xf] %vm2395, %v2745
        %2762 = vst.msk [vmem:[%s480 + $0x24] sm:$0xf] %vm2395, %v2746
        %2763 = vst.msk [vmem:[%s480 + $0x28] sm:$0xf] %vm2395, %v2747
        %2764 = vst.msk [vmem:[%s480 + $0x2c] sm:$0xf] %vm2395, %v2748
        %2765 = vst.msk [vmem:[%s480 + $0x30] sm:$0xf] %vm2395, %v2749
        %2766 = vst.msk [vmem:[%s480 + $0x34] sm:$0xf] %vm2395, %v2750
        %2767 = vst.msk [vmem:[%s480 + $0x38] sm:$0xf] %vm2395, %v2751
        %2768 = vst.msk [vmem:[%s480 + $0x3c] sm:$0xf] %vm2395, %v2752
        %v2769 = vld [vmem:[%s9] sm:$0xf]
        %v2770 = vld [vmem:[%s9 + $0x4] sm:$0xf]
        %v2771 = vld [vmem:[%s9 + $0x8] sm:$0xf]
        %v2772 = vld [vmem:[%s9 + $0xc] sm:$0xf]
        %v2789 = vunpack.c.l.b16 %v2737
        %v2790 = vunpack.c.l.b16 %v2738
        %v2791 = vunpack.c.l.b16 %v2739
        %v2792 = vunpack.c.l.b16 %v2740
        %v2793 = vunpack.c.l.b16 %v2741
        %v2794 = vunpack.c.l.b16 %v2742
        %v2795 = vunpack.c.l.b16 %v2743
        %v2796 = vunpack.c.l.b16 %v2744
        %v2797 = vunpack.c.l.b16 %v2745
        %v2798 = vunpack.c.l.b16 %v2746
        %v2799 = vunpack.c.l.b16 %v2747
        %v2800 = vunpack.c.l.b16 %v2748
        %v2801 = vunpack.c.l.b16 %v2749
        %v2802 = vunpack.c.l.b16 %v2750
        %v2803 = vunpack.c.l.b16 %v2751
        %v2804 = vunpack.c.l.b16 %v2752
        %v2805 = vpack.c.b16 %v2790, %v2789
        %v2806 = vpack.c.b16 %v2792, %v2791
        %v2807 = vpack.c.b16 %v2794, %v2793
        %v2808 = vpack.c.b16 %v2796, %v2795
        %v2809 = vpack.c.b16 %v2798, %v2797
        %v2810 = vpack.c.b16 %v2800, %v2799
        %v2811 = vpack.c.b16 %v2802, %v2801
        %v2812 = vpack.c.b16 %v2804, %v2803
        %v2817 = vunpack.c.l.b16 %v2769
        %v2818 = vunpack.c.l.b16 %v2770
        %v2819 = vunpack.c.l.b16 %v2771
        %v2820 = vunpack.c.l.b16 %v2772
        %v2821 = vpack.c.b16 %v2818, %v2817
        %v2822 = vpack.c.b16 %v2820, %v2819
        %v2826 = vsel %vm1584, %v2805, 0
        %v2829 = vsel %vm1584, %v2806, 0
        %v2832 = vsel %vm1584, %v2807, 0
        %v2835 = vsel %vm1584, %v2808, 0
        %v2838 = vsel %vm1584, %v2809, 0
        %v2841 = vsel %vm1584, %v2810, 0
        %v2844 = vsel %vm1584, %v2811, 0
        %v2847 = vsel %vm1584, %v2812, 0
        %2849 = vmatpush.bf16.msra.mxu0 0
        %2850 = vmatpush.bf16.msra.mxu0 0
        %2851 = vmatpush.bf16.msra.mxu0 0
        %2852 = vmatpush.bf16.msra.mxu0 0
        %2853 = vmatpush.bf16.msra.mxu0 0
        %2854 = vmatpush.bf16.msra.mxu0 0
        %2855 = vmatpush.bf16.msra.mxu0 %v2822
        %2856 = vmatpush.bf16.msra.mxu0 %v2821
        %2857 = vmatmul.bf16.gmra.mxu0 %v2826
        %v2858 = vpop.f32.mrf.mxu0
        %v2859 = vadd.f32 0.0, %v2858
        %v2860 = vpop.f32.mrf.mxu0
        %v2861 = vadd.f32 0.0, %v2860
        %2862 = vmatmul.bf16.gmra.mxu0 %v2829
        %v2863 = vpop.f32.mrf.mxu0
        %v2864 = vadd.f32 0.0, %v2863
        %v2865 = vpop.f32.mrf.mxu0
        %v2866 = vadd.f32 0.0, %v2865
        %2867 = vmatmul.bf16.gmra.mxu0 %v2832
        %v2868 = vpop.f32.mrf.mxu0
        %v2869 = vadd.f32 0.0, %v2868
        %v2870 = vpop.f32.mrf.mxu0
        %v2871 = vadd.f32 0.0, %v2870
        %2872 = vmatmul.bf16.gmra.mxu0 %v2835
        %v2873 = vpop.f32.mrf.mxu0
        %v2874 = vadd.f32 0.0, %v2873
        %v2875 = vpop.f32.mrf.mxu0
        %v2876 = vadd.f32 0.0, %v2875
        %2877 = vmatmul.bf16.gmra.mxu0 %v2838
        %v2878 = vpop.f32.mrf.mxu0
        %v2879 = vadd.f32 0.0, %v2878
        %v2880 = vpop.f32.mrf.mxu0
        %v2881 = vadd.f32 0.0, %v2880
        %2882 = vmatmul.bf16.gmra.mxu0 %v2841
        %v2883 = vpop.f32.mrf.mxu0
        %v2884 = vadd.f32 0.0, %v2883
        %v2885 = vpop.f32.mrf.mxu0
        %v2886 = vadd.f32 0.0, %v2885
        %2887 = vmatmul.bf16.gmra.mxu0 %v2844
        %v2888 = vpop.f32.mrf.mxu0
        %v2889 = vadd.f32 0.0, %v2888
        %v2890 = vpop.f32.mrf.mxu0
        %v2891 = vadd.f32 0.0, %v2890
        %2892 = vmatmul.bf16.gmra.mxu0 %v2847
        %v2893 = vpop.f32.mrf.mxu0
        %v2894 = vadd.f32 0.0, %v2893
        %v2895 = vpop.f32.mrf.mxu0
        %v2896 = vadd.f32 0.0, %v2895
        %2897 = vdwg.mxu0
        %2898 = vst [vmem:[%s461] sm:$0xff] %v2859
        %2899 = vst [vmem:[%s461 + $0x8] sm:$0xff] %v2861
        %2900 = vst [vmem:[%s461 + $0x10] sm:$0xff] %v2864
        %2901 = vst [vmem:[%s461 + $0x18] sm:$0xff] %v2866
        %2902 = vst [vmem:[%s461 + $0x20] sm:$0xff] %v2869
        %2903 = vst [vmem:[%s461 + $0x28] sm:$0xff] %v2871
        %2904 = vst [vmem:[%s461 + $0x30] sm:$0xff] %v2874
        %2905 = vst [vmem:[%s461 + $0x38] sm:$0xff] %v2876
        %2906 = vst [vmem:[%s461 + $0x40] sm:$0xff] %v2879
        %2907 = vst [vmem:[%s461 + $0x48] sm:$0xff] %v2881
        %2908 = vst [vmem:[%s461 + $0x50] sm:$0xff] %v2884
        %2909 = vst [vmem:[%s461 + $0x58] sm:$0xff] %v2886
        %2910 = vst [vmem:[%s461 + $0x60] sm:$0xff] %v2889
        %2911 = vst [vmem:[%s461 + $0x68] sm:$0xff] %v2891
        %2912 = vst [vmem:[%s461 + $0x70] sm:$0xff] %v2894
        %2913 = vst [vmem:[%s461 + $0x78] sm:$0xff] %v2896
        %s2914 = smul.u32 16, %s31
        %p2915 = scmp.lt.s32.totalorder %s2914, 31
        %s2916 = scalar_select %p2915, %s2914, 31
        %s2917 = smul.addr %s2916, 4
        %s2918 = scalar_lea.vmem %s10, %s2917
        %s2919 = sand.u32 %s280, 1
        %s2920 = scalar_lea.sflag [#allocation3], %s2919
        %s2921 = sand.u32 %s280, 1
        %s2922 = smul.addr %s2921, 128
        %s2923 = scalar_lea.vmem [#allocation2], %s2922
        %s2924 = smul.u32 16, %s31
        %p2925 = scmp.lt.s32.totalorder %s2924, 31
        %s2926 = scalar_select %p2925, %s2924, 31
        %s2927 = smul.addr %s2926, 4
        %s2928 = scalar_lea.vmem %s12, %s2927
        %s2929 = sand.u32 %s332, 1
        %s2930 = scalar_lea.sflag [#allocation5], %s2929
        %s2931 = sand.u32 %s332, 1
        %s2932 = smul.addr %s2931, 128
        %s2933 = scalar_lea.vmem [#allocation4], %s2932
        // Predicated region
        $region61: #{tpu_custom_call.1} parent=59 // pred_check
          %p2934 = pneg %p264
        $region62: #{tpu_custom_call.1} parent=59 // pred_check_branch
          %2936 = sbr.rel (%p2934) target = $region64
        $region63: #{tpu_custom_call.1} parent=59 // pred_region
          %s2937 = smul.u32 16, %s31
        $region64: #{tpu_custom_call.1} parent=59 // pred_fallthru
          _
        // Predicated region
        $region65: #{tpu_custom_call.1} parent=59 // pred_check
          %p2938 = pneg %p290
        $region66: #{tpu_custom_call.1} parent=59 // pred_check_branch
          %2940 = sbr.rel (%p2938) target = $region68
        $region67: #{tpu_custom_call.1} parent=59 // pred_region
          %s2941 = smul.u32 16, %s31
          %2943 = vsyncadd %s2920, 0
          %s2944 = smul.addr %s2941, 8
          %s2945 = scalar_lea.hbm %s11, %s2944
          %s2946 = sshll.u32 %s2923, 4
          %s2947 = int_to_ptr.vmem [resolvable:$true] %s2946
          %s2948 = sshll.u32 %s2945, 4
          %s2949 = int_to_ptr.hbm [resolvable:$true] %s2948
          %2954 = dma.vmem_to_hbm [thread:$0]  %s2947, 2048, %s2949, %s2920, 128, 128, 8
        $region68: #{tpu_custom_call.1} parent=59 // pred_fallthru
          _
        // Predicated region
        $region69: #{tpu_custom_call.1} parent=59 // pred_check
          %p2955 = pneg %p316
        $region70: #{tpu_custom_call.1} parent=59 // pred_check_branch
          %2957 = sbr.rel (%p2955) target = $region72
        $region71: #{tpu_custom_call.1} parent=59 // pred_region
          %s2958 = smul.u32 16, %s31
        $region72: #{tpu_custom_call.1} parent=59 // pred_fallthru
          _
        // Predicated region
        $region73: #{tpu_custom_call.1} parent=59 // pred_check
          %p2959 = pneg %p342
        $region74: #{tpu_custom_call.1} parent=59 // pred_check_branch
          %2961 = sbr.rel (%p2959) target = $region76
        $region75: #{tpu_custom_call.1} parent=59 // pred_region
          %s2962 = smul.u32 16, %s31
          %2964 = vsyncadd %s2930, 0
          %s2965 = smul.addr %s2962, 8
          %s2966 = scalar_lea.hbm %s13, %s2965
          %s2967 = sshll.u32 %s2933, 4
          %s2968 = int_to_ptr.vmem [resolvable:$true] %s2967
          %s2969 = sshll.u32 %s2966, 4
          %s2970 = int_to_ptr.hbm [resolvable:$true] %s2969
          %2975 = dma.vmem_to_hbm [thread:$0]  %s2968, 2048, %s2970, %s2930, 128, 128, 8
        $region76: #{tpu_custom_call.1} parent=59 // pred_fallthru
          _
      $region60: #{tpu_custom_call.1} parent=5 // pred_fallthru
        _
      %p2976 = scmp.le.s32.totalorder 2, %s26
      // Predicated region
      $region77: #{tpu_custom_call.1} parent=5 // pred_check
        %p2977 = pneg %p2976
      $region78: #{tpu_custom_call.1} parent=5 // pred_check_branch
        %2979 = sbr.rel (%p2977) target = $region80
      $region79: #{tpu_custom_call.1} parent=5 // pred_region
        %s2980 = ssub.s32 %s26, 2
        // Predicated region
        $region81: #{tpu_custom_call.1} parent=79 // pred_check
          %p2981 = pneg %p270
        $region82: #{tpu_custom_call.1} parent=79 // pred_check_branch
          %2983 = sbr.rel (%p2981) target = $region84
        $region83: #{tpu_custom_call.1} parent=79 // pred_region
          %s2984 = smul.u32 16, %s32
          %p2985 = scmp.lt.s32.totalorder %s2984, 31
          %s2986 = scalar_select %p2985, %s2984, 31
          %s2987 = smul.addr %s2986, 4
          %s2988 = scalar_lea.vmem %s10, %s2987
        $region84: #{tpu_custom_call.1} parent=79 // pred_fallthru
          _
        // Predicated region
        $region85: #{tpu_custom_call.1} parent=79 // pred_check
          %p2989 = pneg %p296
        $region86: #{tpu_custom_call.1} parent=79 // pred_check_branch
          %2991 = sbr.rel (%p2989) target = $region88
        $region87: #{tpu_custom_call.1} parent=79 // pred_region
          %s2992 = sand.u32 %s281, 1
          %s2993 = scalar_lea.sflag [#allocation3], %s2992
          %s2994 = sand.u32 %s281, 1
          %s2995 = smul.addr %s2994, 128
          %s2996 = scalar_lea.vmem [#allocation2], %s2995
          %2998 = dma.done %s2993, 2048
        $region88: #{tpu_custom_call.1} parent=79 // pred_fallthru
          _
        // Predicated region
        $region89: #{tpu_custom_call.1} parent=79 // pred_check
          %p2999 = pneg %p322
        $region90: #{tpu_custom_call.1} parent=79 // pred_check_branch
          %3001 = sbr.rel (%p2999) target = $region92
        $region91: #{tpu_custom_call.1} parent=79 // pred_region
          %s3002 = smul.u32 16, %s32
          %p3003 = scmp.lt.s32.totalorder %s3002, 31
          %s3004 = scalar_select %p3003, %s3002, 31
          %s3005 = smul.addr %s3004, 4
          %s3006 = scalar_lea.vmem %s12, %s3005
        $region92: #{tpu_custom_call.1} parent=79 // pred_fallthru
          _
        // Predicated region
        $region93: #{tpu_custom_call.1} parent=79 // pred_check
          %p3007 = pneg %p348
        $region94: #{tpu_custom_call.1} parent=79 // pred_check_branch
          %3009 = sbr.rel (%p3007) target = $region96
        $region95: #{tpu_custom_call.1} parent=79 // pred_region
          %s3010 = sand.u32 %s333, 1
          %s3011 = scalar_lea.sflag [#allocation5], %s3010
          %s3012 = sand.u32 %s333, 1
          %s3013 = smul.addr %s3012, 128
          %s3014 = scalar_lea.vmem [#allocation4], %s3013
          %3016 = dma.done %s3011, 2048
        $region96: #{tpu_custom_call.1} parent=79 // pred_fallthru
          _
      $region80: #{tpu_custom_call.1} parent=5 // pred_fallthru
        _
    $region6: #{tpu_custom_call.1} parent=1 // loop_footer
      %s30 = sadd.s32 1, %s26
    $region7: #{tpu_custom_call.1} parent=1 // loop_footer_branch
      %25 = sbr.rel target = $region3
    $region8: #{tpu_custom_call.1} parent=1 // loop_exit
      _
    %3017 = vsyncpa [#allocation3], 1
    %s3018 = scalar_lea.sflag [#allocation3], 1
    %3019 = vsyncpa %s3018, 1
    %3020 = vsyncpa [#allocation5], 1
    %s3021 = scalar_lea.sflag [#allocation5], 1
    %3022 = vsyncpa %s3021, 1

// kernel: tpu_custom_call.1
$region0: #{tpu_custom_call.1}
  #allocation0 [shape = 'u32[]', space=smem, size = 0x4, offset = 0x4, fixed_abs, tag = 'smem constant byte address 0x4 - core index']
  #allocation1 [shape = 'u32[72,128]{1,0:T(1,128)}', space=vmem, size = 0x9000, scoped, tag = 'internal scratch']
  %s0 = inlined_call_operand.vmem [shape: f32[256,1568], index: 0, kind: input, shape index: {}]
  %s1 = inlined_call_operand.vmem [shape: bf16[1568,32], index: 1, kind: input, shape index: {}]
  %s2 = inlined_call_operand.vmem [shape: f32[1,32], index: 2, kind: input, shape index: {}]
  %s3 = inlined_call_operand.vmem [shape: bf16[32,32], index: 3, kind: input, shape index: {}]
  %s4 = inlined_call_operand.vmem [shape: f32[1,32], index: 4, kind: input, shape index: {}]
  %s5 = inlined_call_operand.vmem [shape: bf16[32,160], index: 5, kind: input, shape index: {}]
  %s6 = inlined_call_operand.vmem [shape: f32[1,160], index: 6, kind: input, shape index: {}]
  %s7 = inlined_call_operand.vmem [shape: bf16[32,32], index: 7, kind: input, shape index: {}]
  %s8 = inlined_call_operand.vmem [shape: f32[1,32], index: 8, kind: input, shape index: {}]
  %s9 = inlined_call_operand.vmem [shape: bf16[32,128], index: 9, kind: input, shape index: {}]
  %s10 = inlined_call_operand.vmem [shape: bf16[256,32], index: 10, kind: output, shape index: {0}]
  %s11 = inlined_call_operand.hbm [shape: f32[256,128], index: 11, kind: output, shape index: {1}]
  %s12 = inlined_call_operand.vmem [shape: bf16[256,32], index: 12, kind: output, shape index: {2}]
  %s13 = inlined_call_operand.hbm [shape: f32[256,128], index: 13, kind: output, shape index: {3}]
  %14 = xla_tuple %s10, %s11, %s12, %s13
  %s15 = sld [smem:[#allocation0]]
  $region97: #{tpu_custom_call.1} parent=0
    _
  %s17 = ssub.s32 1, %s15
  %s18 = scalar_select 0, %s17, %s15
  $region1: #{tpu_custom_call.1} parent=0
    #allocation2 [shape = 'u8[131072]{0}', space=vmem, size = 0x20000, scoped, tag = 'output window, operand 1']
    #allocation3 [shape = 's32[2]{0}', space=sflag, size = 0x8, scoped, tag = 'scoped memory for tpu_custom_call.1']
    #allocation4 [shape = 'u8[131072]{0}', space=vmem, size = 0x20000, scoped, tag = 'output window, operand 3']
    #allocation5 [shape = 's32[2]{0}', space=sflag, size = 0x8, scoped, tag = 'scoped memory for tpu_custom_call.1']
    %19 = vsyncpa [#allocation3], 0
    %s20 = scalar_lea.sflag [#allocation3], 1
    %21 = vsyncpa %s20, 0
    %22 = vsyncpa [#allocation5], 0
    %s23 = scalar_lea.sflag [#allocation5], 1
    %24 = vsyncpa %s23, 0
    loop: start=0, step=1, limit=4
    $region2: #{tpu_custom_call.1} parent=1 // loop_pre_header
      _
    $region3: #{tpu_custom_call.1} parent=1 // loop_header
      %s26 = sphi 0, %s30
      %p27 = scmp.ge.s32.totalorder %s26, 4
      %s36 = sphi 0, %s38
      %s39 = sphi 0, %s36
      %s40 = sphi 0, %s39
      %s56 = sphi 0, %s40
      %s60 = sphi 0, %s60
      %s62 = sphi 0, %s60
      %s63 = sphi 0, %s62
      %s77 = sphi 0, %s63
      %s81 = sphi 0, %s81
      %s83 = sphi 0, %s81
      %s84 = sphi 0, %s83
      %s98 = sphi 0, %s84
      %s102 = sphi 0, %s102
      %s104 = sphi 0, %s102
      %s105 = sphi 0, %s104
      %s119 = sphi 0, %s105
      %s123 = sphi 0, %s123
      %s125 = sphi 0, %s123
      %s126 = sphi 0, %s125
      %s140 = sphi 0, %s126
      %s144 = sphi 0, %s144
      %s146 = sphi 0, %s144
      %s147 = sphi 0, %s146
      %s161 = sphi 0, %s147
      %s165 = sphi 0, %s165
      %s167 = sphi 0, %s165
      %s168 = sphi 0, %s167
      %s182 = sphi 0, %s168
      %s186 = sphi 0, %s186
      %s188 = sphi 0, %s186
      %s189 = sphi 0, %s188
      %s203 = sphi 0, %s189
      %s207 = sphi 0, %s207
      %s209 = sphi 0, %s207
      %s210 = sphi 0, %s209
      %s224 = sphi 0, %s210
      %s228 = sphi 0, %s228
      %s230 = sphi 0, %s228
      %s231 = sphi 0, %s230
      %s245 = sphi 0, %s231
      %s251 = sphi 0, %s253
      %s254 = sphi 0, %s251
      %s255 = sphi 0, %s254
      %s271 = sphi 0, %s255
      %s277 = sphi 0, %s279
      %s280 = sphi 0, %s277
      %s281 = sphi 0, %s280
      %s297 = sphi 0, %s281
      %s303 = sphi 0, %s305
      %s306 = sphi 0, %s303
      %s307 = sphi 0, %s306
      %s323 = sphi 0, %s307
      %s329 = sphi 0, %s331
      %s332 = sphi 0, %s329
      %s333 = sphi 0, %s332
      %s349 = sphi 0, %s333
    $region4: #{tpu_custom_call.1} parent=1 // loop_header_branch
      %29 = sbr.rel (%p27) target = $region8
    $region5: #{tpu_custom_call.1} parent=1 // loop_body
      %s31 = ssub.s32 %s26, 1
      %s32 = ssub.s32 %s26, 2
      %s33 = sadd.s32 %s26, 1
      %s34 = ssub.s32 %s26, %s33
      %p35 = scmp.eq.s32.totalorder %s34, 0
      %s37 = sadd.s32 %s36, 1
      %s38 = scalar_select %p35, %s36, %s37
      %p41 = pneg %p35
      %p42 = scmp.eq.s32.totalorder %s26, 1
      %p43 = por %p41, %p42
      %p44 = scmp.ne.s32.totalorder %s36, %s39
      %p45 = scmp.eq.s32.totalorder %s26, 0
      %p46 = por %p44, %p45
      %p47 = scmp.ne.s32.totalorder %s36, %s39
      %p48 = scmp.eq.s32.totalorder %s31, 1
      %p49 = por %p47, %p48
      %p50 = scmp.ne.s32.totalorder %s39, %s40
      %p51 = scmp.eq.s32.totalorder %s31, 0
      %p52 = por %p50, %p51
      %p53 = scmp.ne.s32.totalorder %s39, %s40
      %p54 = scmp.eq.s32.totalorder %s32, 1
      %p55 = por %p53, %p54
      %p57 = scmp.ne.s32.totalorder %s40, %s56
      %p58 = scmp.eq.s32.totalorder %s32, 0
      %p59 = por %p57, %p58
      %s61 = sadd.s32 %s60, 1
      %p64 = scmp.eq.s32.totalorder %s26, 1
      %p65 = scmp.ne.s32.totalorder %s60, %s62
      %p66 = scmp.eq.s32.totalorder %s26, 0
      %p67 = por %p65, %p66
      %p68 = scmp.ne.s32.totalorder %s60, %s62
      %p69 = scmp.eq.s32.totalorder %s31, 1
      %p70 = por %p68, %p69
      %p71 = scmp.ne.s32.totalorder %s62, %s63
      %p72 = scmp.eq.s32.totalorder %s31, 0
      %p73 = por %p71, %p72
      %p74 = scmp.ne.s32.totalorder %s62, %s63
      %p75 = scmp.eq.s32.totalorder %s32, 1
      %p76 = por %p74, %p75
      %p78 = scmp.ne.s32.totalorder %s63, %s77
      %p79 = scmp.eq.s32.totalorder %s32, 0
      %p80 = por %p78, %p79
      %s82 = sadd.s32 %s81, 1
      %p85 = scmp.eq.s32.totalorder %s26, 1
      %p86 = scmp.ne.s32.totalorder %s81, %s83
      %p87 = scmp.eq.s32.totalorder %s26, 0
      %p88 = por %p86, %p87
      %p89 = scmp.ne.s32.totalorder %s81, %s83
      %p90 = scmp.eq.s32.totalorder %s31, 1
      %p91 = por %p89, %p90
      %p92 = scmp.ne.s32.totalorder %s83, %s84
      %p93 = scmp.eq.s32.totalorder %s31, 0
      %p94 = por %p92, %p93
      %p95 = scmp.ne.s32.totalorder %s83, %s84
      %p96 = scmp.eq.s32.totalorder %s32, 1
      %p97 = por %p95, %p96
      %p99 = scmp.ne.s32.totalorder %s84, %s98
      %p100 = scmp.eq.s32.totalorder %s32, 0
      %p101 = por %p99, %p100
      %s103 = sadd.s32 %s102, 1
      %p106 = scmp.eq.s32.totalorder %s26, 1
      %p107 = scmp.ne.s32.totalorder %s102, %s104
      %p108 = scmp.eq.s32.totalorder %s26, 0
      %p109 = por %p107, %p108
      %p110 = scmp.ne.s32.totalorder %s102, %s104
      %p111 = scmp.eq.s32.totalorder %s31, 1
      %p112 = por %p110, %p111
      %p113 = scmp.ne.s32.totalorder %s104, %s105
      %p114 = scmp.eq.s32.totalorder %s31, 0
      %p115 = por %p113, %p114
      %p116 = scmp.ne.s32.totalorder %s104, %s105
      %p117 = scmp.eq.s32.totalorder %s32, 1
      %p118 = por %p116, %p117
      %p120 = scmp.ne.s32.totalorder %s105, %s119
      %p121 = scmp.eq.s32.totalorder %s32, 0
      %p122 = por %p120, %p121
      %s124 = sadd.s32 %s123, 1
      %p127 = scmp.eq.s32.totalorder %s26, 1
      %p128 = scmp.ne.s32.totalorder %s123, %s125
      %p129 = scmp.eq.s32.totalorder %s26, 0
      %p130 = por %p128, %p129
      %p131 = scmp.ne.s32.totalorder %s123, %s125
      %p132 = scmp.eq.s32.totalorder %s31, 1
      %p133 = por %p131, %p132
      %p134 = scmp.ne.s32.totalorder %s125, %s126
      %p135 = scmp.eq.s32.totalorder %s31, 0
      %p136 = por %p134, %p135
      %p137 = scmp.ne.s32.totalorder %s125, %s126
      %p138 = scmp.eq.s32.totalorder %s32, 1
      %p139 = por %p137, %p138
      %p141 = scmp.ne.s32.totalorder %s126, %s140
      %p142 = scmp.eq.s32.totalorder %s32, 0
      %p143 = por %p141, %p142
      %s145 = sadd.s32 %s144, 1
      %p148 = scmp.eq.s32.totalorder %s26, 1
      %p149 = scmp.ne.s32.totalorder %s144, %s146
      %p150 = scmp.eq.s32.totalorder %s26, 0
      %p151 = por %p149, %p150
      %p152 = scmp.ne.s32.totalorder %s144, %s146
      %p153 = scmp.eq.s32.totalorder %s31, 1
      %p154 = por %p152, %p153
      %p155 = scmp.ne.s32.totalorder %s146, %s147
      %p156 = scmp.eq.s32.totalorder %s31, 0
      %p157 = por %p155, %p156
      %p158 = scmp.ne.s32.totalorder %s146, %s147
      %p159 = scmp.eq.s32.totalorder %s32, 1
      %p160 = por %p158, %p159
      %p162 = scmp.ne.s32.totalorder %s147, %s161
      %p163 = scmp.eq.s32.totalorder %s32, 0
      %p164 = por %p162, %p163
      %s166 = sadd.s32 %s165, 1
      %p169 = scmp.eq.s32.totalorder %s26, 1
      %p170 = scmp.ne.s32.totalorder %s165, %s167
      %p171 = scmp.eq.s32.totalorder %s26, 0
      %p172 = por %p170, %p171
      %p173 = scmp.ne.s32.totalorder %s165, %s167
      %p174 = scmp.eq.s32.totalorder %s31, 1
      %p175 = por %p173, %p174
      %p176 = scmp.ne.s32.totalorder %s167, %s168
      %p177 = scmp.eq.s32.totalorder %s31, 0
      %p178 = por %p176, %p177
      %p179 = scmp.ne.s32.totalorder %s167, %s168
      %p180 = scmp.eq.s32.totalorder %s32, 1
      %p181 = por %p179, %p180
      %p183 = scmp.ne.s32.totalorder %s168, %s182
      %p184 = scmp.eq.s32.totalorder %s32, 0
      %p185 = por %p183, %p184
      %s187 = sadd.s32 %s186, 1
      %p190 = scmp.eq.s32.totalorder %s26, 1
      %p191 = scmp.ne.s32.totalorder %s186, %s188
      %p192 = scmp.eq.s32.totalorder %s26, 0
      %p193 = por %p191, %p192
      %p194 = scmp.ne.s32.totalorder %s186, %s188
      %p195 = scmp.eq.s32.totalorder %s31, 1
      %p196 = por %p194, %p195
      %p197 = scmp.ne.s32.totalorder %s188, %s189
      %p198 = scmp.eq.s32.totalorder %s31, 0
      %p199 = por %p197, %p198
      %p200 = scmp.ne.s32.totalorder %s188, %s189
      %p201 = scmp.eq.s32.totalorder %s32, 1
      %p202 = por %p200, %p201
      %p204 = scmp.ne.s32.totalorder %s189, %s203
      %p205 = scmp.eq.s32.totalorder %s32, 0
      %p206 = por %p204, %p205
      %s208 = sadd.s32 %s207, 1
      %p211 = scmp.eq.s32.totalorder %s26, 1
      %p212 = scmp.ne.s32.totalorder %s207, %s209
      %p213 = scmp.eq.s32.totalorder %s26, 0
      %p214 = por %p212, %p213
      %p215 = scmp.ne.s32.totalorder %s207, %s209
      %p216 = scmp.eq.s32.totalorder %s31, 1
      %p217 = por %p215, %p216
      %p218 = scmp.ne.s32.totalorder %s209, %s210
      %p219 = scmp.eq.s32.totalorder %s31, 0
      %p220 = por %p218, %p219
      %p221 = scmp.ne.s32.totalorder %s209, %s210
      %p222 = scmp.eq.s32.totalorder %s32, 1
      %p223 = por %p221, %p222
      %p225 = scmp.ne.s32.totalorder %s210, %s224
      %p226 = scmp.eq.s32.totalorder %s32, 0
      %p227 = por %p225, %p226
      %s229 = sadd.s32 %s228, 1
      %p232 = scmp.eq.s32.totalorder %s26, 1
      %p233 = scmp.ne.s32.totalorder %s228, %s230
      %p234 = scmp.eq.s32.totalorder %s26, 0
      %p235 = por %p233, %p234
      %p236 = scmp.ne.s32.totalorder %s228, %s230
      %p237 = scmp.eq.s32.totalorder %s31, 1
      %p238 = por %p236, %p237
      %p239 = scmp.ne.s32.totalorder %s230, %s231
      %p240 = scmp.eq.s32.totalorder %s31, 0
      %p241 = por %p239, %p240
      %p242 = scmp.ne.s32.totalorder %s230, %s231
      %p243 = scmp.eq.s32.totalorder %s32, 1
      %p244 = por %p242, %p243
      %p246 = scmp.ne.s32.totalorder %s231, %s245
      %p247 = scmp.eq.s32.totalorder %s32, 0
      %p248 = por %p246, %p247
      %s249 = ssub.s32 %s26, %s33
      %p250 = scmp.eq.s32.totalorder %s249, 0
      %s252 = sadd.s32 %s251, 1
      %s253 = scalar_select %p250, %s251, %s252
      %p256 = pneg %p250
      %p257 = scmp.eq.s32.totalorder %s26, 1
      %p258 = por %p256, %p257
      %p259 = scmp.ne.s32.totalorder %s251, %s254
      %p260 = scmp.eq.s32.totalorder %s26, 0
      %p261 = por %p259, %p260
      %p262 = scmp.ne.s32.totalorder %s251, %s254
      %p263 = scmp.eq.s32.totalorder %s31, 1
      %p264 = por %p262, %p263
      %p265 = scmp.ne.s32.totalorder %s254, %s255
      %p266 = scmp.eq.s32.totalorder %s31, 0
      %p267 = por %p265, %p266
      %p268 = scmp.ne.s32.totalorder %s254, %s255
      %p269 = scmp.eq.s32.totalorder %s32, 1
      %p270 = por %p268, %p269
      %p272 = scmp.ne.s32.totalorder %s255, %s271
      %p273 = scmp.eq.s32.totalorder %s32, 0
      %p274 = por %p272, %p273
      %s275 = ssub.s32 %s26, %s33
      %p276 = scmp.eq.s32.totalorder %s275, 0
      %s278 = sadd.s32 %s277, 1
      %s279 = scalar_select %p276, %s277, %s278
      %p282 = pneg %p276
      %p283 = scmp.eq.s32.totalorder %s26, 1
      %p284 = por %p282, %p283
      %p285 = scmp.ne.s32.totalorder %s277, %s280
      %p286 = scmp.eq.s32.totalorder %s26, 0
      %p287 = por %p285, %p286
      %p288 = scmp.ne.s32.totalorder %s277, %s280
      %p289 = scmp.eq.s32.totalorder %s31, 1
      %p290 = por %p288, %p289
      %p291 = scmp.ne.s32.totalorder %s280, %s281
      %p292 = scmp.eq.s32.totalorder %s31, 0
      %p293 = por %p291, %p292
      %p294 = scmp.ne.s32.totalorder %s280, %s281
      %p295 = scmp.eq.s32.totalorder %s32, 1
      %p296 = por %p294, %p295
      %p298 = scmp.ne.s32.totalorder %s281, %s297
      %p299 = scmp.eq.s32.totalorder %s32, 0
      %p300 = por %p298, %p299
      %s301 = ssub.s32 %s26, %s33
      %p302 = scmp.eq.s32.totalorder %s301, 0
      %s304 = sadd.s32 %s303, 1
      %s305 = scalar_select %p302, %s303, %s304
      %p308 = pneg %p302
      %p309 = scmp.eq.s32.totalorder %s26, 1
      %p310 = por %p308, %p309
      %p311 = scmp.ne.s32.totalorder %s303, %s306
      %p312 = scmp.eq.s32.totalorder %s26, 0
      %p313 = por %p311, %p312
      %p314 = scmp.ne.s32.totalorder %s303, %s306
      %p315 = scmp.eq.s32.totalorder %s31, 1
      %p316 = por %p314, %p315
      %p317 = scmp.ne.s32.totalorder %s306, %s307
      %p318 = scmp.eq.s32.totalorder %s31, 0
      %p319 = por %p317, %p318
      %p320 = scmp.ne.s32.totalorder %s306, %s307
      %p321 = scmp.eq.s32.totalorder %s32, 1
      %p322 = por %p320, %p321
      %p324 = scmp.ne.s32.totalorder %s307, %s323
      %p325 = scmp.eq.s32.totalorder %s32, 0
      %p326 = por %p324, %p325
      %s327 = ssub.s32 %s26, %s33
      %p328 = scmp.eq.s32.totalorder %s327, 0
      %s330 = sadd.s32 %s329, 1
      %s331 = scalar_select %p328, %s329, %s330
      %p334 = pneg %p328
      %p335 = scmp.eq.s32.totalorder %s26, 1
      %p336 = por %p334, %p335
      %p337 = scmp.ne.s32.totalorder %s329, %s332
      %p338 = scmp.eq.s32.totalorder %s26, 0
      %p339 = por %p337, %p338
      %p340 = scmp.ne.s32.totalorder %s329, %s332
      %p341 = scmp.eq.s32.totalorder %s31, 1
      %p342 = por %p340, %p341
      %p343 = scmp.ne.s32.totalorder %s332, %s333
      %p344 = scmp.eq.s32.totalorder %s31, 0
      %p345 = por %p343, %p344
      %p346 = scmp.ne.s32.totalorder %s332, %s333
      %p347 = scmp.eq.s32.totalorder %s32, 1
      %p348 = por %p346, %p347
      %p350 = scmp.ne.s32.totalorder %s333, %s349
      %p351 = scmp.eq.s32.totalorder %s32, 0
      %p352 = por %p350, %p351
      %p353 = scmp.le.s32.totalorder 1, %s26
      %p354 = scmp.lt.s32.totalorder %s26, 3
      %p355 = pnand %p353, %p354
      %p356 = pneg %p355
      // Predicated region
      $region9: #{tpu_custom_call.1} parent=5 // pred_check
        _
      $region10: #{tpu_custom_call.1} parent=5 // pred_check_branch
        %358 = sbr.rel (%p355) target = $region12
      $region11: #{tpu_custom_call.1} parent=5 // pred_region
        %s359 = ssub.s32 %s26, 1
        // Predicated region
        $region13: #{tpu_custom_call.1} parent=11 // pred_check
          %p360 = pneg %p73
        $region14: #{tpu_custom_call.1} parent=11 // pred_check_branch
          %362 = sbr.rel (%p360) target = $region16
        $region15: #{tpu_custom_call.1} parent=11 // pred_region
          _
        $region16: #{tpu_custom_call.1} parent=11 // pred_fallthru
          _
        // Predicated region
        $region17: #{tpu_custom_call.1} parent=11 // pred_check
          %p363 = pneg %p94
        $region18: #{tpu_custom_call.1} parent=11 // pred_check_branch
          %365 = sbr.rel (%p363) target = $region20
        $region19: #{tpu_custom_call.1} parent=11 // pred_region
          _
        $region20: #{tpu_custom_call.1} parent=11 // pred_fallthru
          _
        // Predicated region
        $region21: #{tpu_custom_call.1} parent=11 // pred_check
          %p366 = pneg %p115
        $region22: #{tpu_custom_call.1} parent=11 // pred_check_branch
          %368 = sbr.rel (%p366) target = $region24
        $region23: #{tpu_custom_call.1} parent=11 // pred_region
          _
        $region24: #{tpu_custom_call.1} parent=11 // pred_fallthru
          _
        // Predicated region
        $region25: #{tpu_custom_call.1} parent=11 // pred_check
          %p369 = pneg %p136
        $region26: #{tpu_custom_call.1} parent=11 // pred_check_branch
          %371 = sbr.rel (%p369) target = $region28
        $region27: #{tpu_custom_call.1} parent=11 // pred_region
          _
        $region28: #{tpu_custom_call.1} parent=11 // pred_fallthru
          _
        // Predicated region
        $region29: #{tpu_custom_call.1} parent=11 // pred_check
          %p372 = pneg %p157
        $region30: #{tpu_custom_call.1} parent=11 // pred_check_branch
          %374 = sbr.rel (%p372) target = $region32
        $region31: #{tpu_custom_call.1} parent=11 // pred_region
          _
        $region32: #{tpu_custom_call.1} parent=11 // pred_fallthru
          _
        // Predicated region
        $region33: #{tpu_custom_call.1} parent=11 // pred_check
          %p375 = pneg %p178
        $region34: #{tpu_custom_call.1} parent=11 // pred_check_branch
          %377 = sbr.rel (%p375) target = $region36
        $region35: #{tpu_custom_call.1} parent=11 // pred_region
          _
        $region36: #{tpu_custom_call.1} parent=11 // pred_fallthru
          _
        // Predicated region
        $region37: #{tpu_custom_call.1} parent=11 // pred_check
          %p378 = pneg %p199
        $region38: #{tpu_custom_call.1} parent=11 // pred_check_branch
          %380 = sbr.rel (%p378) target = $region40
        $region39: #{tpu_custom_call.1} parent=11 // pred_region
          _
        $region40: #{tpu_custom_call.1} parent=11 // pred_fallthru
          _
        // Predicated region
        $region41: #{tpu_custom_call.1} parent=11 // pred_check
          %p381 = pneg %p220
        $region42: #{tpu_custom_call.1} parent=11 // pred_check_branch
          %383 = sbr.rel (%p381) target = $region44
        $region43: #{tpu_custom_call.1} parent=11 // pred_region
          _
        $region44: #{tpu_custom_call.1} parent=11 // pred_fallthru
          _
        // Predicated region
        $region45: #{tpu_custom_call.1} parent=11 // pred_check
          %p384 = pneg %p241
        $region46: #{tpu_custom_call.1} parent=11 // pred_check_branch
          %386 = sbr.rel (%p384) target = $region48
        $region47: #{tpu_custom_call.1} parent=11 // pred_region
          _
        $region48: #{tpu_custom_call.1} parent=11 // pred_fallthru
          _
      $region12: #{tpu_custom_call.1} parent=5 // pred_fallthru
        _
      %p387 = scmp.lt.s32.totalorder %s26, 2
      // Predicated region
      $region49: #{tpu_custom_call.1} parent=5 // pred_check
        %p388 = pneg %p387
      $region50: #{tpu_custom_call.1} parent=5 // pred_check_branch
        %390 = sbr.rel (%p388) target = $region52
      $region51: #{tpu_custom_call.1} parent=5 // pred_region
        // Predicated region
        $region53: #{tpu_custom_call.1} parent=51 // pred_check
          %p391 = pneg %p46
        $region54: #{tpu_custom_call.1} parent=51 // pred_check_branch
          %393 = sbr.rel (%p391) target = $region56
        $region55: #{tpu_custom_call.1} parent=51 // pred_region
          %s394 = smul.u32 16, %s26
          %p395 = scmp.lt.s32.totalorder %s394, 31
          %s396 = scalar_select %p395, %s394, 31
          %s397 = smul.addr %s396, 13
          %s398 = smul.addr %s397, 8
          %s399 = scalar_lea.vmem %s0, %s398
          %s400 = smul.u32 16, %s26
        $region56: #{tpu_custom_call.1} parent=51 // pred_fallthru
          _
      $region52: #{tpu_custom_call.1} parent=5 // pred_fallthru
        _
      %p401 = scmp.le.s32.totalorder 1, %s26
      %p402 = scmp.lt.s32.totalorder %s26, 3
      %p403 = pnand %p401, %p402
      %p404 = pneg %p403
      // Predicated region
      $region57: #{tpu_custom_call.1} parent=5 // pred_check
        _
      $region58: #{tpu_custom_call.1} parent=5 // pred_check_branch
        %406 = sbr.rel (%p403) target = $region60
      $region59: #{tpu_custom_call.1} parent=5 // pred_region
        %s407 = ssub.s32 %s26, 1
        %s408 = smul.u32 16, %s31
        %p409 = scmp.lt.s32.totalorder %s408, 31
        %s410 = scalar_select %p409, %s408, 31
        %s411 = smul.addr %s410, 13
        %s412 = smul.addr %s411, 8
        %s413 = scalar_lea.vmem %s0, %s412
        %p414 = pneg %p52
        %p415 = pneg %p49
        %p416 = pneg %p73
        %p417 = pneg %p70
        %p418 = pneg %p94
        %p419 = pneg %p91
        %p420 = pneg %p115
        %p421 = pneg %p112
        %p422 = pneg %p136
        %p423 = pneg %p133
        %p424 = pneg %p157
        %p425 = pneg %p154
        %p426 = pneg %p178
        %p427 = pneg %p175
        %p428 = pneg %p199
        %p429 = pneg %p196
        %p430 = pneg %p220
        %p431 = pneg %p217
        %p432 = pneg %p241
        %p433 = pneg %p238
        %p434 = pneg %p267
        %p435 = pneg %p264
        %s436 = smul.u32 16, %s31
        %p437 = scmp.lt.s32.totalorder %s436, 31
        %s438 = scalar_select %p437, %s436, 31
        %s439 = smul.addr %s438, 4
        %s440 = scalar_lea.vmem %s10, %s439
        %p441 = pneg %p293
        %p442 = pneg %p290
        %s443 = sand.u32 %s280, 1
        %s444 = scalar_lea.sflag [#allocation3], %s443
        %s445 = sand.u32 %s280, 1
        %s446 = smul.addr %s445, 128
        %s447 = scalar_lea.vmem [#allocation2], %s446
        %p448 = pneg %p319
        %p449 = pneg %p316
        %s450 = smul.u32 16, %s31
        %p451 = scmp.lt.s32.totalorder %s450, 31
        %s452 = scalar_select %p451, %s450, 31
        %s453 = smul.addr %s452, 4
        %s454 = scalar_lea.vmem %s12, %s453
        %p455 = pneg %p345
        %p456 = pneg %p342
        %s457 = sand.u32 %s332, 1
        %s458 = scalar_lea.sflag [#allocation5], %s457
        %s459 = sand.u32 %s332, 1
        %s460 = smul.addr %s459, 128
        %s461 = scalar_lea.vmem [#allocation4], %s460
        %s462 = smul.u32 16, %s31
        %p463 = scmp.lt.s32.totalorder %s462, 31
        %s464 = scalar_select %p463, %s462, 31
        %s465 = smul.addr %s464, 13
        %s466 = smul.addr %s465, 8
        %s467 = scalar_lea.vmem %s0, %s466
        %s468 = smul.u32 16, %s31
        %s469 = smul.u32 16, %s31
        %p470 = scmp.lt.s32.totalorder %s469, 31
        %s471 = scalar_select %p470, %s469, 31
        %s472 = smul.addr %s471, 4
        %s473 = scalar_lea.vmem %s10, %s472
        %s474 = smul.u32 16, %s31
        %s475 = smul.u32 16, %s31
        %s476 = smul.u32 16, %s31
        %p477 = scmp.lt.s32.totalorder %s476, 31
        %s478 = scalar_select %p477, %s476, 31
        %s479 = smul.addr %s478, 4
        %s480 = scalar_lea.vmem %s12, %s479
        %s481 = smul.u32 16, %s31
        %s482 = smul.u32 16, %s31
        %v484 = vld [vmem:[%s467] sm:$0xff]
        %v485 = vld [vmem:[%s467 + $0x8] sm:$0xff]
        %v486 = vld [vmem:[%s467 + $0x10] sm:$0xff]
        %v487 = vld [vmem:[%s467 + $0x18] sm:$0xff]
        %v488 = vld [vmem:[%s467 + $0x20] sm:$0xff]
        %v489 = vld [vmem:[%s467 + $0x28] sm:$0xff]
        %v490 = vld [vmem:[%s467 + $0x30] sm:$0xff]
        %v491 = vld [vmem:[%s467 + $0x38] sm:$0xff]
        %v492 = vld [vmem:[%s467 + $0x40] sm:$0xff]
        %v493 = vld [vmem:[%s467 + $0x48] sm:$0xff]
        %v494 = vld [vmem:[%s467 + $0x50] sm:$0xff]
        %v495 = vld [vmem:[%s467 + $0x58] sm:$0xff]
        %v496 = vld [vmem:[%s467 + $0x60] sm:$0xff]
        %v497 = vld [vmem:[%s467 + $0x68] sm:$0xff]
        %v498 = vld [vmem:[%s467 + $0x70] sm:$0xff]
        %v499 = vld [vmem:[%s467 + $0x78] sm:$0xff]
        %v500 = vld [vmem:[%s467 + $0x80] sm:$0xff]
        %v501 = vld [vmem:[%s467 + $0x88] sm:$0xff]
        %v502 = vld [vmem:[%s467 + $0x90] sm:$0xff]
        %v503 = vld [vmem:[%s467 + $0x98] sm:$0xff]
        %v504 = vld [vmem:[%s467 + $0xa0] sm:$0xff]
        %v505 = vld [vmem:[%s467 + $0xa8] sm:$0xff]
        %v506 = vld [vmem:[%s467 + $0xb0] sm:$0xff]
        %v507 = vld [vmem:[%s467 + $0xb8] sm:$0xff]
        %v508 = vld [vmem:[%s467 + $0xc0] sm:$0xff]
        %v509 = vld [vmem:[%s467 + $0xc8] sm:$0xff]
        %v510 = vld [vmem:[%s467 + $0xd0] sm:$0xff]
        %v511 = vld [vmem:[%s467 + $0xd8] sm:$0xff]
        %v512 = vld [vmem:[%s467 + $0xe0] sm:$0xff]
        %v513 = vld [vmem:[%s467 + $0xe8] sm:$0xff]
        %v514 = vld [vmem:[%s467 + $0xf0] sm:$0xff]
        %v515 = vld [vmem:[%s467 + $0xf8] sm:$0xff]
        %v516 = vld [vmem:[%s467 + $0x100] sm:$0xff]
        %v517 = vld [vmem:[%s467 + $0x108] sm:$0xff]
        %v518 = vld [vmem:[%s467 + $0x110] sm:$0xff]
        %v519 = vld [vmem:[%s467 + $0x118] sm:$0xff]
        %v520 = vld [vmem:[%s467 + $0x120] sm:$0xff]
        %v521 = vld [vmem:[%s467 + $0x128] sm:$0xff]
        %v522 = vld [vmem:[%s467 + $0x130] sm:$0xff]
        %v523 = vld [vmem:[%s467 + $0x138] sm:$0xff]
        %v524 = vld [vmem:[%s467 + $0x140] sm:$0xff]
        %v525 = vld [vmem:[%s467 + $0x148] sm:$0xff]
        %v526 = vld [vmem:[%s467 + $0x150] sm:$0xff]
        %v527 = vld [vmem:[%s467 + $0x158] sm:$0xff]
        %v528 = vld [vmem:[%s467 + $0x160] sm:$0xff]
        %v529 = vld [vmem:[%s467 + $0x168] sm:$0xff]
        %v530 = vld [vmem:[%s467 + $0x170] sm:$0xff]
        %v531 = vld [vmem:[%s467 + $0x178] sm:$0xff]
        %v532 = vld [vmem:[%s467 + $0x180] sm:$0xff]
        %v533 = vld [vmem:[%s467 + $0x188] sm:$0xff]
        %v534 = vld [vmem:[%s467 + $0x190] sm:$0xff]
        %v535 = vld [vmem:[%s467 + $0x198] sm:$0xff]
        %v536 = vld [vmem:[%s467 + $0x1a0] sm:$0xff]
        %v537 = vld [vmem:[%s467 + $0x1a8] sm:$0xff]
        %v538 = vld [vmem:[%s467 + $0x1b0] sm:$0xff]
        %v539 = vld [vmem:[%s467 + $0x1b8] sm:$0xff]
        %v540 = vld [vmem:[%s467 + $0x1c0] sm:$0xff]
        %v541 = vld [vmem:[%s467 + $0x1c8] sm:$0xff]
        %v542 = vld [vmem:[%s467 + $0x1d0] sm:$0xff]
        %v543 = vld [vmem:[%s467 + $0x1d8] sm:$0xff]
        %v544 = vld [vmem:[%s467 + $0x1e0] sm:$0xff]
        %v545 = vld [vmem:[%s467 + $0x1e8] sm:$0xff]
        %v546 = vld [vmem:[%s467 + $0x1f0] sm:$0xff]
        %v547 = vld [vmem:[%s467 + $0x1f8] sm:$0xff]
        %v548 = vld [vmem:[%s467 + $0x200] sm:$0xff]
        %v549 = vld [vmem:[%s467 + $0x208] sm:$0xff]
        %v550 = vld [vmem:[%s467 + $0x210] sm:$0xff]
        %v551 = vld [vmem:[%s467 + $0x218] sm:$0xff]
        %v552 = vld [vmem:[%s467 + $0x220] sm:$0xff]
        %v553 = vld [vmem:[%s467 + $0x228] sm:$0xff]
        %v554 = vld [vmem:[%s467 + $0x230] sm:$0xff]
        %v555 = vld [vmem:[%s467 + $0x238] sm:$0xff]
        %v556 = vld [vmem:[%s467 + $0x240] sm:$0xff]
        %v557 = vld [vmem:[%s467 + $0x248] sm:$0xff]
        %v558 = vld [vmem:[%s467 + $0x250] sm:$0xff]
        %v559 = vld [vmem:[%s467 + $0x258] sm:$0xff]
        %v560 = vld [vmem:[%s467 + $0x260] sm:$0xff]
        %v561 = vld [vmem:[%s467 + $0x268] sm:$0xff]
        %v562 = vld [vmem:[%s467 + $0x270] sm:$0xff]
        %v563 = vld [vmem:[%s467 + $0x278] sm:$0xff]
        %v564 = vld [vmem:[%s467 + $0x280] sm:$0xff]
        %v565 = vld [vmem:[%s467 + $0x288] sm:$0xff]
        %v566 = vld [vmem:[%s467 + $0x290] sm:$0xff]
        %v567 = vld [vmem:[%s467 + $0x298] sm:$0xff]
        %v568 = vld [vmem:[%s467 + $0x2a0] sm:$0xff]
        %v569 = vld [vmem:[%s467 + $0x2a8] sm:$0xff]
        %v570 = vld [vmem:[%s467 + $0x2b0] sm:$0xff]
        %v571 = vld [vmem:[%s467 + $0x2b8] sm:$0xff]
        %v572 = vld [vmem:[%s467 + $0x2c0] sm:$0xff]
        %v573 = vld [vmem:[%s467 + $0x2c8] sm:$0xff]
        %v574 = vld [vmem:[%s467 + $0x2d0] sm:$0xff]
        %v575 = vld [vmem:[%s467 + $0x2d8] sm:$0xff]
        %v576 = vld [vmem:[%s467 + $0x2e0] sm:$0xff]
        %v577 = vld [vmem:[%s467 + $0x2e8] sm:$0xff]
        %v578 = vld [vmem:[%s467 + $0x2f0] sm:$0xff]
        %v579 = vld [vmem:[%s467 + $0x2f8] sm:$0xff]
        %v580 = vld [vmem:[%s467 + $0x300] sm:$0xff]
        %v581 = vld [vmem:[%s467 + $0x308] sm:$0xff]
        %v582 = vld [vmem:[%s467 + $0x310] sm:$0xff]
        %v583 = vld [vmem:[%s467 + $0x318] sm:$0xff]
        %v584 = vld [vmem:[%s467 + $0x320] sm:$0xff]
        %v585 = vld [vmem:[%s467 + $0x328] sm:$0xff]
        %v586 = vld [vmem:[%s467 + $0x330] sm:$0xff]
        %v587 = vld [vmem:[%s467 + $0x338] sm:$0xff]
        %v588 = vld [vmem:[%s467 + $0x340] sm:$0xff]
        %v589 = vld [vmem:[%s467 + $0x348] sm:$0xff]
        %v590 = vld [vmem:[%s467 + $0x350] sm:$0xff]
        %v591 = vld [vmem:[%s467 + $0x358] sm:$0xff]
        %v592 = vld [vmem:[%s467 + $0x360] sm:$0xff]
        %v593 = vld [vmem:[%s467 + $0x368] sm:$0xff]
        %v594 = vld [vmem:[%s467 + $0x370] sm:$0xff]
        %v595 = vld [vmem:[%s467 + $0x378] sm:$0xff]
        %v596 = vld [vmem:[%s467 + $0x380] sm:$0xff]
        %v597 = vld [vmem:[%s467 + $0x388] sm:$0xff]
        %v598 = vld [vmem:[%s467 + $0x390] sm:$0xff]
        %v599 = vld [vmem:[%s467 + $0x398] sm:$0xff]
        %v600 = vld [vmem:[%s467 + $0x3a0] sm:$0xff]
        %v601 = vld [vmem:[%s467 + $0x3a8] sm:$0xff]
        %v602 = vld [vmem:[%s467 + $0x3b0] sm:$0xff]
        %v603 = vld [vmem:[%s467 + $0x3b8] sm:$0xff]
        %v604 = vld [vmem:[%s467 + $0x3c0] sm:$0xff]
        %v605 = vld [vmem:[%s467 + $0x3c8] sm:$0xff]
        %v606 = vld [vmem:[%s467 + $0x3d0] sm:$0xff]
        %v607 = vld [vmem:[%s467 + $0x3d8] sm:$0xff]
        %v608 = vld [vmem:[%s467 + $0x3e0] sm:$0xff]
        %v609 = vld [vmem:[%s467 + $0x3e8] sm:$0xff]
        %v610 = vld [vmem:[%s467 + $0x3f0] sm:$0xff]
        %v611 = vld [vmem:[%s467 + $0x3f8] sm:$0xff]
        %v612 = vld [vmem:[%s467 + $0x400] sm:$0xff]
        %v613 = vld [vmem:[%s467 + $0x408] sm:$0xff]
        %v614 = vld [vmem:[%s467 + $0x410] sm:$0xff]
        %v615 = vld [vmem:[%s467 + $0x418] sm:$0xff]
        %v616 = vld [vmem:[%s467 + $0x420] sm:$0xff]
        %v617 = vld [vmem:[%s467 + $0x428] sm:$0xff]
        %v618 = vld [vmem:[%s467 + $0x430] sm:$0xff]
        %v619 = vld [vmem:[%s467 + $0x438] sm:$0xff]
        %v620 = vld [vmem:[%s467 + $0x440] sm:$0xff]
        %v621 = vld [vmem:[%s467 + $0x448] sm:$0xff]
        %v622 = vld [vmem:[%s467 + $0x450] sm:$0xff]
        %v623 = vld [vmem:[%s467 + $0x458] sm:$0xff]
        %v624 = vld [vmem:[%s467 + $0x460] sm:$0xff]
        %v625 = vld [vmem:[%s467 + $0x468] sm:$0xff]
        %v626 = vld [vmem:[%s467 + $0x470] sm:$0xff]
        %v627 = vld [vmem:[%s467 + $0x478] sm:$0xff]
        %v628 = vld [vmem:[%s467 + $0x480] sm:$0xff]
        %v629 = vld [vmem:[%s467 + $0x488] sm:$0xff]
        %v630 = vld [vmem:[%s467 + $0x490] sm:$0xff]
        %v631 = vld [vmem:[%s467 + $0x498] sm:$0xff]
        %v632 = vld [vmem:[%s467 + $0x4a0] sm:$0xff]
        %v633 = vld [vmem:[%s467 + $0x4a8] sm:$0xff]
        %v634 = vld [vmem:[%s467 + $0x4b0] sm:$0xff]
        %v635 = vld [vmem:[%s467 + $0x4b8] sm:$0xff]
        %v636 = vld [vmem:[%s467 + $0x4c0] sm:$0xff]
        %v637 = vld [vmem:[%s467 + $0x4c8] sm:$0xff]
        %v638 = vld [vmem:[%s467 + $0x4d0] sm:$0xff]
        %v639 = vld [vmem:[%s467 + $0x4d8] sm:$0xff]
        %v640 = vld [vmem:[%s467 + $0x4e0] sm:$0xff]
        %v641 = vld [vmem:[%s467 + $0x4e8] sm:$0xff]
        %v642 = vld [vmem:[%s467 + $0x4f0] sm:$0xff]
        %v643 = vld [vmem:[%s467 + $0x4f8] sm:$0xff]
        %v644 = vld [vmem:[%s467 + $0x500] sm:$0xff]
        %v645 = vld [vmem:[%s467 + $0x508] sm:$0xff]
        %v646 = vld [vmem:[%s467 + $0x510] sm:$0xff]
        %v647 = vld [vmem:[%s467 + $0x518] sm:$0xff]
        %v648 = vld [vmem:[%s467 + $0x520] sm:$0xff]
        %v649 = vld [vmem:[%s467 + $0x528] sm:$0xff]
        %v650 = vld [vmem:[%s467 + $0x530] sm:$0xff]
        %v651 = vld [vmem:[%s467 + $0x538] sm:$0xff]
        %v652 = vld [vmem:[%s467 + $0x540] sm:$0xff]
        %v653 = vld [vmem:[%s467 + $0x548] sm:$0xff]
        %v654 = vld [vmem:[%s467 + $0x550] sm:$0xff]
        %v655 = vld [vmem:[%s467 + $0x558] sm:$0xff]
        %v656 = vld [vmem:[%s467 + $0x560] sm:$0xff]
        %v657 = vld [vmem:[%s467 + $0x568] sm:$0xff]
        %v658 = vld [vmem:[%s467 + $0x570] sm:$0xff]
        %v659 = vld [vmem:[%s467 + $0x578] sm:$0xff]
        %v660 = vld [vmem:[%s467 + $0x580] sm:$0xff]
        %v661 = vld [vmem:[%s467 + $0x588] sm:$0xff]
        %v662 = vld [vmem:[%s467 + $0x590] sm:$0xff]
        %v663 = vld [vmem:[%s467 + $0x598] sm:$0xff]
        %v664 = vld [vmem:[%s467 + $0x5a0] sm:$0xff]
        %v665 = vld [vmem:[%s467 + $0x5a8] sm:$0xff]
        %v666 = vld [vmem:[%s467 + $0x5b0] sm:$0xff]
        %v667 = vld [vmem:[%s467 + $0x5b8] sm:$0xff]
        %v668 = vld [vmem:[%s467 + $0x5c0] sm:$0xff]
        %v669 = vld [vmem:[%s467 + $0x5c8] sm:$0xff]
        %v670 = vld [vmem:[%s467 + $0x5d0] sm:$0xff]
        %v671 = vld [vmem:[%s467 + $0x5d8] sm:$0xff]
        %v672 = vld [vmem:[%s467 + $0x5e0] sm:$0xff]
        %v673 = vld [vmem:[%s467 + $0x5e8] sm:$0xff]
        %v674 = vld [vmem:[%s467 + $0x5f0] sm:$0xff]
        %v675 = vld [vmem:[%s467 + $0x5f8] sm:$0xff]
        %v676 = vld [vmem:[%s467 + $0x600] sm:$0xff]
        %v677 = vld [vmem:[%s467 + $0x608] sm:$0xff]
        %v678 = vld [vmem:[%s467 + $0x610] sm:$0xff]
        %v679 = vld [vmem:[%s467 + $0x618] sm:$0xff]
        %v680 = vld [vmem:[%s467 + $0x620] sm:$0xff]
        %v681 = vld [vmem:[%s467 + $0x628] sm:$0xff]
        %v682 = vld [vmem:[%s467 + $0x630] sm:$0xff]
        %v683 = vld [vmem:[%s467 + $0x638] sm:$0xff]
        %v684 = vld [vmem:[%s467 + $0x640] sm:$0xff]
        %v685 = vld [vmem:[%s467 + $0x648] sm:$0xff]
        %v686 = vld [vmem:[%s467 + $0x650] sm:$0xff]
        %v687 = vld [vmem:[%s467 + $0x658] sm:$0xff]
        %v688 = vld [vmem:[%s467 + $0x660] sm:$0xff]
        %v689 = vld [vmem:[%s467 + $0x668] sm:$0xff]
        %v690 = vld [vmem:[%s467 + $0x670] sm:$0xff]
        %v691 = vld [vmem:[%s467 + $0x678] sm:$0xff]
        %v692 = vpack.c.bf16 %v497, %v484
        %v693 = vpack.c.bf16 %v498, %v485
        %v694 = vpack.c.bf16 %v499, %v486
        %v695 = vpack.c.bf16 %v500, %v487
        %v696 = vpack.c.bf16 %v501, %v488
        %v697 = vpack.c.bf16 %v502, %v489
        %v698 = vpack.c.bf16 %v503, %v490
        %v699 = vpack.c.bf16 %v504, %v491
        %v700 = vpack.c.bf16 %v505, %v492
        %v701 = vpack.c.bf16 %v506, %v493
        %v702 = vpack.c.bf16 %v507, %v494
        %v703 = vpack.c.bf16 %v508, %v495
        %v704 = vpack.c.bf16 %v509, %v496
        %v705 = vpack.c.bf16 %v523, %v510
        %v706 = vpack.c.bf16 %v524, %v511
        %v707 = vpack.c.bf16 %v525, %v512
        %v708 = vpack.c.bf16 %v526, %v513
        %v709 = vpack.c.bf16 %v527, %v514
        %v710 = vpack.c.bf16 %v528, %v515
        %v711 = vpack.c.bf16 %v529, %v516
        %v712 = vpack.c.bf16 %v530, %v517
        %v713 = vpack.c.bf16 %v531, %v518
        %v714 = vpack.c.bf16 %v532, %v519
        %v715 = vpack.c.bf16 %v533, %v520
        %v716 = vpack.c.bf16 %v534, %v521
        %v717 = vpack.c.bf16 %v535, %v522
        %v718 = vpack.c.bf16 %v549, %v536
        %v719 = vpack.c.bf16 %v550, %v537
        %v720 = vpack.c.bf16 %v551, %v538
        %v721 = vpack.c.bf16 %v552, %v539
        %v722 = vpack.c.bf16 %v553, %v540
        %v723 = vpack.c.bf16 %v554, %v541
        %v724 = vpack.c.bf16 %v555, %v542
        %v725 = vpack.c.bf16 %v556, %v543
        %v726 = vpack.c.bf16 %v557, %v544
        %v727 = vpack.c.bf16 %v558, %v545
        %v728 = vpack.c.bf16 %v559, %v546
        %v729 = vpack.c.bf16 %v560, %v547
        %v730 = vpack.c.bf16 %v561, %v548
        %v731 = vpack.c.bf16 %v575, %v562
        %v732 = vpack.c.bf16 %v576, %v563
        %v733 = vpack.c.bf16 %v577, %v564
        %v734 = vpack.c.bf16 %v578, %v565
        %v735 = vpack.c.bf16 %v579, %v566
        %v736 = vpack.c.bf16 %v580, %v567
        %v737 = vpack.c.bf16 %v581, %v568
        %v738 = vpack.c.bf16 %v582, %v569
        %v739 = vpack.c.bf16 %v583, %v570
        %v740 = vpack.c.bf16 %v584, %v571
        %v741 = vpack.c.bf16 %v585, %v572
        %v742 = vpack.c.bf16 %v586, %v573
        %v743 = vpack.c.bf16 %v587, %v574
        %v744 = vpack.c.bf16 %v601, %v588
        %v745 = vpack.c.bf16 %v602, %v589
        %v746 = vpack.c.bf16 %v603, %v590
        %v747 = vpack.c.bf16 %v604, %v591
        %v748 = vpack.c.bf16 %v605, %v592
        %v749 = vpack.c.bf16 %v606, %v593
        %v750 = vpack.c.bf16 %v607, %v594
        %v751 = vpack.c.bf16 %v608, %v595
        %v752 = vpack.c.bf16 %v609, %v596
        %v753 = vpack.c.bf16 %v610, %v597
        %v754 = vpack.c.bf16 %v611, %v598
        %v755 = vpack.c.bf16 %v612, %v599
        %v756 = vpack.c.bf16 %v613, %v600
        %v757 = vpack.c.bf16 %v627, %v614
        %v758 = vpack.c.bf16 %v628, %v615
        %v759 = vpack.c.bf16 %v629, %v616
        %v760 = vpack.c.bf16 %v630, %v617
        %v761 = vpack.c.bf16 %v631, %v618
        %v762 = vpack.c.bf16 %v632, %v619
        %v763 = vpack.c.bf16 %v633, %v620
        %v764 = vpack.c.bf16 %v634, %v621
        %v765 = vpack.c.bf16 %v635, %v622
        %v766 = vpack.c.bf16 %v636, %v623
        %v767 = vpack.c.bf16 %v637, %v624
        %v768 = vpack.c.bf16 %v638, %v625
        %v769 = vpack.c.bf16 %v639, %v626
        %v770 = vpack.c.bf16 %v653, %v640
        %v771 = vpack.c.bf16 %v654, %v641
        %v772 = vpack.c.bf16 %v655, %v642
        %v773 = vpack.c.bf16 %v656, %v643
        %v774 = vpack.c.bf16 %v657, %v644
        %v775 = vpack.c.bf16 %v658, %v645
        %v776 = vpack.c.bf16 %v659, %v646
        %v777 = vpack.c.bf16 %v660, %v647
        %v778 = vpack.c.bf16 %v661, %v648
        %v779 = vpack.c.bf16 %v662, %v649
        %v780 = vpack.c.bf16 %v663, %v650
        %v781 = vpack.c.bf16 %v664, %v651
        %v782 = vpack.c.bf16 %v665, %v652
        %v783 = vpack.c.bf16 %v679, %v666
        %v784 = vpack.c.bf16 %v680, %v667
        %v785 = vpack.c.bf16 %v681, %v668
        %v786 = vpack.c.bf16 %v682, %v669
        %v787 = vpack.c.bf16 %v683, %v670
        %v788 = vpack.c.bf16 %v684, %v671
        %v789 = vpack.c.bf16 %v685, %v672
        %v790 = vpack.c.bf16 %v686, %v673
        %v791 = vpack.c.bf16 %v687, %v674
        %v792 = vpack.c.bf16 %v688, %v675
        %v793 = vpack.c.bf16 %v689, %v676
        %v794 = vpack.c.bf16 %v690, %v677
        %v795 = vpack.c.bf16 %v691, %v678
        %v796 = vld [vmem:[%s1] sm:$0xf]
        %v797 = vld [vmem:[%s1 + $0x4] sm:$0xf]
        %v798 = vld [vmem:[%s1 + $0x8] sm:$0xf]
        %v799 = vld [vmem:[%s1 + $0xc] sm:$0xf]
        %v800 = vld [vmem:[%s1 + $0x10] sm:$0xf]
        %v801 = vld [vmem:[%s1 + $0x14] sm:$0xf]
        %v802 = vld [vmem:[%s1 + $0x18] sm:$0xf]
        %v803 = vld [vmem:[%s1 + $0x1c] sm:$0xf]
        %v804 = vld [vmem:[%s1 + $0x20] sm:$0xf]
        %v805 = vld [vmem:[%s1 + $0x24] sm:$0xf]
        %v806 = vld [vmem:[%s1 + $0x28] sm:$0xf]
        %v807 = vld [vmem:[%s1 + $0x2c] sm:$0xf]
        %v808 = vld [vmem:[%s1 + $0x30] sm:$0xf]
        %v809 = vld [vmem:[%s1 + $0x34] sm:$0xf]
        %v810 = vld [vmem:[%s1 + $0x38] sm:$0xf]
        %v811 = vld [vmem:[%s1 + $0x3c] sm:$0xf]
        %v812 = vld [vmem:[%s1 + $0x40] sm:$0xf]
        %v813 = vld [vmem:[%s1 + $0x44] sm:$0xf]
        %v814 = vld [vmem:[%s1 + $0x48] sm:$0xf]
        %v815 = vld [vmem:[%s1 + $0x4c] sm:$0xf]
        %v816 = vld [vmem:[%s1 + $0x50] sm:$0xf]
        %v817 = vld [vmem:[%s1 + $0x54] sm:$0xf]
        %v818 = vld [vmem:[%s1 + $0x58] sm:$0xf]
        %v819 = vld [vmem:[%s1 + $0x5c] sm:$0xf]
        %v820 = vld [vmem:[%s1 + $0x60] sm:$0xf]
        %v821 = vld [vmem:[%s1 + $0x64] sm:$0xf]
        %v822 = vld [vmem:[%s1 + $0x68] sm:$0xf]
        %v823 = vld [vmem:[%s1 + $0x6c] sm:$0xf]
        %v824 = vld [vmem:[%s1 + $0x70] sm:$0xf]
        %v825 = vld [vmem:[%s1 + $0x74] sm:$0xf]
        %v826 = vld [vmem:[%s1 + $0x78] sm:$0xf]
        %v827 = vld [vmem:[%s1 + $0x7c] sm:$0xf]
        %v828 = vld [vmem:[%s1 + $0x80] sm:$0xf]
        %v829 = vld [vmem:[%s1 + $0x84] sm:$0xf]
        %v830 = vld [vmem:[%s1 + $0x88] sm:$0xf]
        %v831 = vld [vmem:[%s1 + $0x8c] sm:$0xf]
        %v832 = vld [vmem:[%s1 + $0x90] sm:$0xf]
        %v833 = vld [vmem:[%s1 + $0x94] sm:$0xf]
        %v834 = vld [vmem:[%s1 + $0x98] sm:$0xf]
        %v835 = vld [vmem:[%s1 + $0x9c] sm:$0xf]
        %v836 = vld [vmem:[%s1 + $0xa0] sm:$0xf]
        %v837 = vld [vmem:[%s1 + $0xa4] sm:$0xf]
        %v838 = vld [vmem:[%s1 + $0xa8] sm:$0xf]
        %v839 = vld [vmem:[%s1 + $0xac] sm:$0xf]
        %v840 = vld [vmem:[%s1 + $0xb0] sm:$0xf]
        %v841 = vld [vmem:[%s1 + $0xb4] sm:$0xf]
        %v842 = vld [vmem:[%s1 + $0xb8] sm:$0xf]
        %v843 = vld [vmem:[%s1 + $0xbc] sm:$0xf]
        %v844 = vld [vmem:[%s1 + $0xc0] sm:$0xf]
        %v845 = vld [vmem:[%s1 + $0xc4] sm:$0xf]
        %v846 = vld [vmem:[%s1 + $0xc8] sm:$0xf]
        %v847 = vld [vmem:[%s1 + $0xcc] sm:$0xf]
        %v848 = vld [vmem:[%s1 + $0xd0] sm:$0xf]
        %v849 = vld [vmem:[%s1 + $0xd4] sm:$0xf]
        %v850 = vld [vmem:[%s1 + $0xd8] sm:$0xf]
        %v851 = vld [vmem:[%s1 + $0xdc] sm:$0xf]
        %v852 = vld [vmem:[%s1 + $0xe0] sm:$0xf]
        %v853 = vld [vmem:[%s1 + $0xe4] sm:$0xf]
        %v854 = vld [vmem:[%s1 + $0xe8] sm:$0xf]
        %v855 = vld [vmem:[%s1 + $0xec] sm:$0xf]
        %v856 = vld [vmem:[%s1 + $0xf0] sm:$0xf]
        %v857 = vld [vmem:[%s1 + $0xf4] sm:$0xf]
        %v858 = vld [vmem:[%s1 + $0xf8] sm:$0xf]
        %v859 = vld [vmem:[%s1 + $0xfc] sm:$0xf]
        %v860 = vld [vmem:[%s1 + $0x100] sm:$0xf]
        %v861 = vld [vmem:[%s1 + $0x104] sm:$0xf]
        %v862 = vld [vmem:[%s1 + $0x108] sm:$0xf]
        %v863 = vld [vmem:[%s1 + $0x10c] sm:$0xf]
        %v864 = vld [vmem:[%s1 + $0x110] sm:$0xf]
        %v865 = vld [vmem:[%s1 + $0x114] sm:$0xf]
        %v866 = vld [vmem:[%s1 + $0x118] sm:$0xf]
        %v867 = vld [vmem:[%s1 + $0x11c] sm:$0xf]
        %v868 = vld [vmem:[%s1 + $0x120] sm:$0xf]
        %v869 = vld [vmem:[%s1 + $0x124] sm:$0xf]
        %v870 = vld [vmem:[%s1 + $0x128] sm:$0xf]
        %v871 = vld [vmem:[%s1 + $0x12c] sm:$0xf]
        %v872 = vld [vmem:[%s1 + $0x130] sm:$0xf]
        %v873 = vld [vmem:[%s1 + $0x134] sm:$0xf]
        %v874 = vld [vmem:[%s1 + $0x138] sm:$0xf]
        %v875 = vld [vmem:[%s1 + $0x13c] sm:$0xf]
        %v876 = vld [vmem:[%s1 + $0x140] sm:$0xf]
        %v877 = vld [vmem:[%s1 + $0x144] sm:$0xf]
        %v878 = vld [vmem:[%s1 + $0x148] sm:$0xf]
        %v879 = vld [vmem:[%s1 + $0x14c] sm:$0xf]
        %v880 = vld [vmem:[%s1 + $0x150] sm:$0xf]
        %v881 = vld [vmem:[%s1 + $0x154] sm:$0xf]
        %v882 = vld [vmem:[%s1 + $0x158] sm:$0xf]
        %v883 = vld [vmem:[%s1 + $0x15c] sm:$0xf]
        %v884 = vld [vmem:[%s1 + $0x160] sm:$0xf]
        %v885 = vld [vmem:[%s1 + $0x164] sm:$0xf]
        %v886 = vld [vmem:[%s1 + $0x168] sm:$0xf]
        %v887 = vld [vmem:[%s1 + $0x16c] sm:$0xf]
        %v888 = vld [vmem:[%s1 + $0x170] sm:$0xf]
        %v889 = vld [vmem:[%s1 + $0x174] sm:$0xf]
        %v890 = vld [vmem:[%s1 + $0x178] sm:$0xf]
        %v891 = vld [vmem:[%s1 + $0x17c] sm:$0xf]
        %v892 = vld [vmem:[%s1 + $0x180] sm:$0xf]
        %v893 = vld [vmem:[%s1 + $0x184] sm:$0xf]
        %v894 = vld [vmem:[%s1 + $0x188] sm:$0xf]
        %v895 = vld [vmem:[%s1 + $0x18c] sm:$0xf]
        %v896 = vld [vmem:[%s1 + $0x190] sm:$0xf]
        %v897 = vld [vmem:[%s1 + $0x194] sm:$0xf]
        %v898 = vld [vmem:[%s1 + $0x198] sm:$0xf]
        %v899 = vld [vmem:[%s1 + $0x19c] sm:$0xf]
        %v900 = vld [vmem:[%s1 + $0x1a0] sm:$0xf]
        %v901 = vld [vmem:[%s1 + $0x1a4] sm:$0xf]
        %v902 = vld [vmem:[%s1 + $0x1a8] sm:$0xf]
        %v903 = vld [vmem:[%s1 + $0x1ac] sm:$0xf]
        %v904 = vld [vmem:[%s1 + $0x1b0] sm:$0xf]
        %v905 = vld [vmem:[%s1 + $0x1b4] sm:$0xf]
        %v906 = vld [vmem:[%s1 + $0x1b8] sm:$0xf]
        %v907 = vld [vmem:[%s1 + $0x1bc] sm:$0xf]
        %v908 = vld [vmem:[%s1 + $0x1c0] sm:$0xf]
        %v909 = vld [vmem:[%s1 + $0x1c4] sm:$0xf]
        %v910 = vld [vmem:[%s1 + $0x1c8] sm:$0xf]
        %v911 = vld [vmem:[%s1 + $0x1cc] sm:$0xf]
        %v912 = vld [vmem:[%s1 + $0x1d0] sm:$0xf]
        %v913 = vld [vmem:[%s1 + $0x1d4] sm:$0xf]
        %v914 = vld [vmem:[%s1 + $0x1d8] sm:$0xf]
        %v915 = vld [vmem:[%s1 + $0x1dc] sm:$0xf]
        %v916 = vld [vmem:[%s1 + $0x1e0] sm:$0xf]
        %v917 = vld [vmem:[%s1 + $0x1e4] sm:$0xf]
        %v918 = vld [vmem:[%s1 + $0x1e8] sm:$0xf]
        %v919 = vld [vmem:[%s1 + $0x1ec] sm:$0xf]
        %v920 = vld [vmem:[%s1 + $0x1f0] sm:$0xf]
        %v921 = vld [vmem:[%s1 + $0x1f4] sm:$0xf]
        %v922 = vld [vmem:[%s1 + $0x1f8] sm:$0xf]
        %v923 = vld [vmem:[%s1 + $0x1fc] sm:$0xf]
        %v924 = vld [vmem:[%s1 + $0x200] sm:$0xf]
        %v925 = vld [vmem:[%s1 + $0x204] sm:$0xf]
        %v926 = vld [vmem:[%s1 + $0x208] sm:$0xf]
        %v927 = vld [vmem:[%s1 + $0x20c] sm:$0xf]
        %v928 = vld [vmem:[%s1 + $0x210] sm:$0xf]
        %v929 = vld [vmem:[%s1 + $0x214] sm:$0xf]
        %v930 = vld [vmem:[%s1 + $0x218] sm:$0xf]
        %v931 = vld [vmem:[%s1 + $0x21c] sm:$0xf]
        %v932 = vld [vmem:[%s1 + $0x220] sm:$0xf]
        %v933 = vld [vmem:[%s1 + $0x224] sm:$0xf]
        %v934 = vld [vmem:[%s1 + $0x228] sm:$0xf]
        %v935 = vld [vmem:[%s1 + $0x22c] sm:$0xf]
        %v936 = vld [vmem:[%s1 + $0x230] sm:$0xf]
        %v937 = vld [vmem:[%s1 + $0x234] sm:$0xf]
        %v938 = vld [vmem:[%s1 + $0x238] sm:$0xf]
        %v939 = vld [vmem:[%s1 + $0x23c] sm:$0xf]
        %v940 = vld [vmem:[%s1 + $0x240] sm:$0xf]
        %v941 = vld [vmem:[%s1 + $0x244] sm:$0xf]
        %v942 = vld [vmem:[%s1 + $0x248] sm:$0xf]
        %v943 = vld [vmem:[%s1 + $0x24c] sm:$0xf]
        %v944 = vld [vmem:[%s1 + $0x250] sm:$0xf]
        %v945 = vld [vmem:[%s1 + $0x254] sm:$0xf]
        %v946 = vld [vmem:[%s1 + $0x258] sm:$0xf]
        %v947 = vld [vmem:[%s1 + $0x25c] sm:$0xf]
        %v948 = vld [vmem:[%s1 + $0x260] sm:$0xf]
        %v949 = vld [vmem:[%s1 + $0x264] sm:$0xf]
        %v950 = vld [vmem:[%s1 + $0x268] sm:$0xf]
        %v951 = vld [vmem:[%s1 + $0x26c] sm:$0xf]
        %v952 = vld [vmem:[%s1 + $0x270] sm:$0xf]
        %v953 = vld [vmem:[%s1 + $0x274] sm:$0xf]
        %v954 = vld [vmem:[%s1 + $0x278] sm:$0xf]
        %v955 = vld [vmem:[%s1 + $0x27c] sm:$0xf]
        %v956 = vld [vmem:[%s1 + $0x280] sm:$0xf]
        %v957 = vld [vmem:[%s1 + $0x284] sm:$0xf]
        %v958 = vld [vmem:[%s1 + $0x288] sm:$0xf]
        %v959 = vld [vmem:[%s1 + $0x28c] sm:$0xf]
        %v960 = vld [vmem:[%s1 + $0x290] sm:$0xf]
        %v961 = vld [vmem:[%s1 + $0x294] sm:$0xf]
        %v962 = vld [vmem:[%s1 + $0x298] sm:$0xf]
        %v963 = vld [vmem:[%s1 + $0x29c] sm:$0xf]
        %v964 = vld [vmem:[%s1 + $0x2a0] sm:$0xf]
        %v965 = vld [vmem:[%s1 + $0x2a4] sm:$0xf]
        %v966 = vld [vmem:[%s1 + $0x2a8] sm:$0xf]
        %v967 = vld [vmem:[%s1 + $0x2ac] sm:$0xf]
        %v968 = vld [vmem:[%s1 + $0x2b0] sm:$0xf]
        %v969 = vld [vmem:[%s1 + $0x2b4] sm:$0xf]
        %v970 = vld [vmem:[%s1 + $0x2b8] sm:$0xf]
        %v971 = vld [vmem:[%s1 + $0x2bc] sm:$0xf]
        %v972 = vld [vmem:[%s1 + $0x2c0] sm:$0xf]
        %v973 = vld [vmem:[%s1 + $0x2c4] sm:$0xf]
        %v974 = vld [vmem:[%s1 + $0x2c8] sm:$0xf]
        %v975 = vld [vmem:[%s1 + $0x2cc] sm:$0xf]
        %v976 = vld [vmem:[%s1 + $0x2d0] sm:$0xf]
        %v977 = vld [vmem:[%s1 + $0x2d4] sm:$0xf]
        %v978 = vld [vmem:[%s1 + $0x2d8] sm:$0xf]
        %v979 = vld [vmem:[%s1 + $0x2dc] sm:$0xf]
        %v980 = vld [vmem:[%s1 + $0x2e0] sm:$0xf]
        %v981 = vld [vmem:[%s1 + $0x2e4] sm:$0xf]
        %v982 = vld [vmem:[%s1 + $0x2e8] sm:$0xf]
        %v983 = vld [vmem:[%s1 + $0x2ec] sm:$0xf]
        %v984 = vld [vmem:[%s1 + $0x2f0] sm:$0xf]
        %v985 = vld [vmem:[%s1 + $0x2f4] sm:$0xf]
        %v986 = vld [vmem:[%s1 + $0x2f8] sm:$0xf]
        %v987 = vld [vmem:[%s1 + $0x2fc] sm:$0xf]
        %v988 = vld [vmem:[%s1 + $0x300] sm:$0xf]
        %v989 = vld [vmem:[%s1 + $0x304] sm:$0xf]
        %v990 = vld [vmem:[%s1 + $0x308] sm:$0xf]
        %v991 = vld [vmem:[%s1 + $0x30c] sm:$0xf]
        %v992 = vld [vmem:[%s2] sm:$0x1]
        %v994 = vperm.slane %v992, 0
        %v1192 = vunpack.c.l.b16 %v796
        %v1193 = vunpack.c.l.b16 %v797
        %v1194 = vunpack.c.l.b16 %v798
        %v1195 = vunpack.c.l.b16 %v799
        %v1196 = vunpack.c.l.b16 %v800
        %v1197 = vunpack.c.l.b16 %v801
        %v1198 = vunpack.c.l.b16 %v802
        %v1199 = vunpack.c.l.b16 %v803
        %v1200 = vunpack.c.l.b16 %v804
        %v1201 = vunpack.c.l.b16 %v805
        %v1202 = vunpack.c.l.b16 %v806
        %v1203 = vunpack.c.l.b16 %v807
        %v1204 = vunpack.c.l.b16 %v808
        %v1205 = vunpack.c.l.b16 %v809
        %v1206 = vunpack.c.l.b16 %v810
        %v1207 = vunpack.c.l.b16 %v811
        %v1208 = vunpack.c.l.b16 %v812
        %v1209 = vunpack.c.l.b16 %v813
        %v1210 = vunpack.c.l.b16 %v814
        %v1211 = vunpack.c.l.b16 %v815
        %v1212 = vunpack.c.l.b16 %v816
        %v1213 = vunpack.c.l.b16 %v817
        %v1214 = vunpack.c.l.b16 %v818
        %v1215 = vunpack.c.l.b16 %v819
        %v1216 = vunpack.c.l.b16 %v820
        %v1217 = vunpack.c.l.b16 %v821
        %v1218 = vunpack.c.l.b16 %v822
        %v1219 = vunpack.c.l.b16 %v823
        %v1220 = vunpack.c.l.b16 %v824
        %v1221 = vunpack.c.l.b16 %v825
        %v1222 = vunpack.c.l.b16 %v826
        %v1223 = vunpack.c.l.b16 %v827
        %v1224 = vunpack.c.l.b16 %v828
        %v1225 = vunpack.c.l.b16 %v829
        %v1226 = vunpack.c.l.b16 %v830
        %v1227 = vunpack.c.l.b16 %v831
        %v1228 = vunpack.c.l.b16 %v832
        %v1229 = vunpack.c.l.b16 %v833
        %v1230 = vunpack.c.l.b16 %v834
        %v1231 = vunpack.c.l.b16 %v835
        %v1232 = vunpack.c.l.b16 %v836
        %v1233 = vunpack.c.l.b16 %v837
        %v1234 = vunpack.c.l.b16 %v838
        %v1235 = vunpack.c.l.b16 %v839
        %v1236 = vunpack.c.l.b16 %v840
        %v1237 = vunpack.c.l.b16 %v841
        %v1238 = vunpack.c.l.b16 %v842
        %v1239 = vunpack.c.l.b16 %v843
        %v1240 = vunpack.c.l.b16 %v844
        %v1241 = vunpack.c.l.b16 %v845
        %v1242 = vunpack.c.l.b16 %v846
        %v1243 = vunpack.c.l.b16 %v847
        %v1244 = vunpack.c.l.b16 %v848
        %v1245 = vunpack.c.l.b16 %v849
        %v1246 = vunpack.c.l.b16 %v850
        %v1247 = vunpack.c.l.b16 %v851
        %v1248 = vunpack.c.l.b16 %v852
        %v1249 = vunpack.c.l.b16 %v853
        %v1250 = vunpack.c.l.b16 %v854
        %v1251 = vunpack.c.l.b16 %v855
        %v1252 = vunpack.c.l.b16 %v856
        %v1253 = vunpack.c.l.b16 %v857
        %v1254 = vunpack.c.l.b16 %v858
        %v1255 = vunpack.c.l.b16 %v859
        %v1256 = vunpack.c.l.b16 %v860
        %v1257 = vunpack.c.l.b16 %v861
        %v1258 = vunpack.c.l.b16 %v862
        %v1259 = vunpack.c.l.b16 %v863
        %v1260 = vunpack.c.l.b16 %v864
        %v1261 = vunpack.c.l.b16 %v865
        %v1262 = vunpack.c.l.b16 %v866
        %v1263 = vunpack.c.l.b16 %v867
        %v1264 = vunpack.c.l.b16 %v868
        %v1265 = vunpack.c.l.b16 %v869
        %v1266 = vunpack.c.l.b16 %v870
        %v1267 = vunpack.c.l.b16 %v871
        %v1268 = vunpack.c.l.b16 %v872
        %v1269 = vunpack.c.l.b16 %v873
        %v1270 = vunpack.c.l.b16 %v874
        %v1271 = vunpack.c.l.b16 %v875
        %v1272 = vunpack.c.l.b16 %v876
        %v1273 = vunpack.c.l.b16 %v877
        %v1274 = vunpack.c.l.b16 %v878
        %v1275 = vunpack.c.l.b16 %v879
        %v1276 = vunpack.c.l.b16 %v880
        %v1277 = vunpack.c.l.b16 %v881
        %v1278 = vunpack.c.l.b16 %v882
        %v1279 = vunpack.c.l.b16 %v883
        %v1280 = vunpack.c.l.b16 %v884
        %v1281 = vunpack.c.l.b16 %v885
        %v1282 = vunpack.c.l.b16 %v886
        %v1283 = vunpack.c.l.b16 %v887
        %v1284 = vunpack.c.l.b16 %v888
        %v1285 = vunpack.c.l.b16 %v889
        %v1286 = vunpack.c.l.b16 %v890
        %v1287 = vunpack.c.l.b16 %v891
        %v1288 = vunpack.c.l.b16 %v892
        %v1289 = vunpack.c.l.b16 %v893
        %v1290 = vunpack.c.l.b16 %v894
        %v1291 = vunpack.c.l.b16 %v895
        %v1292 = vunpack.c.l.b16 %v896
        %v1293 = vunpack.c.l.b16 %v897
        %v1294 = vunpack.c.l.b16 %v898
        %v1295 = vunpack.c.l.b16 %v899
        %v1296 = vunpack.c.l.b16 %v900
        %v1297 = vunpack.c.l.b16 %v901
        %v1298 = vunpack.c.l.b16 %v902
        %v1299 = vunpack.c.l.b16 %v903
        %v1300 = vunpack.c.l.b16 %v904
        %v1301 = vunpack.c.l.b16 %v905
        %v1302 = vunpack.c.l.b16 %v906
        %v1303 = vunpack.c.l.b16 %v907
        %v1304 = vunpack.c.l.b16 %v908
        %v1305 = vunpack.c.l.b16 %v909
        %v1306 = vunpack.c.l.b16 %v910
        %v1307 = vunpack.c.l.b16 %v911
        %v1308 = vunpack.c.l.b16 %v912
        %v1309 = vunpack.c.l.b16 %v913
        %v1310 = vunpack.c.l.b16 %v914
        %v1311 = vunpack.c.l.b16 %v915
        %v1312 = vunpack.c.l.b16 %v916
        %v1313 = vunpack.c.l.b16 %v917
        %v1314 = vunpack.c.l.b16 %v918
        %v1315 = vunpack.c.l.b16 %v919
        %v1316 = vunpack.c.l.b16 %v920
        %v1317 = vunpack.c.l.b16 %v921
        %v1318 = vunpack.c.l.b16 %v922
        %v1319 = vunpack.c.l.b16 %v923
        %v1320 = vunpack.c.l.b16 %v924
        %v1321 = vunpack.c.l.b16 %v925
        %v1322 = vunpack.c.l.b16 %v926
        %v1323 = vunpack.c.l.b16 %v927
        %v1324 = vunpack.c.l.b16 %v928
        %v1325 = vunpack.c.l.b16 %v929
        %v1326 = vunpack.c.l.b16 %v930
        %v1327 = vunpack.c.l.b16 %v931
        %v1328 = vunpack.c.l.b16 %v932
        %v1329 = vunpack.c.l.b16 %v933
        %v1330 = vunpack.c.l.b16 %v934
        %v1331 = vunpack.c.l.b16 %v935
        %v1332 = vunpack.c.l.b16 %v936
        %v1333 = vunpack.c.l.b16 %v937
        %v1334 = vunpack.c.l.b16 %v938
        %v1335 = vunpack.c.l.b16 %v939
        %v1336 = vunpack.c.l.b16 %v940
        %v1337 = vunpack.c.l.b16 %v941
        %v1338 = vunpack.c.l.b16 %v942
        %v1339 = vunpack.c.l.b16 %v943
        %v1340 = vunpack.c.l.b16 %v944
        %v1341 = vunpack.c.l.b16 %v945
        %v1342 = vunpack.c.l.b16 %v946
        %v1343 = vunpack.c.l.b16 %v947
        %v1344 = vunpack.c.l.b16 %v948
        %v1345 = vunpack.c.l.b16 %v949
        %v1346 = vunpack.c.l.b16 %v950
        %v1347 = vunpack.c.l.b16 %v951
        %v1348 = vunpack.c.l.b16 %v952
        %v1349 = vunpack.c.l.b16 %v953
        %v1350 = vunpack.c.l.b16 %v954
        %v1351 = vunpack.c.l.b16 %v955
        %v1352 = vunpack.c.l.b16 %v956
        %v1353 = vunpack.c.l.b16 %v957
        %v1354 = vunpack.c.l.b16 %v958
        %v1355 = vunpack.c.l.b16 %v959
        %v1356 = vunpack.c.l.b16 %v960
        %v1357 = vunpack.c.l.b16 %v961
        %v1358 = vunpack.c.l.b16 %v962
        %v1359 = vunpack.c.l.b16 %v963
        %v1360 = vunpack.c.l.b16 %v964
        %v1361 = vunpack.c.l.b16 %v965
        %v1362 = vunpack.c.l.b16 %v966
        %v1363 = vunpack.c.l.b16 %v967
        %v1364 = vunpack.c.l.b16 %v968
        %v1365 = vunpack.c.l.b16 %v969
        %v1366 = vunpack.c.l.b16 %v970
        %v1367 = vunpack.c.l.b16 %v971
        %v1368 = vunpack.c.l.b16 %v972
        %v1369 = vunpack.c.l.b16 %v973
        %v1370 = vunpack.c.l.b16 %v974
        %v1371 = vunpack.c.l.b16 %v975
        %v1372 = vunpack.c.l.b16 %v976
        %v1373 = vunpack.c.l.b16 %v977
        %v1374 = vunpack.c.l.b16 %v978
        %v1375 = vunpack.c.l.b16 %v979
        %v1376 = vunpack.c.l.b16 %v980
        %v1377 = vunpack.c.l.b16 %v981
        %v1378 = vunpack.c.l.b16 %v982
        %v1379 = vunpack.c.l.b16 %v983
        %v1380 = vunpack.c.l.b16 %v984
        %v1381 = vunpack.c.l.b16 %v985
        %v1382 = vunpack.c.l.b16 %v986
        %v1383 = vunpack.c.l.b16 %v987
        %v1384 = vunpack.c.l.b16 %v988
        %v1385 = vunpack.c.l.b16 %v989
        %v1386 = vunpack.c.l.b16 %v990
        %v1387 = vunpack.c.l.b16 %v991
        %v1388 = vpack.c.b16 %v1193, %v1192
        %v1389 = vpack.c.b16 %v1195, %v1194
        %v1390 = vpack.c.b16 %v1197, %v1196
        %v1391 = vpack.c.b16 %v1199, %v1198
        %v1392 = vpack.c.b16 %v1201, %v1200
        %v1393 = vpack.c.b16 %v1203, %v1202
        %v1394 = vpack.c.b16 %v1205, %v1204
        %v1395 = vpack.c.b16 %v1207, %v1206
        %v1396 = vpack.c.b16 %v1209, %v1208
        %v1397 = vpack.c.b16 %v1211, %v1210
        %v1398 = vpack.c.b16 %v1213, %v1212
        %v1399 = vpack.c.b16 %v1215, %v1214
        %v1400 = vpack.c.b16 %v1217, %v1216
        %v1401 = vpack.c.b16 %v1219, %v1218
        %v1402 = vpack.c.b16 %v1221, %v1220
        %v1403 = vpack.c.b16 %v1223, %v1222
        %v1404 = vpack.c.b16 %v1225, %v1224
        %v1405 = vpack.c.b16 %v1227, %v1226
        %v1406 = vpack.c.b16 %v1229, %v1228
        %v1407 = vpack.c.b16 %v1231, %v1230
        %v1408 = vpack.c.b16 %v1233, %v1232
        %v1409 = vpack.c.b16 %v1235, %v1234
        %v1410 = vpack.c.b16 %v1237, %v1236
        %v1411 = vpack.c.b16 %v1239, %v1238
        %v1412 = vpack.c.b16 %v1241, %v1240
        %v1413 = vpack.c.b16 %v1243, %v1242
        %v1414 = vpack.c.b16 %v1245, %v1244
        %v1415 = vpack.c.b16 %v1247, %v1246
        %v1416 = vpack.c.b16 %v1249, %v1248
        %v1417 = vpack.c.b16 %v1251, %v1250
        %v1418 = vpack.c.b16 %v1253, %v1252
        %v1419 = vpack.c.b16 %v1255, %v1254
        %v1420 = vpack.c.b16 %v1257, %v1256
        %v1421 = vpack.c.b16 %v1259, %v1258
        %v1422 = vpack.c.b16 %v1261, %v1260
        %v1423 = vpack.c.b16 %v1263, %v1262
        %v1424 = vpack.c.b16 %v1265, %v1264
        %v1425 = vpack.c.b16 %v1267, %v1266
        %v1426 = vpack.c.b16 %v1269, %v1268
        %v1427 = vpack.c.b16 %v1271, %v1270
        %v1428 = vpack.c.b16 %v1273, %v1272
        %v1429 = vpack.c.b16 %v1275, %v1274
        %v1430 = vpack.c.b16 %v1277, %v1276
        %v1431 = vpack.c.b16 %v1279, %v1278
        %v1432 = vpack.c.b16 %v1281, %v1280
        %v1433 = vpack.c.b16 %v1283, %v1282
        %v1434 = vpack.c.b16 %v1285, %v1284
        %v1435 = vpack.c.b16 %v1287, %v1286
        %v1436 = vpack.c.b16 %v1289, %v1288
        %v1437 = vpack.c.b16 %v1291, %v1290
        %v1438 = vpack.c.b16 %v1293, %v1292
        %v1439 = vpack.c.b16 %v1295, %v1294
        %v1440 = vpack.c.b16 %v1297, %v1296
        %v1441 = vpack.c.b16 %v1299, %v1298
        %v1442 = vpack.c.b16 %v1301, %v1300
        %v1443 = vpack.c.b16 %v1303, %v1302
        %v1444 = vpack.c.b16 %v1305, %v1304
        %v1445 = vpack.c.b16 %v1307, %v1306
        %v1446 = vpack.c.b16 %v1309, %v1308
        %v1447 = vpack.c.b16 %v1311, %v1310
        %v1448 = vpack.c.b16 %v1313, %v1312
        %v1449 = vpack.c.b16 %v1315, %v1314
        %v1450 = vpack.c.b16 %v1317, %v1316
        %v1451 = vpack.c.b16 %v1319, %v1318
        %v1452 = vpack.c.b16 %v1321, %v1320
        %v1453 = vpack.c.b16 %v1323, %v1322
        %v1454 = vpack.c.b16 %v1325, %v1324
        %v1455 = vpack.c.b16 %v1327, %v1326
        %v1456 = vpack.c.b16 %v1329, %v1328
        %v1457 = vpack.c.b16 %v1331, %v1330
        %v1458 = vpack.c.b16 %v1333, %v1332
        %v1459 = vpack.c.b16 %v1335, %v1334
        %v1460 = vpack.c.b16 %v1337, %v1336
        %v1461 = vpack.c.b16 %v1339, %v1338
        %v1462 = vpack.c.b16 %v1341, %v1340
        %v1463 = vpack.c.b16 %v1343, %v1342
        %v1464 = vpack.c.b16 %v1345, %v1344
        %v1465 = vpack.c.b16 %v1347, %v1346
        %v1466 = vpack.c.b16 %v1349, %v1348
        %v1467 = vpack.c.b16 %v1351, %v1350
        %v1468 = vpack.c.b16 %v1353, %v1352
        %v1469 = vpack.c.b16 %v1355, %v1354
        %v1470 = vpack.c.b16 %v1357, %v1356
        %v1471 = vpack.c.b16 %v1359, %v1358
        %v1472 = vpack.c.b16 %v1361, %v1360
        %v1473 = vpack.c.b16 %v1363, %v1362
        %v1474 = vpack.c.b16 %v1365, %v1364
        %v1475 = vpack.c.b16 %v1367, %v1366
        %v1476 = vpack.c.b16 %v1369, %v1368
        %v1477 = vpack.c.b16 %v1371, %v1370
        %v1478 = vpack.c.b16 %v1373, %v1372
        %v1479 = vpack.c.b16 %v1375, %v1374
        %v1480 = vpack.c.b16 %v1377, %v1376
        %v1481 = vpack.c.b16 %v1379, %v1378
        %v1482 = vpack.c.b16 %v1381, %v1380
        %v1483 = vpack.c.b16 %v1383, %v1382
        %v1484 = vpack.c.b16 %v1385, %v1384
        %v1485 = vpack.c.b16 %v1387, %v1386
        %vm1584 = vcmask 261120
        %v1586 = vsel %vm1584, %v704, 0
        %v1589 = vsel %vm1584, %v717, 0
        %v1592 = vsel %vm1584, %v730, 0
        %v1595 = vsel %vm1584, %v743, 0
        %v1598 = vsel %vm1584, %v756, 0
        %v1601 = vsel %vm1584, %v769, 0
        %v1604 = vsel %vm1584, %v782, 0
        %v1607 = vsel %vm1584, %v795, 0
        %1609 = vmatpush.bf16.msra.mxu0 %v1395
        %1610 = vmatpush.bf16.msra.mxu0 %v1394
        %1611 = vmatpush.bf16.msra.mxu0 %v1393
        %1612 = vmatpush.bf16.msra.mxu0 %v1392
        %1613 = vmatpush.bf16.msra.mxu0 %v1391
        %1614 = vmatpush.bf16.msra.mxu0 %v1390
        %1615 = vmatpush.bf16.msra.mxu0 %v1389
        %1616 = vmatpush.bf16.msra.mxu0 %v1388
        %1617 = vmatmul.bf16.gmra.mxu0 %v692
        %v1618 = vpop.f32.mrf.mxu0
        %v1619 = vadd.f32 %v994, %v1618
        %v1620 = vpop.f32.mrf.mxu0
        %v1621 = vadd.f32 %v994, %v1620
        %1622 = vmatmul.bf16.gmra.mxu0 %v705
        %v1623 = vpop.f32.mrf.mxu0
        %v1624 = vadd.f32 %v994, %v1623
        %v1625 = vpop.f32.mrf.mxu0
        %v1626 = vadd.f32 %v994, %v1625
        %1627 = vmatmul.bf16.gmra.mxu0 %v718
        %v1628 = vpop.f32.mrf.mxu0
        %v1629 = vadd.f32 %v994, %v1628
        %v1630 = vpop.f32.mrf.mxu0
        %v1631 = vadd.f32 %v994, %v1630
        %1632 = vmatmul.bf16.gmra.mxu0 %v731
        %v1633 = vpop.f32.mrf.mxu0
        %v1634 = vadd.f32 %v994, %v1633
        %v1635 = vpop.f32.mrf.mxu0
        %v1636 = vadd.f32 %v994, %v1635
        %1637 = vmatmul.bf16.gmra.mxu0 %v744
        %v1638 = vpop.f32.mrf.mxu0
        %v1639 = vadd.f32 %v994, %v1638
        %v1640 = vpop.f32.mrf.mxu0
        %v1641 = vadd.f32 %v994, %v1640
        %1642 = vmatmul.bf16.gmra.mxu0 %v757
        %v1643 = vpop.f32.mrf.mxu0
        %v1644 = vadd.f32 %v994, %v1643
        %v1645 = vpop.f32.mrf.mxu0
        %v1646 = vadd.f32 %v994, %v1645
        %1647 = vmatmul.bf16.gmra.mxu0 %v770
        %v1648 = vpop.f32.mrf.mxu0
        %v1649 = vadd.f32 %v994, %v1648
        %v1650 = vpop.f32.mrf.mxu0
        %v1651 = vadd.f32 %v994, %v1650
        %1652 = vmatmul.bf16.gmra.mxu0 %v783
        %v1653 = vpop.f32.mrf.mxu0
        %v1654 = vadd.f32 %v994, %v1653
        %v1655 = vpop.f32.mrf.mxu0
        %v1656 = vadd.f32 %v994, %v1655
        %1657 = vdwg.mxu0
        %1658 = vmatpush.bf16.msra.mxu0 %v1403
        %1659 = vmatpush.bf16.msra.mxu0 %v1402
        %1660 = vmatpush.bf16.msra.mxu0 %v1401
        %1661 = vmatpush.bf16.msra.mxu0 %v1400
        %1662 = vmatpush.bf16.msra.mxu0 %v1399
        %1663 = vmatpush.bf16.msra.mxu0 %v1398
        %1664 = vmatpush.bf16.msra.mxu0 %v1397
        %1665 = vmatpush.bf16.msra.mxu0 %v1396
        %1666 = vmatmul.bf16.gmra.mxu0 %v693
        %v1667 = vpop.f32.mrf.mxu0
        %v1668 = vadd.f32 %v1619, %v1667
        %v1669 = vpop.f32.mrf.mxu0
        %v1670 = vadd.f32 %v1621, %v1669
        %1671 = vmatmul.bf16.gmra.mxu0 %v706
        %v1672 = vpop.f32.mrf.mxu0
        %v1673 = vadd.f32 %v1624, %v1672
        %v1674 = vpop.f32.mrf.mxu0
        %v1675 = vadd.f32 %v1626, %v1674
        %1676 = vmatmul.bf16.gmra.mxu0 %v719
        %v1677 = vpop.f32.mrf.mxu0
        %v1678 = vadd.f32 %v1629, %v1677
        %v1679 = vpop.f32.mrf.mxu0
        %v1680 = vadd.f32 %v1631, %v1679
        %1681 = vmatmul.bf16.gmra.mxu0 %v732
        %v1682 = vpop.f32.mrf.mxu0
        %v1683 = vadd.f32 %v1634, %v1682
        %v1684 = vpop.f32.mrf.mxu0
        %v1685 = vadd.f32 %v1636, %v1684
        %1686 = vmatmul.bf16.gmra.mxu0 %v745
        %v1687 = vpop.f32.mrf.mxu0
        %v1688 = vadd.f32 %v1639, %v1687
        %v1689 = vpop.f32.mrf.mxu0
        %v1690 = vadd.f32 %v1641, %v1689
        %1691 = vmatmul.bf16.gmra.mxu0 %v758
        %v1692 = vpop.f32.mrf.mxu0
        %v1693 = vadd.f32 %v1644, %v1692
        %v1694 = vpop.f32.mrf.mxu0
        %v1695 = vadd.f32 %v1646, %v1694
        %1696 = vmatmul.bf16.gmra.mxu0 %v771
        %v1697 = vpop.f32.mrf.mxu0
        %v1698 = vadd.f32 %v1649, %v1697
        %v1699 = vpop.f32.mrf.mxu0
        %v1700 = vadd.f32 %v1651, %v1699
        %1701 = vmatmul.bf16.gmra.mxu0 %v784
        %v1702 = vpop.f32.mrf.mxu0
        %v1703 = vadd.f32 %v1654, %v1702
        %v1704 = vpop.f32.mrf.mxu0
        %v1705 = vadd.f32 %v1656, %v1704
        %1706 = vdwg.mxu0
        %1707 = vmatpush.bf16.msra.mxu0 %v1411
        %1708 = vmatpush.bf16.msra.mxu0 %v1410
        %1709 = vmatpush.bf16.msra.mxu0 %v1409
        %1710 = vmatpush.bf16.msra.mxu0 %v1408
        %1711 = vmatpush.bf16.msra.mxu0 %v1407
        %1712 = vmatpush.bf16.msra.mxu0 %v1406
        %1713 = vmatpush.bf16.msra.mxu0 %v1405
        %1714 = vmatpush.bf16.msra.mxu0 %v1404
        %1715 = vmatmul.bf16.gmra.mxu0 %v694
        %v1716 = vpop.f32.mrf.mxu0
        %v1717 = vadd.f32 %v1668, %v1716
        %v1718 = vpop.f32.mrf.mxu0
        %v1719 = vadd.f32 %v1670, %v1718
        %1720 = vmatmul.bf16.gmra.mxu0 %v707
        %v1721 = vpop.f32.mrf.mxu0
        %v1722 = vadd.f32 %v1673, %v1721
        %v1723 = vpop.f32.mrf.mxu0
        %v1724 = vadd.f32 %v1675, %v1723
        %1725 = vmatmul.bf16.gmra.mxu0 %v720
        %v1726 = vpop.f32.mrf.mxu0
        %v1727 = vadd.f32 %v1678, %v1726
        %v1728 = vpop.f32.mrf.mxu0
        %v1729 = vadd.f32 %v1680, %v1728
        %1730 = vmatmul.bf16.gmra.mxu0 %v733
        %v1731 = vpop.f32.mrf.mxu0
        %v1732 = vadd.f32 %v1683, %v1731
        %v1733 = vpop.f32.mrf.mxu0
        %v1734 = vadd.f32 %v1685, %v1733
        %1735 = vmatmul.bf16.gmra.mxu0 %v746
        %v1736 = vpop.f32.mrf.mxu0
        %v1737 = vadd.f32 %v1688, %v1736
        %v1738 = vpop.f32.mrf.mxu0
        %v1739 = vadd.f32 %v1690, %v1738
        %1740 = vmatmul.bf16.gmra.mxu0 %v759
        %v1741 = vpop.f32.mrf.mxu0
        %v1742 = vadd.f32 %v1693, %v1741
        %v1743 = vpop.f32.mrf.mxu0
        %v1744 = vadd.f32 %v1695, %v1743
        %1745 = vmatmul.bf16.gmra.mxu0 %v772
        %v1746 = vpop.f32.mrf.mxu0
        %v1747 = vadd.f32 %v1698, %v1746
        %v1748 = vpop.f32.mrf.mxu0
        %v1749 = vadd.f32 %v1700, %v1748
        %1750 = vmatmul.bf16.gmra.mxu0 %v785
        %v1751 = vpop.f32.mrf.mxu0
        %v1752 = vadd.f32 %v1703, %v1751
        %v1753 = vpop.f32.mrf.mxu0
        %v1754 = vadd.f32 %v1705, %v1753
        %1755 = vdwg.mxu0
        %1756 = vmatpush.bf16.msra.mxu0 %v1419
        %1757 = vmatpush.bf16.msra.mxu0 %v1418
        %1758 = vmatpush.bf16.msra.mxu0 %v1417
        %1759 = vmatpush.bf16.msra.mxu0 %v1416
        %1760 = vmatpush.bf16.msra.mxu0 %v1415
        %1761 = vmatpush.bf16.msra.mxu0 %v1414
        %1762 = vmatpush.bf16.msra.mxu0 %v1413
        %1763 = vmatpush.bf16.msra.mxu0 %v1412
        %1764 = vmatmul.bf16.gmra.mxu0 %v695
        %v1765 = vpop.f32.mrf.mxu0
        %v1766 = vadd.f32 %v1717, %v1765
        %v1767 = vpop.f32.mrf.mxu0
        %v1768 = vadd.f32 %v1719, %v1767
        %1769 = vmatmul.bf16.gmra.mxu0 %v708
        %v1770 = vpop.f32.mrf.mxu0
        %v1771 = vadd.f32 %v1722, %v1770
        %v1772 = vpop.f32.mrf.mxu0
        %v1773 = vadd.f32 %v1724, %v1772
        %1774 = vmatmul.bf16.gmra.mxu0 %v721
        %v1775 = vpop.f32.mrf.mxu0
        %v1776 = vadd.f32 %v1727, %v1775
        %v1777 = vpop.f32.mrf.mxu0
        %v1778 = vadd.f32 %v1729, %v1777
        %1779 = vmatmul.bf16.gmra.mxu0 %v734
        %v1780 = vpop.f32.mrf.mxu0
        %v1781 = vadd.f32 %v1732, %v1780
        %v1782 = vpop.f32.mrf.mxu0
        %v1783 = vadd.f32 %v1734, %v1782
        %1784 = vmatmul.bf16.gmra.mxu0 %v747
        %v1785 = vpop.f32.mrf.mxu0
        %v1786 = vadd.f32 %v1737, %v1785
        %v1787 = vpop.f32.mrf.mxu0
        %v1788 = vadd.f32 %v1739, %v1787
        %1789 = vmatmul.bf16.gmra.mxu0 %v760
        %v1790 = vpop.f32.mrf.mxu0
        %v1791 = vadd.f32 %v1742, %v1790
        %v1792 = vpop.f32.mrf.mxu0
        %v1793 = vadd.f32 %v1744, %v1792
        %1794 = vmatmul.bf16.gmra.mxu0 %v773
        %v1795 = vpop.f32.mrf.mxu0
        %v1796 = vadd.f32 %v1747, %v1795
        %v1797 = vpop.f32.mrf.mxu0
        %v1798 = vadd.f32 %v1749, %v1797
        %1799 = vmatmul.bf16.gmra.mxu0 %v786
        %v1800 = vpop.f32.mrf.mxu0
        %v1801 = vadd.f32 %v1752, %v1800
        %v1802 = vpop.f32.mrf.mxu0
        %v1803 = vadd.f32 %v1754, %v1802
        %1804 = vdwg.mxu0
        %1805 = vmatpush.bf16.msra.mxu0 %v1427
        %1806 = vmatpush.bf16.msra.mxu0 %v1426
        %1807 = vmatpush.bf16.msra.mxu0 %v1425
        %1808 = vmatpush.bf16.msra.mxu0 %v1424
        %1809 = vmatpush.bf16.msra.mxu0 %v1423
        %1810 = vmatpush.bf16.msra.mxu0 %v1422
        %1811 = vmatpush.bf16.msra.mxu0 %v1421
        %1812 = vmatpush.bf16.msra.mxu0 %v1420
        %1813 = vmatmul.bf16.gmra.mxu0 %v696
        %v1814 = vpop.f32.mrf.mxu0
        %v1815 = vadd.f32 %v1766, %v1814
        %v1816 = vpop.f32.mrf.mxu0
        %v1817 = vadd.f32 %v1768, %v1816
        %1818 = vmatmul.bf16.gmra.mxu0 %v709
        %v1819 = vpop.f32.mrf.mxu0
        %v1820 = vadd.f32 %v1771, %v1819
        %v1821 = vpop.f32.mrf.mxu0
        %v1822 = vadd.f32 %v1773, %v1821
        %1823 = vmatmul.bf16.gmra.mxu0 %v722
        %v1824 = vpop.f32.mrf.mxu0
        %v1825 = vadd.f32 %v1776, %v1824
        %v1826 = vpop.f32.mrf.mxu0
        %v1827 = vadd.f32 %v1778, %v1826
        %1828 = vmatmul.bf16.gmra.mxu0 %v735
        %v1829 = vpop.f32.mrf.mxu0
        %v1830 = vadd.f32 %v1781, %v1829
        %v1831 = vpop.f32.mrf.mxu0
        %v1832 = vadd.f32 %v1783, %v1831
        %1833 = vmatmul.bf16.gmra.mxu0 %v748
        %v1834 = vpop.f32.mrf.mxu0
        %v1835 = vadd.f32 %v1786, %v1834
        %v1836 = vpop.f32.mrf.mxu0
        %v1837 = vadd.f32 %v1788, %v1836
        %1838 = vmatmul.bf16.gmra.mxu0 %v761
        %v1839 = vpop.f32.mrf.mxu0
        %v1840 = vadd.f32 %v1791, %v1839
        %v1841 = vpop.f32.mrf.mxu0
        %v1842 = vadd.f32 %v1793, %v1841
        %1843 = vmatmul.bf16.gmra.mxu0 %v774
        %v1844 = vpop.f32.mrf.mxu0
        %v1845 = vadd.f32 %v1796, %v1844
        %v1846 = vpop.f32.mrf.mxu0
        %v1847 = vadd.f32 %v1798, %v1846
        %1848 = vmatmul.bf16.gmra.mxu0 %v787
        %v1849 = vpop.f32.mrf.mxu0
        %v1850 = vadd.f32 %v1801, %v1849
        %v1851 = vpop.f32.mrf.mxu0
        %v1852 = vadd.f32 %v1803, %v1851
        %1853 = vdwg.mxu0
        %1854 = vmatpush.bf16.msra.mxu0 %v1435
        %1855 = vmatpush.bf16.msra.mxu0 %v1434
        %1856 = vmatpush.bf16.msra.mxu0 %v1433
        %1857 = vmatpush.bf16.msra.mxu0 %v1432
        %1858 = vmatpush.bf16.msra.mxu0 %v1431
        %1859 = vmatpush.bf16.msra.mxu0 %v1430
        %1860 = vmatpush.bf16.msra.mxu0 %v1429
        %1861 = vmatpush.bf16.msra.mxu0 %v1428
        %1862 = vmatmul.bf16.gmra.mxu0 %v697
        %v1863 = vpop.f32.mrf.mxu0
        %v1864 = vadd.f32 %v1815, %v1863
        %v1865 = vpop.f32.mrf.mxu0
        %v1866 = vadd.f32 %v1817, %v1865
        %1867 = vmatmul.bf16.gmra.mxu0 %v710
        %v1868 = vpop.f32.mrf.mxu0
        %v1869 = vadd.f32 %v1820, %v1868
        %v1870 = vpop.f32.mrf.mxu0
        %v1871 = vadd.f32 %v1822, %v1870
        %1872 = vmatmul.bf16.gmra.mxu0 %v723
        %v1873 = vpop.f32.mrf.mxu0
        %v1874 = vadd.f32 %v1825, %v1873
        %v1875 = vpop.f32.mrf.mxu0
        %v1876 = vadd.f32 %v1827, %v1875
        %1877 = vmatmul.bf16.gmra.mxu0 %v736
        %v1878 = vpop.f32.mrf.mxu0
        %v1879 = vadd.f32 %v1830, %v1878
        %v1880 = vpop.f32.mrf.mxu0
        %v1881 = vadd.f32 %v1832, %v1880
        %1882 = vmatmul.bf16.gmra.mxu0 %v749
        %v1883 = vpop.f32.mrf.mxu0
        %v1884 = vadd.f32 %v1835, %v1883
        %v1885 = vpop.f32.mrf.mxu0
        %v1886 = vadd.f32 %v1837, %v1885
        %1887 = vmatmul.bf16.gmra.mxu0 %v762
        %v1888 = vpop.f32.mrf.mxu0
        %v1889 = vadd.f32 %v1840, %v1888
        %v1890 = vpop.f32.mrf.mxu0
        %v1891 = vadd.f32 %v1842, %v1890
        %1892 = vmatmul.bf16.gmra.mxu0 %v775
        %v1893 = vpop.f32.mrf.mxu0
        %v1894 = vadd.f32 %v1845, %v1893
        %v1895 = vpop.f32.mrf.mxu0
        %v1896 = vadd.f32 %v1847, %v1895
        %1897 = vmatmul.bf16.gmra.mxu0 %v788
        %v1898 = vpop.f32.mrf.mxu0
        %v1899 = vadd.f32 %v1850, %v1898
        %v1900 = vpop.f32.mrf.mxu0
        %v1901 = vadd.f32 %v1852, %v1900
        %1902 = vdwg.mxu0
        %1903 = vmatpush.bf16.msra.mxu0 %v1443
        %1904 = vmatpush.bf16.msra.mxu0 %v1442
        %1905 = vmatpush.bf16.msra.mxu0 %v1441
        %1906 = vmatpush.bf16.msra.mxu0 %v1440
        %1907 = vmatpush.bf16.msra.mxu0 %v1439
        %1908 = vmatpush.bf16.msra.mxu0 %v1438
        %1909 = vmatpush.bf16.msra.mxu0 %v1437
        %1910 = vmatpush.bf16.msra.mxu0 %v1436
        %1911 = vmatmul.bf16.gmra.mxu0 %v698
        %v1912 = vpop.f32.mrf.mxu0
        %v1913 = vadd.f32 %v1864, %v1912
        %v1914 = vpop.f32.mrf.mxu0
        %v1915 = vadd.f32 %v1866, %v1914
        %1916 = vmatmul.bf16.gmra.mxu0 %v711
        %v1917 = vpop.f32.mrf.mxu0
        %v1918 = vadd.f32 %v1869, %v1917
        %v1919 = vpop.f32.mrf.mxu0
        %v1920 = vadd.f32 %v1871, %v1919
        %1921 = vmatmul.bf16.gmra.mxu0 %v724
        %v1922 = vpop.f32.mrf.mxu0
        %v1923 = vadd.f32 %v1874, %v1922
        %v1924 = vpop.f32.mrf.mxu0
        %v1925 = vadd.f32 %v1876, %v1924
        %1926 = vmatmul.bf16.gmra.mxu0 %v737
        %v1927 = vpop.f32.mrf.mxu0
        %v1928 = vadd.f32 %v1879, %v1927
        %v1929 = vpop.f32.mrf.mxu0
        %v1930 = vadd.f32 %v1881, %v1929
        %1931 = vmatmul.bf16.gmra.mxu0 %v750
        %v1932 = vpop.f32.mrf.mxu0
        %v1933 = vadd.f32 %v1884, %v1932
        %v1934 = vpop.f32.mrf.mxu0
        %v1935 = vadd.f32 %v1886, %v1934
        %1936 = vmatmul.bf16.gmra.mxu0 %v763
        %v1937 = vpop.f32.mrf.mxu0
        %v1938 = vadd.f32 %v1889, %v1937
        %v1939 = vpop.f32.mrf.mxu0
        %v1940 = vadd.f32 %v1891, %v1939
        %1941 = vmatmul.bf16.gmra.mxu0 %v776
        %v1942 = vpop.f32.mrf.mxu0
        %v1943 = vadd.f32 %v1894, %v1942
        %v1944 = vpop.f32.mrf.mxu0
        %v1945 = vadd.f32 %v1896, %v1944
        %1946 = vmatmul.bf16.gmra.mxu0 %v789
        %v1947 = vpop.f32.mrf.mxu0
        %v1948 = vadd.f32 %v1899, %v1947
        %v1949 = vpop.f32.mrf.mxu0
        %v1950 = vadd.f32 %v1901, %v1949
        %1951 = vdwg.mxu0
        %1952 = vmatpush.bf16.msra.mxu0 %v1451
        %1953 = vmatpush.bf16.msra.mxu0 %v1450
        %1954 = vmatpush.bf16.msra.mxu0 %v1449
        %1955 = vmatpush.bf16.msra.mxu0 %v1448
        %1956 = vmatpush.bf16.msra.mxu0 %v1447
        %1957 = vmatpush.bf16.msra.mxu0 %v1446
        %1958 = vmatpush.bf16.msra.mxu0 %v1445
        %1959 = vmatpush.bf16.msra.mxu0 %v1444
        %1960 = vmatmul.bf16.gmra.mxu0 %v699
        %v1961 = vpop.f32.mrf.mxu0
        %v1962 = vadd.f32 %v1913, %v1961
        %v1963 = vpop.f32.mrf.mxu0
        %v1964 = vadd.f32 %v1915, %v1963
        %1965 = vmatmul.bf16.gmra.mxu0 %v712
        %v1966 = vpop.f32.mrf.mxu0
        %v1967 = vadd.f32 %v1918, %v1966
        %v1968 = vpop.f32.mrf.mxu0
        %v1969 = vadd.f32 %v1920, %v1968
        %1970 = vmatmul.bf16.gmra.mxu0 %v725
        %v1971 = vpop.f32.mrf.mxu0
        %v1972 = vadd.f32 %v1923, %v1971
        %v1973 = vpop.f32.mrf.mxu0
        %v1974 = vadd.f32 %v1925, %v1973
        %1975 = vmatmul.bf16.gmra.mxu0 %v738
        %v1976 = vpop.f32.mrf.mxu0
        %v1977 = vadd.f32 %v1928, %v1976
        %v1978 = vpop.f32.mrf.mxu0
        %v1979 = vadd.f32 %v1930, %v1978
        %1980 = vmatmul.bf16.gmra.mxu0 %v751
        %v1981 = vpop.f32.mrf.mxu0
        %v1982 = vadd.f32 %v1933, %v1981
        %v1983 = vpop.f32.mrf.mxu0
        %v1984 = vadd.f32 %v1935, %v1983
        %1985 = vmatmul.bf16.gmra.mxu0 %v764
        %v1986 = vpop.f32.mrf.mxu0
        %v1987 = vadd.f32 %v1938, %v1986
        %v1988 = vpop.f32.mrf.mxu0
        %v1989 = vadd.f32 %v1940, %v1988
        %1990 = vmatmul.bf16.gmra.mxu0 %v777
        %v1991 = vpop.f32.mrf.mxu0
        %v1992 = vadd.f32 %v1943, %v1991
        %v1993 = vpop.f32.mrf.mxu0
        %v1994 = vadd.f32 %v1945, %v1993
        %1995 = vmatmul.bf16.gmra.mxu0 %v790
        %v1996 = vpop.f32.mrf.mxu0
        %v1997 = vadd.f32 %v1948, %v1996
        %v1998 = vpop.f32.mrf.mxu0
        %v1999 = vadd.f32 %v1950, %v1998
        %2000 = vdwg.mxu0
        %2001 = vmatpush.bf16.msra.mxu0 %v1459
        %2002 = vmatpush.bf16.msra.mxu0 %v1458
        %2003 = vmatpush.bf16.msra.mxu0 %v1457
        %2004 = vmatpush.bf16.msra.mxu0 %v1456
        %2005 = vmatpush.bf16.msra.mxu0 %v1455
        %2006 = vmatpush.bf16.msra.mxu0 %v1454
        %2007 = vmatpush.bf16.msra.mxu0 %v1453
        %2008 = vmatpush.bf16.msra.mxu0 %v1452
        %2009 = vmatmul.bf16.gmra.mxu0 %v700
        %v2010 = vpop.f32.mrf.mxu0
        %v2011 = vadd.f32 %v1962, %v2010
        %v2012 = vpop.f32.mrf.mxu0
        %v2013 = vadd.f32 %v1964, %v2012
        %2014 = vmatmul.bf16.gmra.mxu0 %v713
        %v2015 = vpop.f32.mrf.mxu0
        %v2016 = vadd.f32 %v1967, %v2015
        %v2017 = vpop.f32.mrf.mxu0
        %v2018 = vadd.f32 %v1969, %v2017
        %2019 = vmatmul.bf16.gmra.mxu0 %v726
        %v2020 = vpop.f32.mrf.mxu0
        %v2021 = vadd.f32 %v1972, %v2020
        %v2022 = vpop.f32.mrf.mxu0
        %v2023 = vadd.f32 %v1974, %v2022
        %2024 = vmatmul.bf16.gmra.mxu0 %v739
        %v2025 = vpop.f32.mrf.mxu0
        %v2026 = vadd.f32 %v1977, %v2025
        %v2027 = vpop.f32.mrf.mxu0
        %v2028 = vadd.f32 %v1979, %v2027
        %2029 = vmatmul.bf16.gmra.mxu0 %v752
        %v2030 = vpop.f32.mrf.mxu0
        %v2031 = vadd.f32 %v1982, %v2030
        %v2032 = vpop.f32.mrf.mxu0
        %v2033 = vadd.f32 %v1984, %v2032
        %2034 = vmatmul.bf16.gmra.mxu0 %v765
        %v2035 = vpop.f32.mrf.mxu0
        %v2036 = vadd.f32 %v1987, %v2035
        %v2037 = vpop.f32.mrf.mxu0
        %v2038 = vadd.f32 %v1989, %v2037
        %2039 = vmatmul.bf16.gmra.mxu0 %v778
        %v2040 = vpop.f32.mrf.mxu0
        %v2041 = vadd.f32 %v1992, %v2040
        %v2042 = vpop.f32.mrf.mxu0
        %v2043 = vadd.f32 %v1994, %v2042
        %2044 = vmatmul.bf16.gmra.mxu0 %v791
        %v2045 = vpop.f32.mrf.mxu0
        %v2046 = vadd.f32 %v1997, %v2045
        %v2047 = vpop.f32.mrf.mxu0
        %v2048 = vadd.f32 %v1999, %v2047
        %2049 = vdwg.mxu0
        %2050 = vmatpush.bf16.msra.mxu0 %v1467
        %2051 = vmatpush.bf16.msra.mxu0 %v1466
        %2052 = vmatpush.bf16.msra.mxu0 %v1465
        %2053 = vmatpush.bf16.msra.mxu0 %v1464
        %2054 = vmatpush.bf16.msra.mxu0 %v1463
        %2055 = vmatpush.bf16.msra.mxu0 %v1462
        %2056 = vmatpush.bf16.msra.mxu0 %v1461
        %2057 = vmatpush.bf16.msra.mxu0 %v1460
        %2058 = vmatmul.bf16.gmra.mxu0 %v701
        %v2059 = vpop.f32.mrf.mxu0
        %v2060 = vadd.f32 %v2011, %v2059
        %v2061 = vpop.f32.mrf.mxu0
        %v2062 = vadd.f32 %v2013, %v2061
        %2063 = vmatmul.bf16.gmra.mxu0 %v714
        %v2064 = vpop.f32.mrf.mxu0
        %v2065 = vadd.f32 %v2016, %v2064
        %v2066 = vpop.f32.mrf.mxu0
        %v2067 = vadd.f32 %v2018, %v2066
        %2068 = vmatmul.bf16.gmra.mxu0 %v727
        %v2069 = vpop.f32.mrf.mxu0
        %v2070 = vadd.f32 %v2021, %v2069
        %v2071 = vpop.f32.mrf.mxu0
        %v2072 = vadd.f32 %v2023, %v2071
        %2073 = vmatmul.bf16.gmra.mxu0 %v740
        %v2074 = vpop.f32.mrf.mxu0
        %v2075 = vadd.f32 %v2026, %v2074
        %v2076 = vpop.f32.mrf.mxu0
        %v2077 = vadd.f32 %v2028, %v2076
        %2078 = vmatmul.bf16.gmra.mxu0 %v753
        %v2079 = vpop.f32.mrf.mxu0
        %v2080 = vadd.f32 %v2031, %v2079
        %v2081 = vpop.f32.mrf.mxu0
        %v2082 = vadd.f32 %v2033, %v2081
        %2083 = vmatmul.bf16.gmra.mxu0 %v766
        %v2084 = vpop.f32.mrf.mxu0
        %v2085 = vadd.f32 %v2036, %v2084
        %v2086 = vpop.f32.mrf.mxu0
        %v2087 = vadd.f32 %v2038, %v2086
        %2088 = vmatmul.bf16.gmra.mxu0 %v779
        %v2089 = vpop.f32.mrf.mxu0
        %v2090 = vadd.f32 %v2041, %v2089
        %v2091 = vpop.f32.mrf.mxu0
        %v2092 = vadd.f32 %v2043, %v2091
        %2093 = vmatmul.bf16.gmra.mxu0 %v792
        %v2094 = vpop.f32.mrf.mxu0
        %v2095 = vadd.f32 %v2046, %v2094
        %v2096 = vpop.f32.mrf.mxu0
        %v2097 = vadd.f32 %v2048, %v2096
        %2098 = vdwg.mxu0
        %2099 = vmatpush.bf16.msra.mxu0 %v1475
        %2100 = vmatpush.bf16.msra.mxu0 %v1474
        %2101 = vmatpush.bf16.msra.mxu0 %v1473
        %2102 = vmatpush.bf16.msra.mxu0 %v1472
        %2103 = vmatpush.bf16.msra.mxu0 %v1471
        %2104 = vmatpush.bf16.msra.mxu0 %v1470
        %2105 = vmatpush.bf16.msra.mxu0 %v1469
        %2106 = vmatpush.bf16.msra.mxu0 %v1468
        %2107 = vmatmul.bf16.gmra.mxu0 %v702
        %v2108 = vpop.f32.mrf.mxu0
        %v2109 = vadd.f32 %v2060, %v2108
        %v2110 = vpop.f32.mrf.mxu0
        %v2111 = vadd.f32 %v2062, %v2110
        %2112 = vmatmul.bf16.gmra.mxu0 %v715
        %v2113 = vpop.f32.mrf.mxu0
        %v2114 = vadd.f32 %v2065, %v2113
        %v2115 = vpop.f32.mrf.mxu0
        %v2116 = vadd.f32 %v2067, %v2115
        %2117 = vmatmul.bf16.gmra.mxu0 %v728
        %v2118 = vpop.f32.mrf.mxu0
        %v2119 = vadd.f32 %v2070, %v2118
        %v2120 = vpop.f32.mrf.mxu0
        %v2121 = vadd.f32 %v2072, %v2120
        %2122 = vmatmul.bf16.gmra.mxu0 %v741
        %v2123 = vpop.f32.mrf.mxu0
        %v2124 = vadd.f32 %v2075, %v2123
        %v2125 = vpop.f32.mrf.mxu0
        %v2126 = vadd.f32 %v2077, %v2125
        %2127 = vmatmul.bf16.gmra.mxu0 %v754
        %v2128 = vpop.f32.mrf.mxu0
        %v2129 = vadd.f32 %v2080, %v2128
        %v2130 = vpop.f32.mrf.mxu0
        %v2131 = vadd.f32 %v2082, %v2130
        %2132 = vmatmul.bf16.gmra.mxu0 %v767
        %v2133 = vpop.f32.mrf.mxu0
        %v2134 = vadd.f32 %v2085, %v2133
        %v2135 = vpop.f32.mrf.mxu0
        %v2136 = vadd.f32 %v2087, %v2135
        %2137 = vmatmul.bf16.gmra.mxu0 %v780
        %v2138 = vpop.f32.mrf.mxu0
        %v2139 = vadd.f32 %v2090, %v2138
        %v2140 = vpop.f32.mrf.mxu0
        %v2141 = vadd.f32 %v2092, %v2140
        %2142 = vmatmul.bf16.gmra.mxu0 %v793
        %v2143 = vpop.f32.mrf.mxu0
        %v2144 = vadd.f32 %v2095, %v2143
        %v2145 = vpop.f32.mrf.mxu0
        %v2146 = vadd.f32 %v2097, %v2145
        %2147 = vdwg.mxu0
        %2148 = vmatpush.bf16.msra.mxu0 %v1483
        %2149 = vmatpush.bf16.msra.mxu0 %v1482
        %2150 = vmatpush.bf16.msra.mxu0 %v1481
        %2151 = vmatpush.bf16.msra.mxu0 %v1480
        %2152 = vmatpush.bf16.msra.mxu0 %v1479
        %2153 = vmatpush.bf16.msra.mxu0 %v1478
        %2154 = vmatpush.bf16.msra.mxu0 %v1477
        %2155 = vmatpush.bf16.msra.mxu0 %v1476
        %2156 = vmatmul.bf16.gmra.mxu0 %v703
        %v2157 = vpop.f32.mrf.mxu0
        %v2158 = vadd.f32 %v2109, %v2157
        %v2159 = vpop.f32.mrf.mxu0
        %v2160 = vadd.f32 %v2111, %v2159
        %2161 = vmatmul.bf16.gmra.mxu0 %v716
        %v2162 = vpop.f32.mrf.mxu0
        %v2163 = vadd.f32 %v2114, %v2162
        %v2164 = vpop.f32.mrf.mxu0
        %v2165 = vadd.f32 %v2116, %v2164
        %2166 = vmatmul.bf16.gmra.mxu0 %v729
        %v2167 = vpop.f32.mrf.mxu0
        %v2168 = vadd.f32 %v2119, %v2167
        %v2169 = vpop.f32.mrf.mxu0
        %v2170 = vadd.f32 %v2121, %v2169
        %2171 = vmatmul.bf16.gmra.mxu0 %v742
        %v2172 = vpop.f32.mrf.mxu0
        %v2173 = vadd.f32 %v2124, %v2172
        %v2174 = vpop.f32.mrf.mxu0
        %v2175 = vadd.f32 %v2126, %v2174
        %2176 = vmatmul.bf16.gmra.mxu0 %v755
        %v2177 = vpop.f32.mrf.mxu0
        %v2178 = vadd.f32 %v2129, %v2177
        %v2179 = vpop.f32.mrf.mxu0
        %v2180 = vadd.f32 %v2131, %v2179
        %2181 = vmatmul.bf16.gmra.mxu0 %v768
        %v2182 = vpop.f32.mrf.mxu0
        %v2183 = vadd.f32 %v2134, %v2182
        %v2184 = vpop.f32.mrf.mxu0
        %v2185 = vadd.f32 %v2136, %v2184
        %2186 = vmatmul.bf16.gmra.mxu0 %v781
        %v2187 = vpop.f32.mrf.mxu0
        %v2188 = vadd.f32 %v2139, %v2187
        %v2189 = vpop.f32.mrf.mxu0
        %v2190 = vadd.f32 %v2141, %v2189
        %2191 = vmatmul.bf16.gmra.mxu0 %v794
        %v2192 = vpop.f32.mrf.mxu0
        %v2193 = vadd.f32 %v2144, %v2192
        %v2194 = vpop.f32.mrf.mxu0
        %v2195 = vadd.f32 %v2146, %v2194
        %2196 = vdwg.mxu0
        %2197 = vmatpush.bf16.msra.mxu0 0
        %2198 = vmatpush.bf16.msra.mxu0 0
        %2199 = vmatpush.bf16.msra.mxu0 0
        %2200 = vmatpush.bf16.msra.mxu0 0
        %2201 = vmatpush.bf16.msra.mxu0 0
        %2202 = vmatpush.bf16.msra.mxu0 0
        %2203 = vmatpush.bf16.msra.mxu0 %v1485
        %2204 = vmatpush.bf16.msra.mxu0 %v1484
        %2205 = vmatmul.bf16.gmra.mxu0 %v1586
        %v2206 = vpop.f32.mrf.mxu0
        %v2207 = vadd.f32 %v2158, %v2206
        %v2208 = vpop.f32.mrf.mxu0
        %v2209 = vadd.f32 %v2160, %v2208
        %2210 = vmatmul.bf16.gmra.mxu0 %v1589
        %v2211 = vpop.f32.mrf.mxu0
        %v2212 = vadd.f32 %v2163, %v2211
        %v2213 = vpop.f32.mrf.mxu0
        %v2214 = vadd.f32 %v2165, %v2213
        %2215 = vmatmul.bf16.gmra.mxu0 %v1592
        %v2216 = vpop.f32.mrf.mxu0
        %v2217 = vadd.f32 %v2168, %v2216
        %v2218 = vpop.f32.mrf.mxu0
        %v2219 = vadd.f32 %v2170, %v2218
        %2220 = vmatmul.bf16.gmra.mxu0 %v1595
        %v2221 = vpop.f32.mrf.mxu0
        %v2222 = vadd.f32 %v2173, %v2221
        %v2223 = vpop.f32.mrf.mxu0
        %v2224 = vadd.f32 %v2175, %v2223
        %2225 = vmatmul.bf16.gmra.mxu0 %v1598
        %v2226 = vpop.f32.mrf.mxu0
        %v2227 = vadd.f32 %v2178, %v2226
        %v2228 = vpop.f32.mrf.mxu0
        %v2229 = vadd.f32 %v2180, %v2228
        %2230 = vmatmul.bf16.gmra.mxu0 %v1601
        %v2231 = vpop.f32.mrf.mxu0
        %v2232 = vadd.f32 %v2183, %v2231
        %v2233 = vpop.f32.mrf.mxu0
        %v2234 = vadd.f32 %v2185, %v2233
        %2235 = vmatmul.bf16.gmra.mxu0 %v1604
        %v2236 = vpop.f32.mrf.mxu0
        %v2237 = vadd.f32 %v2188, %v2236
        %v2238 = vpop.f32.mrf.mxu0
        %v2239 = vadd.f32 %v2190, %v2238
        %2240 = vmatmul.bf16.gmra.mxu0 %v1607
        %v2241 = vpop.f32.mrf.mxu0
        %v2242 = vadd.f32 %v2193, %v2241
        %v2243 = vpop.f32.mrf.mxu0
        %v2244 = vadd.f32 %v2195, %v2243
        %2245 = vdwg.mxu0
        %v2246 = vmax.f32 %v2207, 0.0
        %v2247 = vmax.f32 %v2209, 0.0
        %v2248 = vmax.f32 %v2212, 0.0
        %v2249 = vmax.f32 %v2214, 0.0
        %v2250 = vmax.f32 %v2217, 0.0
        %v2251 = vmax.f32 %v2219, 0.0
        %v2252 = vmax.f32 %v2222, 0.0
        %v2253 = vmax.f32 %v2224, 0.0
        %v2254 = vmax.f32 %v2227, 0.0
        %v2255 = vmax.f32 %v2229, 0.0
        %v2256 = vmax.f32 %v2232, 0.0
        %v2257 = vmax.f32 %v2234, 0.0
        %v2258 = vmax.f32 %v2237, 0.0
        %v2259 = vmax.f32 %v2239, 0.0
        %v2260 = vmax.f32 %v2242, 0.0
        %v2261 = vmax.f32 %v2244, 0.0
        %v2262 = vpack.c.bf16 %v2247, %v2246
        %v2263 = vpack.c.bf16 %v2249, %v2248
        %v2264 = vpack.c.bf16 %v2251, %v2250
        %v2265 = vpack.c.bf16 %v2253, %v2252
        %v2266 = vpack.c.bf16 %v2255, %v2254
        %v2267 = vpack.c.bf16 %v2257, %v2256
        %v2268 = vpack.c.bf16 %v2259, %v2258
        %v2269 = vpack.c.bf16 %v2261, %v2260
        %v2270 = vld [vmem:[%s3] sm:$0xf]
        %v2271 = vld [vmem:[%s3 + $0x4] sm:$0xf]
        %v2272 = vld [vmem:[%s3 + $0x8] sm:$0xf]
        %v2273 = vld [vmem:[%s3 + $0xc] sm:$0xf]
        %v2274 = vld [vmem:[%s4] sm:$0x1]
        %v2276 = vperm.slane %v2274, 0
        %v2282 = vunpack.c.l.b16 %v2270
        %v2283 = vunpack.c.l.b16 %v2271
        %v2284 = vunpack.c.l.b16 %v2272
        %v2285 = vunpack.c.l.b16 %v2273
        %v2286 = vpack.c.b16 %v2283, %v2282
        %v2287 = vpack.c.b16 %v2285, %v2284
        %v2291 = vsel %vm1584, %v2262, 0
        %v2294 = vsel %vm1584, %v2263, 0
        %v2297 = vsel %vm1584, %v2264, 0
        %v2300 = vsel %vm1584, %v2265, 0
        %v2303 = vsel %vm1584, %v2266, 0
        %v2306 = vsel %vm1584, %v2267, 0
        %v2309 = vsel %vm1584, %v2268, 0
        %v2312 = vsel %vm1584, %v2269, 0
        %2314 = vmatpush.bf16.msra.mxu0 0
        %2315 = vmatpush.bf16.msra.mxu0 0
        %2316 = vmatpush.bf16.msra.mxu0 0
        %2317 = vmatpush.bf16.msra.mxu0 0
        %2318 = vmatpush.bf16.msra.mxu0 0
        %2319 = vmatpush.bf16.msra.mxu0 0
        %2320 = vmatpush.bf16.msra.mxu0 %v2287
        %2321 = vmatpush.bf16.msra.mxu0 %v2286
        %2322 = vmatmul.bf16.gmra.mxu0 %v2291
        %v2323 = vpop.f32.mrf.mxu0
        %v2324 = vadd.f32 %v2276, %v2323
        %v2325 = vpop.f32.mrf.mxu0
        %v2326 = vadd.f32 %v2276, %v2325
        %2327 = vmatmul.bf16.gmra.mxu0 %v2294
        %v2328 = vpop.f32.mrf.mxu0
        %v2329 = vadd.f32 %v2276, %v2328
        %v2330 = vpop.f32.mrf.mxu0
        %v2331 = vadd.f32 %v2276, %v2330
        %2332 = vmatmul.bf16.gmra.mxu0 %v2297
        %v2333 = vpop.f32.mrf.mxu0
        %v2334 = vadd.f32 %v2276, %v2333
        %v2335 = vpop.f32.mrf.mxu0
        %v2336 = vadd.f32 %v2276, %v2335
        %2337 = vmatmul.bf16.gmra.mxu0 %v2300
        %v2338 = vpop.f32.mrf.mxu0
        %v2339 = vadd.f32 %v2276, %v2338
        %v2340 = vpop.f32.mrf.mxu0
        %v2341 = vadd.f32 %v2276, %v2340
        %2342 = vmatmul.bf16.gmra.mxu0 %v2303
        %v2343 = vpop.f32.mrf.mxu0
        %v2344 = vadd.f32 %v2276, %v2343
        %v2345 = vpop.f32.mrf.mxu0
        %v2346 = vadd.f32 %v2276, %v2345
        %2347 = vmatmul.bf16.gmra.mxu0 %v2306
        %v2348 = vpop.f32.mrf.mxu0
        %v2349 = vadd.f32 %v2276, %v2348
        %v2350 = vpop.f32.mrf.mxu0
        %v2351 = vadd.f32 %v2276, %v2350
        %2352 = vmatmul.bf16.gmra.mxu0 %v2309
        %v2353 = vpop.f32.mrf.mxu0
        %v2354 = vadd.f32 %v2276, %v2353
        %v2355 = vpop.f32.mrf.mxu0
        %v2356 = vadd.f32 %v2276, %v2355
        %2357 = vmatmul.bf16.gmra.mxu0 %v2312
        %v2358 = vpop.f32.mrf.mxu0
        %v2359 = vadd.f32 %v2276, %v2358
        %v2360 = vpop.f32.mrf.mxu0
        %v2361 = vadd.f32 %v2276, %v2360
        %2362 = vdwg.mxu0
        %v2363 = vmax.f32 %v2324, 0.0
        %v2364 = vmax.f32 %v2326, 0.0
        %v2365 = vmax.f32 %v2329, 0.0
        %v2366 = vmax.f32 %v2331, 0.0
        %v2367 = vmax.f32 %v2334, 0.0
        %v2368 = vmax.f32 %v2336, 0.0
        %v2369 = vmax.f32 %v2339, 0.0
        %v2370 = vmax.f32 %v2341, 0.0
        %v2371 = vmax.f32 %v2344, 0.0
        %v2372 = vmax.f32 %v2346, 0.0
        %v2373 = vmax.f32 %v2349, 0.0
        %v2374 = vmax.f32 %v2351, 0.0
        %v2375 = vmax.f32 %v2354, 0.0
        %v2376 = vmax.f32 %v2356, 0.0
        %v2377 = vmax.f32 %v2359, 0.0
        %v2378 = vmax.f32 %v2361, 0.0
        %v2379 = vpack.c.bf16 %v2363, %v2363
        %v2380 = vpack.c.bf16 %v2364, %v2364
        %v2381 = vpack.c.bf16 %v2365, %v2365
        %v2382 = vpack.c.bf16 %v2366, %v2366
        %v2383 = vpack.c.bf16 %v2367, %v2367
        %v2384 = vpack.c.bf16 %v2368, %v2368
        %v2385 = vpack.c.bf16 %v2369, %v2369
        %v2386 = vpack.c.bf16 %v2370, %v2370
        %v2387 = vpack.c.bf16 %v2371, %v2371
        %v2388 = vpack.c.bf16 %v2372, %v2372
        %v2389 = vpack.c.bf16 %v2373, %v2373
        %v2390 = vpack.c.bf16 %v2374, %v2374
        %v2391 = vpack.c.bf16 %v2375, %v2375
        %v2392 = vpack.c.bf16 %v2376, %v2376
        %v2393 = vpack.c.bf16 %v2377, %v2377
        %v2394 = vpack.c.bf16 %v2378, %v2378
        %vm2395 = vcmask 257024
        %2396 = vst.msk [vmem:[%s473] sm:$0xf] %vm2395, %v2379
        %2397 = vst.msk [vmem:[%s473 + $0x4] sm:$0xf] %vm2395, %v2380
        %2398 = vst.msk [vmem:[%s473 + $0x8] sm:$0xf] %vm2395, %v2381
        %2399 = vst.msk [vmem:[%s473 + $0xc] sm:$0xf] %vm2395, %v2382
        %2400 = vst.msk [vmem:[%s473 + $0x10] sm:$0xf] %vm2395, %v2383
        %2401 = vst.msk [vmem:[%s473 + $0x14] sm:$0xf] %vm2395, %v2384
        %2402 = vst.msk [vmem:[%s473 + $0x18] sm:$0xf] %vm2395, %v2385
        %2403 = vst.msk [vmem:[%s473 + $0x1c] sm:$0xf] %vm2395, %v2386
        %2404 = vst.msk [vmem:[%s473 + $0x20] sm:$0xf] %vm2395, %v2387
        %2405 = vst.msk [vmem:[%s473 + $0x24] sm:$0xf] %vm2395, %v2388
        %2406 = vst.msk [vmem:[%s473 + $0x28] sm:$0xf] %vm2395, %v2389
        %2407 = vst.msk [vmem:[%s473 + $0x2c] sm:$0xf] %vm2395, %v2390
        %2408 = vst.msk [vmem:[%s473 + $0x30] sm:$0xf] %vm2395, %v2391
        %2409 = vst.msk [vmem:[%s473 + $0x34] sm:$0xf] %vm2395, %v2392
        %2410 = vst.msk [vmem:[%s473 + $0x38] sm:$0xf] %vm2395, %v2393
        %2411 = vst.msk [vmem:[%s473 + $0x3c] sm:$0xf] %vm2395, %v2394
        %v2412 = vld [vmem:[%s5] sm:$0xff]
        %v2413 = vld [vmem:[%s5 + $0x8] sm:$0xff]
        %v2414 = vld [vmem:[%s5 + $0x10] sm:$0xff]
        %v2415 = vld [vmem:[%s5 + $0x18] sm:$0xff]
        %v2416 = vld [vmem:[%s6] sm:$0x3]
        %v2418 = vperm.slane %v2416, 0
        %v2419 = vperm.slane %v2416, 1
        %v2438 = vunpack.c.l.b16 %v2379
        %v2439 = vunpack.c.l.b16 %v2380
        %v2440 = vunpack.c.l.b16 %v2381
        %v2441 = vunpack.c.l.b16 %v2382
        %v2442 = vunpack.c.l.b16 %v2383
        %v2443 = vunpack.c.l.b16 %v2384
        %v2444 = vunpack.c.l.b16 %v2385
        %v2445 = vunpack.c.l.b16 %v2386
        %v2446 = vunpack.c.l.b16 %v2387
        %v2447 = vunpack.c.l.b16 %v2388
        %v2448 = vunpack.c.l.b16 %v2389
        %v2449 = vunpack.c.l.b16 %v2390
        %v2450 = vunpack.c.l.b16 %v2391
        %v2451 = vunpack.c.l.b16 %v2392
        %v2452 = vunpack.c.l.b16 %v2393
        %v2453 = vunpack.c.l.b16 %v2394
        %v2454 = vpack.c.b16 %v2439, %v2438
        %v2455 = vpack.c.b16 %v2441, %v2440
        %v2456 = vpack.c.b16 %v2443, %v2442
        %v2457 = vpack.c.b16 %v2445, %v2444
        %v2458 = vpack.c.b16 %v2447, %v2446
        %v2459 = vpack.c.b16 %v2449, %v2448
        %v2460 = vpack.c.b16 %v2451, %v2450
        %v2461 = vpack.c.b16 %v2453, %v2452
        %v2466 = vunpack.c.l.b16 %v2412
        %v2467 = vunpack.c.h.b16 %v2412
        %v2468 = vunpack.c.l.b16 %v2413
        %v2469 = vunpack.c.h.b16 %v2413
        %v2470 = vunpack.c.l.b16 %v2414
        %v2471 = vunpack.c.h.b16 %v2414
        %v2472 = vunpack.c.l.b16 %v2415
        %v2473 = vunpack.c.h.b16 %v2415
        %v2474 = vpack.c.b16 %v2468, %v2466
        %v2475 = vpack.c.b16 %v2469, %v2467
        %v2476 = vpack.c.b16 %v2472, %v2470
        %v2477 = vpack.c.b16 %v2473, %v2471
        %v2483 = vsel %vm1584, %v2454, 0
        %v2486 = vsel %vm1584, %v2455, 0
        %v2489 = vsel %vm1584, %v2456, 0
        %v2492 = vsel %vm1584, %v2457, 0
        %v2495 = vsel %vm1584, %v2458, 0
        %v2498 = vsel %vm1584, %v2459, 0
        %v2501 = vsel %vm1584, %v2460, 0
        %v2504 = vsel %vm1584, %v2461, 0
        %2506 = vmatpush.bf16.msra.mxu0 0
        %2507 = vmatpush.bf16.msra.mxu0 0
        %2508 = vmatpush.bf16.msra.mxu0 0
        %2509 = vmatpush.bf16.msra.mxu0 0
        %2510 = vmatpush.bf16.msra.mxu0 0
        %2511 = vmatpush.bf16.msra.mxu0 0
        %2512 = vmatpush.bf16.msra.mxu0 %v2476
        %2513 = vmatpush.bf16.msra.mxu0 %v2474
        %2514 = vmatmul.bf16.gmra.mxu0 %v2483
        %v2515 = vpop.f32.mrf.mxu0
        %v2516 = vadd.f32 %v2418, %v2515
        %v2517 = vpop.f32.mrf.mxu0
        %v2518 = vadd.f32 %v2418, %v2517
        %2519 = vmatmul.bf16.gmra.mxu0 %v2486
        %v2520 = vpop.f32.mrf.mxu0
        %v2521 = vadd.f32 %v2418, %v2520
        %v2522 = vpop.f32.mrf.mxu0
        %v2523 = vadd.f32 %v2418, %v2522
        %2524 = vmatmul.bf16.gmra.mxu0 %v2489
        %v2525 = vpop.f32.mrf.mxu0
        %v2526 = vadd.f32 %v2418, %v2525
        %v2527 = vpop.f32.mrf.mxu0
        %v2528 = vadd.f32 %v2418, %v2527
        %2529 = vmatmul.bf16.gmra.mxu0 %v2492
        %v2530 = vpop.f32.mrf.mxu0
        %v2531 = vadd.f32 %v2418, %v2530
        %v2532 = vpop.f32.mrf.mxu0
        %v2533 = vadd.f32 %v2418, %v2532
        %2534 = vmatmul.bf16.gmra.mxu0 %v2495
        %v2535 = vpop.f32.mrf.mxu0
        %v2536 = vadd.f32 %v2418, %v2535
        %v2537 = vpop.f32.mrf.mxu0
        %v2538 = vadd.f32 %v2418, %v2537
        %2539 = vmatmul.bf16.gmra.mxu0 %v2498
        %v2540 = vpop.f32.mrf.mxu0
        %v2541 = vadd.f32 %v2418, %v2540
        %v2542 = vpop.f32.mrf.mxu0
        %v2543 = vadd.f32 %v2418, %v2542
        %2544 = vmatmul.bf16.gmra.mxu0 %v2501
        %v2545 = vpop.f32.mrf.mxu0
        %v2546 = vadd.f32 %v2418, %v2545
        %v2547 = vpop.f32.mrf.mxu0
        %v2548 = vadd.f32 %v2418, %v2547
        %2549 = vmatmul.bf16.gmra.mxu0 %v2504
        %v2550 = vpop.f32.mrf.mxu0
        %v2551 = vadd.f32 %v2418, %v2550
        %v2552 = vpop.f32.mrf.mxu0
        %v2553 = vadd.f32 %v2418, %v2552
        %2554 = vdwg.mxu0
        %2555 = vmatpush.bf16.msra.mxu0 0
        %2556 = vmatpush.bf16.msra.mxu0 0
        %2557 = vmatpush.bf16.msra.mxu0 0
        %2558 = vmatpush.bf16.msra.mxu0 0
        %2559 = vmatpush.bf16.msra.mxu0 0
        %2560 = vmatpush.bf16.msra.mxu0 0
        %2561 = vmatpush.bf16.msra.mxu0 %v2477
        %2562 = vmatpush.bf16.msra.mxu0 %v2475
        %2563 = vmatmul.bf16.gmra.mxu0 %v2483
        %v2564 = vpop.f32.mrf.mxu0
        %v2565 = vadd.f32 %v2419, %v2564
        %v2566 = vpop.f32.mrf.mxu0
        %v2567 = vadd.f32 %v2419, %v2566
        %2568 = vmatmul.bf16.gmra.mxu0 %v2486
        %v2569 = vpop.f32.mrf.mxu0
        %v2570 = vadd.f32 %v2419, %v2569
        %v2571 = vpop.f32.mrf.mxu0
        %v2572 = vadd.f32 %v2419, %v2571
        %2573 = vmatmul.bf16.gmra.mxu0 %v2489
        %v2574 = vpop.f32.mrf.mxu0
        %v2575 = vadd.f32 %v2419, %v2574
        %v2576 = vpop.f32.mrf.mxu0
        %v2577 = vadd.f32 %v2419, %v2576
        %2578 = vmatmul.bf16.gmra.mxu0 %v2492
        %v2579 = vpop.f32.mrf.mxu0
        %v2580 = vadd.f32 %v2419, %v2579
        %v2581 = vpop.f32.mrf.mxu0
        %v2582 = vadd.f32 %v2419, %v2581
        %2583 = vmatmul.bf16.gmra.mxu0 %v2495
        %v2584 = vpop.f32.mrf.mxu0
        %v2585 = vadd.f32 %v2419, %v2584
        %v2586 = vpop.f32.mrf.mxu0
        %v2587 = vadd.f32 %v2419, %v2586
        %2588 = vmatmul.bf16.gmra.mxu0 %v2498
        %v2589 = vpop.f32.mrf.mxu0
        %v2590 = vadd.f32 %v2419, %v2589
        %v2591 = vpop.f32.mrf.mxu0
        %v2592 = vadd.f32 %v2419, %v2591
        %2593 = vmatmul.bf16.gmra.mxu0 %v2501
        %v2594 = vpop.f32.mrf.mxu0
        %v2595 = vadd.f32 %v2419, %v2594
        %v2596 = vpop.f32.mrf.mxu0
        %v2597 = vadd.f32 %v2419, %v2596
        %2598 = vmatmul.bf16.gmra.mxu0 %v2504
        %v2599 = vpop.f32.mrf.mxu0
        %v2600 = vadd.f32 %v2419, %v2599
        %v2601 = vpop.f32.mrf.mxu0
        %v2602 = vadd.f32 %v2419, %v2601
        %2603 = vdwg.mxu0
        %2604 = vst [vmem:[%s447] sm:$0xff] %v2516
        %2605 = vst [vmem:[%s447 + $0x8] sm:$0xff] %v2518
        %2606 = vst [vmem:[%s447 + $0x10] sm:$0xff] %v2521
        %2607 = vst [vmem:[%s447 + $0x18] sm:$0xff] %v2523
        %2608 = vst [vmem:[%s447 + $0x20] sm:$0xff] %v2526
        %2609 = vst [vmem:[%s447 + $0x28] sm:$0xff] %v2528
        %2610 = vst [vmem:[%s447 + $0x30] sm:$0xff] %v2531
        %2611 = vst [vmem:[%s447 + $0x38] sm:$0xff] %v2533
        %2612 = vst [vmem:[%s447 + $0x40] sm:$0xff] %v2536
        %2613 = vst [vmem:[%s447 + $0x48] sm:$0xff] %v2538
        %2614 = vst [vmem:[%s447 + $0x50] sm:$0xff] %v2541
        %2615 = vst [vmem:[%s447 + $0x58] sm:$0xff] %v2543
        %2616 = vst [vmem:[%s447 + $0x60] sm:$0xff] %v2546
        %2617 = vst [vmem:[%s447 + $0x68] sm:$0xff] %v2548
        %2618 = vst [vmem:[%s447 + $0x70] sm:$0xff] %v2551
        %2619 = vst [vmem:[%s447 + $0x78] sm:$0xff] %v2553
        %v2620 = vmax.f32 %v2565, 0.0
        %v2621 = vmax.f32 %v2567, 0.0
        %v2622 = vmax.f32 %v2570, 0.0
        %v2623 = vmax.f32 %v2572, 0.0
        %v2624 = vmax.f32 %v2575, 0.0
        %v2625 = vmax.f32 %v2577, 0.0
        %v2626 = vmax.f32 %v2580, 0.0
        %v2627 = vmax.f32 %v2582, 0.0
        %v2628 = vmax.f32 %v2585, 0.0
        %v2629 = vmax.f32 %v2587, 0.0
        %v2630 = vmax.f32 %v2590, 0.0
        %v2631 = vmax.f32 %v2592, 0.0
        %v2632 = vmax.f32 %v2595, 0.0
        %v2633 = vmax.f32 %v2597, 0.0
        %v2634 = vmax.f32 %v2600, 0.0
        %v2635 = vmax.f32 %v2602, 0.0
        %v2636 = vpack.c.bf16 %v2621, %v2620
        %v2637 = vpack.c.bf16 %v2623, %v2622
        %v2638 = vpack.c.bf16 %v2625, %v2624
        %v2639 = vpack.c.bf16 %v2627, %v2626
        %v2640 = vpack.c.bf16 %v2629, %v2628
        %v2641 = vpack.c.bf16 %v2631, %v2630
        %v2642 = vpack.c.bf16 %v2633, %v2632
        %v2643 = vpack.c.bf16 %v2635, %v2634
        %v2644 = vld [vmem:[%s7] sm:$0xf]
        %v2645 = vld [vmem:[%s7 + $0x4] sm:$0xf]
        %v2646 = vld [vmem:[%s7 + $0x8] sm:$0xf]
        %v2647 = vld [vmem:[%s7 + $0xc] sm:$0xf]
        %v2648 = vld [vmem:[%s8] sm:$0x1]
        %v2650 = vperm.slane %v2648, 0
        %v2656 = vunpack.c.l.b16 %v2644
        %v2657 = vunpack.c.l.b16 %v2645
        %v2658 = vunpack.c.l.b16 %v2646
        %v2659 = vunpack.c.l.b16 %v2647
        %v2660 = vpack.c.b16 %v2657, %v2656
        %v2661 = vpack.c.b16 %v2659, %v2658
        %v2665 = vsel %vm1584, %v2636, 0
        %v2668 = vsel %vm1584, %v2637, 0
        %v2671 = vsel %vm1584, %v2638, 0
        %v2674 = vsel %vm1584, %v2639, 0
        %v2677 = vsel %vm1584, %v2640, 0
        %v2680 = vsel %vm1584, %v2641, 0
        %v2683 = vsel %vm1584, %v2642, 0
        %v2686 = vsel %vm1584, %v2643, 0
        %2688 = vmatpush.bf16.msra.mxu0 0
        %2689 = vmatpush.bf16.msra.mxu0 0
        %2690 = vmatpush.bf16.msra.mxu0 0
        %2691 = vmatpush.bf16.msra.mxu0 0
        %2692 = vmatpush.bf16.msra.mxu0 0
        %2693 = vmatpush.bf16.msra.mxu0 0
        %2694 = vmatpush.bf16.msra.mxu0 %v2661
        %2695 = vmatpush.bf16.msra.mxu0 %v2660
        %2696 = vmatmul.bf16.gmra.mxu0 %v2665
        %v2697 = vpop.f32.mrf.mxu0
        %v2698 = vadd.f32 %v2650, %v2697
        %v2699 = vpop.f32.mrf.mxu0
        %v2700 = vadd.f32 %v2650, %v2699
        %2701 = vmatmul.bf16.gmra.mxu0 %v2668
        %v2702 = vpop.f32.mrf.mxu0
        %v2703 = vadd.f32 %v2650, %v2702
        %v2704 = vpop.f32.mrf.mxu0
        %v2705 = vadd.f32 %v2650, %v2704
        %2706 = vmatmul.bf16.gmra.mxu0 %v2671
        %v2707 = vpop.f32.mrf.mxu0
        %v2708 = vadd.f32 %v2650, %v2707
        %v2709 = vpop.f32.mrf.mxu0
        %v2710 = vadd.f32 %v2650, %v2709
        %2711 = vmatmul.bf16.gmra.mxu0 %v2674
        %v2712 = vpop.f32.mrf.mxu0
        %v2713 = vadd.f32 %v2650, %v2712
        %v2714 = vpop.f32.mrf.mxu0
        %v2715 = vadd.f32 %v2650, %v2714
        %2716 = vmatmul.bf16.gmra.mxu0 %v2677
        %v2717 = vpop.f32.mrf.mxu0
        %v2718 = vadd.f32 %v2650, %v2717
        %v2719 = vpop.f32.mrf.mxu0
        %v2720 = vadd.f32 %v2650, %v2719
        %2721 = vmatmul.bf16.gmra.mxu0 %v2680
        %v2722 = vpop.f32.mrf.mxu0
        %v2723 = vadd.f32 %v2650, %v2722
        %v2724 = vpop.f32.mrf.mxu0
        %v2725 = vadd.f32 %v2650, %v2724
        %2726 = vmatmul.bf16.gmra.mxu0 %v2683
        %v2727 = vpop.f32.mrf.mxu0
        %v2728 = vadd.f32 %v2650, %v2727
        %v2729 = vpop.f32.mrf.mxu0
        %v2730 = vadd.f32 %v2650, %v2729
        %2731 = vmatmul.bf16.gmra.mxu0 %v2686
        %v2732 = vpop.f32.mrf.mxu0
        %v2733 = vadd.f32 %v2650, %v2732
        %v2734 = vpop.f32.mrf.mxu0
        %v2735 = vadd.f32 %v2650, %v2734
        %2736 = vdwg.mxu0
        %v2737 = vpack.c.bf16 %v2698, %v2698
        %v2738 = vpack.c.bf16 %v2700, %v2700
        %v2739 = vpack.c.bf16 %v2703, %v2703
        %v2740 = vpack.c.bf16 %v2705, %v2705
        %v2741 = vpack.c.bf16 %v2708, %v2708
        %v2742 = vpack.c.bf16 %v2710, %v2710
        %v2743 = vpack.c.bf16 %v2713, %v2713
        %v2744 = vpack.c.bf16 %v2715, %v2715
        %v2745 = vpack.c.bf16 %v2718, %v2718
        %v2746 = vpack.c.bf16 %v2720, %v2720
        %v2747 = vpack.c.bf16 %v2723, %v2723
        %v2748 = vpack.c.bf16 %v2725, %v2725
        %v2749 = vpack.c.bf16 %v2728, %v2728
        %v2750 = vpack.c.bf16 %v2730, %v2730
        %v2751 = vpack.c.bf16 %v2733, %v2733
        %v2752 = vpack.c.bf16 %v2735, %v2735
        %2753 = vst.msk [vmem:[%s480] sm:$0xf] %vm2395, %v2737
        %2754 = vst.msk [vmem:[%s480 + $0x4] sm:$0xf] %vm2395, %v2738
        %2755 = vst.msk [vmem:[%s480 + $0x8] sm:$0xf] %vm2395, %v2739
        %2756 = vst.msk [vmem:[%s480 + $0xc] sm:$0xf] %vm2395, %v2740
        %2757 = vst.msk [vmem:[%s480 + $0x10] sm:$0xf] %vm2395, %v2741
        %2758 = vst.msk [vmem:[%s480 + $0x14] sm:$0xf] %vm2395, %v2742
        %2759 = vst.msk [vmem:[%s480 + $0x18] sm:$0xf] %vm2395, %v2743
        %2760 = vst.msk [vmem:[%s480 + $0x1c] sm:$0xf] %vm2395, %v2744
        %2761 = vst.msk [vmem:[%s480 + $0x20] sm:$0xf] %vm2395, %v2745
        %2762 = vst.msk [vmem:[%s480 + $0x24] sm:$0xf] %vm2395, %v2746
        %2763 = vst.msk [vmem:[%s480 + $0x28] sm:$0xf] %vm2395, %v2747
        %2764 = vst.msk [vmem:[%s480 + $0x2c] sm:$0xf] %vm2395, %v2748
        %2765 = vst.msk [vmem:[%s480 + $0x30] sm:$0xf] %vm2395, %v2749
        %2766 = vst.msk [vmem:[%s480 + $0x34] sm:$0xf] %vm2395, %v2750
        %2767 = vst.msk [vmem:[%s480 + $0x38] sm:$0xf] %vm2395, %v2751
        %2768 = vst.msk [vmem:[%s480 + $0x3c] sm:$0xf] %vm2395, %v2752
        %v2769 = vld [vmem:[%s9] sm:$0xf]
        %v2770 = vld [vmem:[%s9 + $0x4] sm:$0xf]
        %v2771 = vld [vmem:[%s9 + $0x8] sm:$0xf]
        %v2772 = vld [vmem:[%s9 + $0xc] sm:$0xf]
        %v2789 = vunpack.c.l.b16 %v2737
        %v2790 = vunpack.c.l.b16 %v2738
        %v2791 = vunpack.c.l.b16 %v2739
        %v2792 = vunpack.c.l.b16 %v2740
        %v2793 = vunpack.c.l.b16 %v2741
        %v2794 = vunpack.c.l.b16 %v2742
        %v2795 = vunpack.c.l.b16 %v2743
        %v2796 = vunpack.c.l.b16 %v2744
        %v2797 = vunpack.c.l.b16 %v2745
        %v2798 = vunpack.c.l.b16 %v2746
        %v2799 = vunpack.c.l.b16 %v2747
        %v2800 = vunpack.c.l.b16 %v2748
        %v2801 = vunpack.c.l.b16 %v2749
        %v2802 = vunpack.c.l.b16 %v2750
        %v2803 = vunpack.c.l.b16 %v2751
        %v2804 = vunpack.c.l.b16 %v2752
        %v2805 = vpack.c.b16 %v2790, %v2789
        %v2806 = vpack.c.b16 %v2792, %v2791
        %v2807 = vpack.c.b16 %v2794, %v2793
        %v2808 = vpack.c.b16 %v2796, %v2795
        %v2809 = vpack.c.b16 %v2798, %v2797
        %v2810 = vpack.c.b16 %v2800, %v2799
        %v2811 = vpack.c.b16 %v2802, %v2801
        %v2812 = vpack.c.b16 %v2804, %v2803
        %v2817 = vunpack.c.l.b16 %v2769
        %v2818 = vunpack.c.l.b16 %v2770
        %v2819 = vunpack.c.l.b16 %v2771
        %v2820 = vunpack.c.l.b16 %v2772
        %v2821 = vpack.c.b16 %v2818, %v2817
        %v2822 = vpack.c.b16 %v2820, %v2819
        %v2826 = vsel %vm1584, %v2805, 0
        %v2829 = vsel %vm1584, %v2806, 0
        %v2832 = vsel %vm1584, %v2807, 0
        %v2835 = vsel %vm1584, %v2808, 0
        %v2838 = vsel %vm1584, %v2809, 0
        %v2841 = vsel %vm1584, %v2810, 0
        %v2844 = vsel %vm1584, %v2811, 0
        %v2847 = vsel %vm1584, %v2812, 0
        %2849 = vmatpush.bf16.msra.mxu0 0
        %2850 = vmatpush.bf16.msra.mxu0 0
        %2851 = vmatpush.bf16.msra.mxu0 0
        %2852 = vmatpush.bf16.msra.mxu0 0
        %2853 = vmatpush.bf16.msra.mxu0 0
        %2854 = vmatpush.bf16.msra.mxu0 0
        %2855 = vmatpush.bf16.msra.mxu0 %v2822
        %2856 = vmatpush.bf16.msra.mxu0 %v2821
        %2857 = vmatmul.bf16.gmra.mxu0 %v2826
        %v2858 = vpop.f32.mrf.mxu0
        %v2859 = vadd.f32 0.0, %v2858
        %v2860 = vpop.f32.mrf.mxu0
        %v2861 = vadd.f32 0.0, %v2860
        %2862 = vmatmul.bf16.gmra.mxu0 %v2829
        %v2863 = vpop.f32.mrf.mxu0
        %v2864 = vadd.f32 0.0, %v2863
        %v2865 = vpop.f32.mrf.mxu0
        %v2866 = vadd.f32 0.0, %v2865
        %2867 = vmatmul.bf16.gmra.mxu0 %v2832
        %v2868 = vpop.f32.mrf.mxu0
        %v2869 = vadd.f32 0.0, %v2868
        %v2870 = vpop.f32.mrf.mxu0
        %v2871 = vadd.f32 0.0, %v2870
        %2872 = vmatmul.bf16.gmra.mxu0 %v2835
        %v2873 = vpop.f32.mrf.mxu0
        %v2874 = vadd.f32 0.0, %v2873
        %v2875 = vpop.f32.mrf.mxu0
        %v2876 = vadd.f32 0.0, %v2875
        %2877 = vmatmul.bf16.gmra.mxu0 %v2838
        %v2878 = vpop.f32.mrf.mxu0
        %v2879 = vadd.f32 0.0, %v2878
        %v2880 = vpop.f32.mrf.mxu0
        %v2881 = vadd.f32 0.0, %v2880
        %2882 = vmatmul.bf16.gmra.mxu0 %v2841
        %v2883 = vpop.f32.mrf.mxu0
        %v2884 = vadd.f32 0.0, %v2883
        %v2885 = vpop.f32.mrf.mxu0
        %v2886 = vadd.f32 0.0, %v2885
        %2887 = vmatmul.bf16.gmra.mxu0 %v2844
        %v2888 = vpop.f32.mrf.mxu0
        %v2889 = vadd.f32 0.0, %v2888
        %v2890 = vpop.f32.mrf.mxu0
        %v2891 = vadd.f32 0.0, %v2890
        %2892 = vmatmul.bf16.gmra.mxu0 %v2847
        %v2893 = vpop.f32.mrf.mxu0
        %v2894 = vadd.f32 0.0, %v2893
        %v2895 = vpop.f32.mrf.mxu0
        %v2896 = vadd.f32 0.0, %v2895
        %2897 = vdwg.mxu0
        %2898 = vst [vmem:[%s461] sm:$0xff] %v2859
        %2899 = vst [vmem:[%s461 + $0x8] sm:$0xff] %v2861
        %2900 = vst [vmem:[%s461 + $0x10] sm:$0xff] %v2864
        %2901 = vst [vmem:[%s461 + $0x18] sm:$0xff] %v2866
        %2902 = vst [vmem:[%s461 + $0x20] sm:$0xff] %v2869
        %2903 = vst [vmem:[%s461 + $0x28] sm:$0xff] %v2871
        %2904 = vst [vmem:[%s461 + $0x30] sm:$0xff] %v2874
        %2905 = vst [vmem:[%s461 + $0x38] sm:$0xff] %v2876
        %2906 = vst [vmem:[%s461 + $0x40] sm:$0xff] %v2879
        %2907 = vst [vmem:[%s461 + $0x48] sm:$0xff] %v2881
        %2908 = vst [vmem:[%s461 + $0x50] sm:$0xff] %v2884
        %2909 = vst [vmem:[%s461 + $0x58] sm:$0xff] %v2886
        %2910 = vst [vmem:[%s461 + $0x60] sm:$0xff] %v2889
        %2911 = vst [vmem:[%s461 + $0x68] sm:$0xff] %v2891
        %2912 = vst [vmem:[%s461 + $0x70] sm:$0xff] %v2894
        %2913 = vst [vmem:[%s461 + $0x78] sm:$0xff] %v2896
        %s2914 = smul.u32 16, %s31
        %p2915 = scmp.lt.s32.totalorder %s2914, 31
        %s2916 = scalar_select %p2915, %s2914, 31
        %s2917 = smul.addr %s2916, 4
        %s2918 = scalar_lea.vmem %s10, %s2917
        %s2919 = sand.u32 %s280, 1
        %s2920 = scalar_lea.sflag [#allocation3], %s2919
        %s2921 = sand.u32 %s280, 1
        %s2922 = smul.addr %s2921, 128
        %s2923 = scalar_lea.vmem [#allocation2], %s2922
        %s2924 = smul.u32 16, %s31
        %p2925 = scmp.lt.s32.totalorder %s2924, 31
        %s2926 = scalar_select %p2925, %s2924, 31
        %s2927 = smul.addr %s2926, 4
        %s2928 = scalar_lea.vmem %s12, %s2927
        %s2929 = sand.u32 %s332, 1
        %s2930 = scalar_lea.sflag [#allocation5], %s2929
        %s2931 = sand.u32 %s332, 1
        %s2932 = smul.addr %s2931, 128
        %s2933 = scalar_lea.vmem [#allocation4], %s2932
        // Predicated region
        $region61: #{tpu_custom_call.1} parent=59 // pred_check
          %p2934 = pneg %p264
        $region62: #{tpu_custom_call.1} parent=59 // pred_check_branch
          %2936 = sbr.rel (%p2934) target = $region64
        $region63: #{tpu_custom_call.1} parent=59 // pred_region
          %s2937 = smul.u32 16, %s31
        $region64: #{tpu_custom_call.1} parent=59 // pred_fallthru
          _
        // Predicated region
        $region65: #{tpu_custom_call.1} parent=59 // pred_check
          %p2938 = pneg %p290
        $region66: #{tpu_custom_call.1} parent=59 // pred_check_branch
          %2940 = sbr.rel (%p2938) target = $region68
        $region67: #{tpu_custom_call.1} parent=59 // pred_region
          %s2941 = smul.u32 16, %s31
          %2943 = vsyncadd %s2920, 0
          %s2944 = smul.addr %s2941, 8
          %s2945 = scalar_lea.hbm %s11, %s2944
          %s2946 = sshll.u32 %s2923, 4
          %s2947 = int_to_ptr.vmem [resolvable:$true] %s2946
          %s2948 = sshll.u32 %s2945, 4
          %s2949 = int_to_ptr.hbm [resolvable:$true] %s2948
          %2954 = dma.vmem_to_hbm [thread:$0]  %s2947, 2048, %s2949, %s2920, 128, 128, 8
        $region68: #{tpu_custom_call.1} parent=59 // pred_fallthru
          _
        // Predicated region
        $region69: #{tpu_custom_call.1} parent=59 // pred_check
          %p2955 = pneg %p316
        $region70: #{tpu_custom_call.1} parent=59 // pred_check_branch
          %2957 = sbr.rel (%p2955) target = $region72
        $region71: #{tpu_custom_call.1} parent=59 // pred_region
          %s2958 = smul.u32 16, %s31
        $region72: #{tpu_custom_call.1} parent=59 // pred_fallthru
          _
        // Predicated region
        $region73: #{tpu_custom_call.1} parent=59 // pred_check
          %p2959 = pneg %p342
        $region74: #{tpu_custom_call.1} parent=59 // pred_check_branch
          %2961 = sbr.rel (%p2959) target = $region76
        $region75: #{tpu_custom_call.1} parent=59 // pred_region
          %s2962 = smul.u32 16, %s31
          %2964 = vsyncadd %s2930, 0
          %s2965 = smul.addr %s2962, 8
          %s2966 = scalar_lea.hbm %s13, %s2965
          %s2967 = sshll.u32 %s2933, 4
          %s2968 = int_to_ptr.vmem [resolvable:$true] %s2967
          %s2969 = sshll.u32 %s2966, 4
          %s2970 = int_to_ptr.hbm [resolvable:$true] %s2969
          %2975 = dma.vmem_to_hbm [thread:$0]  %s2968, 2048, %s2970, %s2930, 128, 128, 8
        $region76: #{tpu_custom_call.1} parent=59 // pred_fallthru
          _
      $region60: #{tpu_custom_call.1} parent=5 // pred_fallthru
        _
      %p2976 = scmp.le.s32.totalorder 2, %s26
      // Predicated region
      $region77: #{tpu_custom_call.1} parent=5 // pred_check
        %p2977 = pneg %p2976
      $region78: #{tpu_custom_call.1} parent=5 // pred_check_branch
        %2979 = sbr.rel (%p2977) target = $region80
      $region79: #{tpu_custom_call.1} parent=5 // pred_region
        %s2980 = ssub.s32 %s26, 2
        // Predicated region
        $region81: #{tpu_custom_call.1} parent=79 // pred_check
          %p2981 = pneg %p270
        $region82: #{tpu_custom_call.1} parent=79 // pred_check_branch
          %2983 = sbr.rel (%p2981) target = $region84
        $region83: #{tpu_custom_call.1} parent=79 // pred_region
          %s2984 = smul.u32 16, %s32
          %p2985 = scmp.lt.s32.totalorder %s2984, 31
          %s2986 = scalar_select %p2985, %s2984, 31
          %s2987 = smul.addr %s2986, 4
          %s2988 = scalar_lea.vmem %s10, %s2987
        $region84: #{tpu_custom_call.1} parent=79 // pred_fallthru
          _
        // Predicated region
        $region85: #{tpu_custom_call.1} parent=79 // pred_check
          %p2989 = pneg %p296
        $region86: #{tpu_custom_call.1} parent=79 // pred_check_branch
          %2991 = sbr.rel (%p2989) target = $region88
        $region87: #{tpu_custom_call.1} parent=79 // pred_region
          %s2992 = sand.u32 %s281, 1
          %s2993 = scalar_lea.sflag [#allocation3], %s2992
          %s2994 = sand.u32 %s281, 1
          %s2995 = smul.addr %s2994, 128
          %s2996 = scalar_lea.vmem [#allocation2], %s2995
          %2998 = dma.done %s2993, 2048
        $region88: #{tpu_custom_call.1} parent=79 // pred_fallthru
          _
        // Predicated region
        $region89: #{tpu_custom_call.1} parent=79 // pred_check
          %p2999 = pneg %p322
        $region90: #{tpu_custom_call.1} parent=79 // pred_check_branch
          %3001 = sbr.rel (%p2999) target = $region92
        $region91: #{tpu_custom_call.1} parent=79 // pred_region
          %s3002 = smul.u32 16, %s32
          %p3003 = scmp.lt.s32.totalorder %s3002, 31
          %s3004 = scalar_select %p3003, %s3002, 31
          %s3005 = smul.addr %s3004, 4
          %s3006 = scalar_lea.vmem %s12, %s3005
        $region92: #{tpu_custom_call.1} parent=79 // pred_fallthru
          _
        // Predicated region
        $region93: #{tpu_custom_call.1} parent=79 // pred_check
          %p3007 = pneg %p348
        $region94: #{tpu_custom_call.1} parent=79 // pred_check_branch
          %3009 = sbr.rel (%p3007) target = $region96
        $region95: #{tpu_custom_call.1} parent=79 // pred_region
          %s3010 = sand.u32 %s333, 1
          %s3011 = scalar_lea.sflag [#allocation5], %s3010
          %s3012 = sand.u32 %s333, 1
          %s3013 = smul.addr %s3012, 128
          %s3014 = scalar_lea.vmem [#allocation4], %s3013
          %3016 = dma.done %s3011, 2048
        $region96: #{tpu_custom_call.1} parent=79 // pred_fallthru
          _
      $region80: #{tpu_custom_call.1} parent=5 // pred_fallthru
        _
    $region6: #{tpu_custom_call.1} parent=1 // loop_footer
      %s30 = sadd.s32 1, %s26
    $region7: #{tpu_custom_call.1} parent=1 // loop_footer_branch
      %25 = sbr.rel target = $region3
    $region8: #{tpu_custom_call.1} parent=1 // loop_exit
      _
    %3017 = vsyncpa [#allocation3], 1
    %s3018 = scalar_lea.sflag [#allocation3], 1
    %3019 = vsyncpa %s3018, 1
    %3020 = vsyncpa [#allocation5], 1
    %s3021 = scalar_lea.sflag [#allocation5], 1
    %3022 = vsyncpa %s3021, 1

</llo_original>
